<compile_context>
chip_gen: v7x
topology: tpu7x:2x2x1
jax: 0.10.0
libtpu: 0.0.40
codegen_flags: <defaults>
</compile_context>

<pallas_src>
import jax
import jax.numpy as jnp
from jax.experimental import pallas as pl
from jax.experimental.pallas import tpu as pltpu


D_IN = 28 * 28      # 784
H1 = 512
H2 = 256


def _leaky_relu(x, slope=0.2):
    return jnp.where(x > 0, x, slope * x)


def discriminator_kernel(x_ref, w1_ref, b1_ref, w2_ref, b2_ref, w3_ref, b3_ref,
                         o_ref):
    # x_ref:  (TB, 784)  f32       w1_ref: (784, 512) bf16   b1_ref: (1, 512) f32
    # w2_ref: (512, 256) bf16      b2_ref: (1, 256) f32
    # w3_ref: (1, 256)   f32       b3_ref: (1, 1) f32 in SMEM
    # o_ref:  (1, TB)    f32  (lane-dense output slab)

    # Cast activation to bf16 on the VPU (x stays f32 in HBM -> single pass).
    x = x_ref[...].astype(jnp.bfloat16)

    # Layer 1: bf16 MXU matmul, f32 accumulation; bias + LeakyReLU in f32.
    h1 = jnp.dot(x, w1_ref[...], preferred_element_type=jnp.float32)
    h1 = _leaky_relu(h1 + b1_ref[...])                        # (TB, 512) f32

    # Layer 2.
    h2 = jnp.dot(h1.astype(jnp.bfloat16), w2_ref[...],
                 preferred_element_type=jnp.float32)
    h2 = _leaky_relu(h2 + b2_ref[...])                        # (TB, 256) f32

    # Layer 3 (256 -> 1): keep it off the MXU.  VPU multiply, fold the two
    # 128-lane halves on the VPU (slice at the vreg boundary is free), then a
    # single 128-lane XLU reduction.
    prod = h2 * w3_ref[...]                                   # (TB, 256) f32
    folded = prod[:, :128] + prod[:, 128:]                    # (TB, 128) f32
    logits = jnp.sum(folded, axis=-1) + b3_ref[0, 0]          # (TB,)

    o_ref[...] = jax.nn.sigmoid(logits)[None, :].astype(o_ref.dtype)


def prepare_params(params):
    """One-time weight prep (do NOT call per forward step)."""
    w1, b1, w2, b2, w3, b3 = params
    return (
        w1.astype(jnp.bfloat16),                      # (784, 512)
        b1.reshape(1, H1).astype(jnp.float32),        # (1, 512)
        w2.astype(jnp.bfloat16),                      # (512, 256)
        b2.reshape(1, H2).astype(jnp.float32),        # (1, 256)
        w3.reshape(1, H2).astype(jnp.float32),        # (256,1) -> (1,256)
        b3.reshape(1, 1).astype(jnp.float32),         # scalar for SMEM
    )


def _pick_batch_tile(B, max_tile=1024):
    """Multiple of 128, as large as possible, but >= 2 tiles when B allows
    (keeps both v7x TensorCores busy via the 'parallel' batch axis)."""
    b128 = ((B + 127) // 128) * 128
    if b128 <= 128:
        return 128
    half = (b128 // 2) // 128 * 128
    return max(128, min(max_tile, half))


def discriminator_forward(x, prepared_params, *, max_batch_tile=1024):
    """x: (B, 784) float32 -> (B, 1) float32."""
    w1_b, b1_r, w2_b, b2_r, w3_row, b3_r = prepared_params
    B, d_in = x.shape
    assert d_in == D_IN

    batch_tile = _pick_batch_tile(B, max_batch_tile)
    n_tiles = pl.cdiv(B, batch_tile)
    b_pad = n_tiles * batch_tile

    # Only pad the batch when needed (zero rows are sliced off afterwards).
    if b_pad != B:
        x = jnp.pad(x, ((0, b_pad - B), (0, 0)))

    full = lambda shape: pl.BlockSpec(shape, lambda i: (0, 0))

    out = pl.pallas_call(
        discriminator_kernel,
        out_shape=jax.ShapeDtypeStruct((1, b_pad), jnp.float32),
        grid_spec=pltpu.PrefetchScalarGridSpec(
            num_scalar_prefetch=0,
            grid=(n_tiles,),
            in_specs=[
                # Last dim 784 equals the full array dim -> legal block shape.
                pl.BlockSpec((batch_tile, D_IN), lambda i: (i, 0)),   # x
                full((D_IN, H1)),                                     # w1 (resident)
                full((1, H1)),                                        # b1
                full((H1, H2)),                                       # w2 (resident)
                full((1, H2)),                                        # b2
                full((1, H2)),                                        # w3 row
                pl.BlockSpec(memory_space=pltpu.MemorySpace.SMEM),    # b3 scalar
            ],
            # Lane-dense output: each grid step writes a (1, batch_tile) slab.
            out_specs=pl.BlockSpec((1, batch_tile), lambda i: (0, i)),
        ),
        compiler_params=pltpu.CompilerParams(
            dimension_semantics=("parallel",)),
    )(x, w1_b, b1_r, w2_b, b2_r, w3_row, b3_r)

    # (1, B_pad) slab -> (B, 1), dropping batch padding.
    return out.reshape(b_pad, 1)[:B]


def init_params(key):
    """Deterministic synthetic parameters (shapes match the PyTorch module,
    stored as (in_features, out_features) so the kernel computes x @ W + b)."""
    k1, k2, k3, k4, k5, k6 = jax.random.split(key, 6)
    w1 = jax.random.uniform(k1, (D_IN, H1), jnp.float32, -1.0, 1.0) / jnp.sqrt(784.0)
    b1 = jax.random.uniform(k2, (1, H1), jnp.float32, -1.0, 1.0) / jnp.sqrt(784.0)
    w2 = jax.random.uniform(k3, (H1, H2), jnp.float32, -1.0, 1.0) / jnp.sqrt(512.0)
    b2 = jax.random.uniform(k4, (1, H2), jnp.float32, -1.0, 1.0) / jnp.sqrt(512.0)
    w3 = jax.random.uniform(k5, (H2, 1), jnp.float32, -1.0, 1.0) / jnp.sqrt(256.0)
    b3 = jax.random.uniform(k6, (1, 1), jnp.float32, -1.0, 1.0) / jnp.sqrt(256.0)
    return (w1, b1, w2, b2, w3, b3)


def reference_forward(x, params):
    """Pure-JAX reference using the same bf16 rounding of MXU inputs as the
    kernel (vs the true f32 PyTorch module the pre-sigmoid error is ~1e-2)."""
    w1, b1, w2, b2, w3, b3 = params
    bf = lambda a: a.astype(jnp.bfloat16).astype(jnp.float32)
    h1 = bf(x) @ bf(w1) + b1
    h1 = jnp.where(h1 > 0, h1, 0.2 * h1)
    h2 = bf(h1) @ bf(w2) + b2
    h2 = jnp.where(h2 > 0, h2, 0.2 * h2)
    h3 = h2 @ w3 + b3
    return jax.nn.sigmoid(h3)


if __name__ == "__main__":
    key = jax.random.PRNGKey(0)
    kx, kp = jax.random.split(key)

    B = 8  # small test batch; wrapper pads to one 128-row tile internally
    x = jax.random.normal(kx, (B, D_IN), dtype=jnp.float32)
    params = init_params(kp)
    prepped = prepare_params(params)   # one-time weight prep, reused per call

    out = jax.block_until_ready(discriminator_forward(x, prepped))
    ref = reference_forward(x, params)

    assert out.shape == (B, 1)
    assert jnp.allclose(out, ref, atol=2e-3, rtol=2e-3), "mismatch vs reference"

    print("KERNEL_OK")
</pallas_src>

<mosaic_0001>
module attributes {stable_mosaic.version = 11 : i64} {
  func.func @discriminator_kernel(%arg0: i32, %arg1: memref<128x784xf32, #tpu.memory_space<vmem>>, %arg2: memref<784x512xbf16, #tpu.memory_space<vmem>>, %arg3: memref<1x512xf32, #tpu.memory_space<vmem>>, %arg4: memref<512x256xbf16, #tpu.memory_space<vmem>>, %arg5: memref<1x256xf32, #tpu.memory_space<vmem>>, %arg6: memref<1x256xf32, #tpu.memory_space<vmem>>, %arg7: memref<1x1xf32, #tpu.memory_space<smem>>, %arg8: memref<1x128xf32, #tpu.memory_space<vmem>>) attributes {dimension_semantics = [#tpu.dimension_semantics<parallel>], iteration_bounds = array<i64: 1>, scalar_prefetch = 0 : i64, scratch_operands = 0 : i64, tpu.core_type = #tpu.core_type<tc>, window_params = [{transform_indices = @transform_0, window_bounds = array<i64: 128, 784>}, {pipeline_mode = #tpu.pipeline_mode<synchronous>, transform_indices = @transform_1, window_bounds = array<i64: 784, 512>}, {pipeline_mode = #tpu.pipeline_mode<synchronous>, transform_indices = @transform_2, window_bounds = array<i64: 1, 512>}, {pipeline_mode = #tpu.pipeline_mode<synchronous>, transform_indices = @transform_3, window_bounds = array<i64: 512, 256>}, {pipeline_mode = #tpu.pipeline_mode<synchronous>, transform_indices = @transform_4, window_bounds = array<i64: 1, 256>}, {pipeline_mode = #tpu.pipeline_mode<synchronous>, transform_indices = @transform_5, window_bounds = array<i64: 1, 256>}, {transform_indices = @transform_6, window_bounds = array<i64: 1, 1>}, {transform_indices = @transform_7, window_bounds = array<i64: 1, 128>}]} {
    %c0 = arith.constant 0 : index
    %c0_0 = arith.constant 0 : index
    %0 = vector.load %arg1[%c0, %c0_0] : memref<128x784xf32, #tpu.memory_space<vmem>>, vector<128x784xf32>
    %1 = arith.truncf %0 : vector<128x784xf32> to vector<128x784xbf16>
    %c0_1 = arith.constant 0 : index
    %c0_2 = arith.constant 0 : index
    %2 = vector.load %arg2[%c0_1, %c0_2] : memref<784x512xbf16, #tpu.memory_space<vmem>>, vector<784x512xbf16>
    %cst = arith.constant dense<0.000000e+00> : vector<128x512xf32>
    %3 = tpu.matmul %1, %2, %cst {dimension_numbers = #tpu.dot_dimension_numbers<[1], [0], [0], [1], [0, 0, 1, 1], [], []>} : vector<128x784xbf16>, vector<784x512xbf16>, vector<128x512xf32> -> vector<128x512xf32>
    %c0_3 = arith.constant 0 : index
    %c0_4 = arith.constant 0 : index
    %4 = vector.load %arg3[%c0_3, %c0_4] : memref<1x512xf32, #tpu.memory_space<vmem>>, vector<1x512xf32>
    %5 = vector.broadcast %4 : vector<1x512xf32> to vector<128x512xf32>
    %6 = arith.addf %3, %5 : vector<128x512xf32>
    %cst_5 = arith.constant 0.000000e+00 : f32
    %7 = vector.broadcast %cst_5 : f32 to vector<128x512xf32>
    %8 = arith.cmpf ogt, %6, %7 : vector<128x512xf32>
    %cst_6 = arith.constant 2.000000e-01 : f32
    %9 = vector.broadcast %cst_6 : f32 to vector<128x512xf32>
    %10 = arith.mulf %9, %6 : vector<128x512xf32>
    %11 = arith.select %8, %6, %10 : vector<128x512xi1>, vector<128x512xf32>
    %12 = arith.truncf %11 : vector<128x512xf32> to vector<128x512xbf16>
    %c0_7 = arith.constant 0 : index
    %c0_8 = arith.constant 0 : index
    %13 = vector.load %arg4[%c0_7, %c0_8] : memref<512x256xbf16, #tpu.memory_space<vmem>>, vector<512x256xbf16>
    %cst_9 = arith.constant dense<0.000000e+00> : vector<128x256xf32>
    %14 = tpu.matmul %12, %13, %cst_9 {dimension_numbers = #tpu.dot_dimension_numbers<[1], [0], [0], [1], [0, 0, 1, 1], [], []>} : vector<128x512xbf16>, vector<512x256xbf16>, vector<128x256xf32> -> vector<128x256xf32>
    %c0_10 = arith.constant 0 : index
    %c0_11 = arith.constant 0 : index
    %15 = vector.load %arg5[%c0_10, %c0_11] : memref<1x256xf32, #tpu.memory_space<vmem>>, vector<1x256xf32>
    %16 = vector.broadcast %15 : vector<1x256xf32> to vector<128x256xf32>
    %17 = arith.addf %14, %16 : vector<128x256xf32>
    %cst_12 = arith.constant 0.000000e+00 : f32
    %18 = vector.broadcast %cst_12 : f32 to vector<128x256xf32>
    %19 = arith.cmpf ogt, %17, %18 : vector<128x256xf32>
    %cst_13 = arith.constant 2.000000e-01 : f32
    %20 = vector.broadcast %cst_13 : f32 to vector<128x256xf32>
    %21 = arith.mulf %20, %17 : vector<128x256xf32>
    %22 = arith.select %19, %17, %21 : vector<128x256xi1>, vector<128x256xf32>
    %c0_14 = arith.constant 0 : index
    %c0_15 = arith.constant 0 : index
    %23 = vector.load %arg6[%c0_14, %c0_15] : memref<1x256xf32, #tpu.memory_space<vmem>>, vector<1x256xf32>
    %24 = vector.broadcast %23 : vector<1x256xf32> to vector<128x256xf32>
    %25 = arith.mulf %22, %24 : vector<128x256xf32>
    %26 = vector.extract_strided_slice %25 {offsets = [0, 0], sizes = [128, 128], strides = [1, 1]} : vector<128x256xf32> to vector<128x128xf32>
    %27 = vector.extract_strided_slice %25 {offsets = [0, 128], sizes = [128, 128], strides = [1, 1]} : vector<128x256xf32> to vector<128x128xf32>
    %28 = arith.addf %26, %27 : vector<128x128xf32>
    %cst_16 = arith.constant dense<0.000000e+00> : vector<128xf32>
    %29 = vector.multi_reduction <add>, %28, %cst_16 [1] : vector<128x128xf32> to vector<128xf32>
    %c0_17 = arith.constant 0 : index
    %c0_18 = arith.constant 0 : index
    %30 = memref.load %arg7[%c0_17, %c0_18] : memref<1x1xf32, #tpu.memory_space<smem>>
    %31 = vector.broadcast %30 : f32 to vector<128xf32>
    %32 = arith.addf %29, %31 : vector<128xf32>
    %33 = arith.negf %32 : vector<128xf32>
    %34 = math.exp %33 : vector<128xf32>
    %cst_19 = arith.constant 1.000000e+00 : f32
    %35 = vector.broadcast %cst_19 : f32 to vector<128xf32>
    %36 = arith.addf %35, %34 : vector<128xf32>
    %37 = arith.divf %35, %36 : vector<128xf32>
    %38 = vector.shape_cast %37 : vector<128xf32> to vector<1x128xf32>
    %c0_20 = arith.constant 0 : index
    %c0_21 = arith.constant 0 : index
    %39 = vector.load %arg8[%c0_20, %c0_21] : memref<1x128xf32, #tpu.memory_space<vmem>>, vector<1x128xf32>
    tpu.vector_store %arg8[%c0_20, %c0_21], %38 {strides = array<i32>} : memref<1x128xf32, #tpu.memory_space<vmem>>, vector<1x128xf32>,
    return
  }
  func.func @transform_0(%arg0: i32) -> (i32, i32) {
    %c0_i32 = arith.constant 0 : i32
    %c0_i32_0 = arith.constant 0 : i32
    return %arg0, %c0_i32 : i32, i32
  }
  func.func @transform_1(%arg0: i32) -> (i32, i32) {
    %c0_i32 = arith.constant 0 : i32
    %c0_i32_0 = arith.constant 0 : i32
    %c0_i32_1 = arith.constant 0 : i32
    return %c0_i32, %c0_i32_0 : i32, i32
  }
  func.func @transform_2(%arg0: i32) -> (i32, i32) {
    %c0_i32 = arith.constant 0 : i32
    %c0_i32_0 = arith.constant 0 : i32
    %c0_i32_1 = arith.constant 0 : i32
    return %c0_i32, %c0_i32_0 : i32, i32
  }
  func.func @transform_3(%arg0: i32) -> (i32, i32) {
    %c0_i32 = arith.constant 0 : i32
    %c0_i32_0 = arith.constant 0 : i32
    %c0_i32_1 = arith.constant 0 : i32
    return %c0_i32, %c0_i32_0 : i32, i32
  }
  func.func @transform_4(%arg0: i32) -> (i32, i32) {
    %c0_i32 = arith.constant 0 : i32
    %c0_i32_0 = arith.constant 0 : i32
    %c0_i32_1 = arith.constant 0 : i32
    return %c0_i32, %c0_i32_0 : i32, i32
  }
  func.func @transform_5(%arg0: i32) -> (i32, i32) {
    %c0_i32 = arith.constant 0 : i32
    %c0_i32_0 = arith.constant 0 : i32
    %c0_i32_1 = arith.constant 0 : i32
    return %c0_i32, %c0_i32_0 : i32, i32
  }
  func.func @transform_6(%arg0: i32) -> (i32, i32) {
    %c0_i32 = arith.constant 0 : i32
    %c0_i32_0 = arith.constant 0 : i32
    %c0_i32_1 = arith.constant 0 : i32
    return %c0_i32, %c0_i32_0 : i32, i32
  }
  func.func @transform_7(%arg0: i32) -> (i32, i32) {
    %c0_i32 = arith.constant 0 : i32
    %c0_i32_0 = arith.constant 0 : i32
    return %c0_i32, %arg0 : i32, i32
  }
}

</mosaic_0001>

<llo_original>
// kernel: tpu_custom_call.1
$region0: #{tpu_custom_call.1}
  #allocation0 [shape = 'u32[]', space=smem, size = 0x4, offset = 0x4, fixed_abs, tag = 'smem constant byte address 0x4 - core index']
  #allocation1 [shape = 'u32[144,128]{1,0:T(1,128)}', space=vmem, size = 0x12000, scoped, tag = 'internal scratch']
  #allocation2 [shape = 'f32[1,1]{1,0:T(1,128)S(6)}', space=smem, size = 0x200, scoped, tag = 'scoped memory for tpu_custom_call.1']
  %s0 = inlined_call_operand.vmem [shape: f32[128,784], index: 0, kind: input, shape index: {}]
  %s1 = inlined_call_operand.vmem [shape: bf16[784,512], index: 1, kind: input, shape index: {}]
  %s2 = inlined_call_operand.vmem [shape: f32[1,512], index: 2, kind: input, shape index: {}]
  %s3 = inlined_call_operand.hbm [shape: bf16[512,256], index: 3, kind: input, shape index: {}]
  %s4 = inlined_call_operand.vmem [shape: f32[1,256], index: 4, kind: input, shape index: {}]
  %s5 = inlined_call_operand.vmem [shape: f32[1,256], index: 5, kind: input, shape index: {}]
  %s6 = inlined_call_operand.<no memory space> [shape: f32[1,1], index: 6, kind: input, shape index: {}]
  %s7 = inlined_call_operand.hbm [shape: f32[1,128], index: 7, kind: output, shape index: {}]
  %s8 = sld [smem:[#allocation0]]
  $region42: #{tpu_custom_call.1} parent=0
    _
  %s10 = ssub.s32 1, %s8
  %s11 = scalar_select 0, %s10, %s8
  %12 = sst [smem:[#allocation2]] %s6
  $region1: #{tpu_custom_call.1} parent=0
    #allocation3 [shape = 'u8[262144]{0}', space=vmem, size = 0x40000, scoped, tag = 'input window, operand 3, single buffered']
    #allocation4 [shape = 's32[1]{0}', space=sflag, size = 0x4, scoped, tag = 'scoped memory for tpu_custom_call.1']
    #allocation5 [shape = 's32[1]{0}', space=sflag, size = 0x4, scoped, tag = 'scoped memory for tpu_custom_call.1']
    #allocation6 [shape = 'u8[512]{0}', space=vmem, size = 0x400, scoped, tag = 'output window, operand 0, single buffered']
    %13 = vsyncpa [#allocation4], 0
    %14 = vsyncpa [#allocation5], 0
    // Predicated region
    $region2: #{tpu_custom_call.1} parent=1 // pred_check
      _
    $region3: #{tpu_custom_call.1} parent=1 // pred_check_branch
      %16 = sbr.rel (0) target = $region5
    $region4: #{tpu_custom_call.1} parent=1 // pred_region
      _
    $region5: #{tpu_custom_call.1} parent=1 // pred_fallthru
      _
    // Predicated region
    $region6: #{tpu_custom_call.1} parent=1 // pred_check
      _
    $region7: #{tpu_custom_call.1} parent=1 // pred_check_branch
      %18 = sbr.rel (0) target = $region9
    $region8: #{tpu_custom_call.1} parent=1 // pred_region
      _
    $region9: #{tpu_custom_call.1} parent=1 // pred_fallthru
      _
    // Predicated region
    $region10: #{tpu_custom_call.1} parent=1 // pred_check
      _
    $region11: #{tpu_custom_call.1} parent=1 // pred_check_branch
      %20 = sbr.rel (0) target = $region13
    $region12: #{tpu_custom_call.1} parent=1 // pred_region
      _
    $region13: #{tpu_custom_call.1} parent=1 // pred_fallthru
      _
    // Predicated region
    $region14: #{tpu_custom_call.1} parent=1 // pred_check
      _
    $region15: #{tpu_custom_call.1} parent=1 // pred_check_branch
      %22 = sbr.rel (0) target = $region17
    $region16: #{tpu_custom_call.1} parent=1 // pred_region
      %s24 = ssub.s32 8192, 8192
      %25 = vsyncadd [#allocation4], %s24
      %s26 = sshll.u32 [#allocation3], 4
      %s27 = int_to_ptr.vmem [resolvable:$true] %s26
      %32 = dma.hbm_to_vmem [thread:$0]  %s3, 8192, %s27, [#allocation4], 128, 128, 8
    $region17: #{tpu_custom_call.1} parent=1 // pred_fallthru
      _
    // Predicated region
    $region18: #{tpu_custom_call.1} parent=1 // pred_check
      _
    $region19: #{tpu_custom_call.1} parent=1 // pred_check_branch
      %34 = sbr.rel (0) target = $region21
    $region20: #{tpu_custom_call.1} parent=1 // pred_region
      _
    $region21: #{tpu_custom_call.1} parent=1 // pred_fallthru
      _
    // Predicated region
    $region22: #{tpu_custom_call.1} parent=1 // pred_check
      _
    $region23: #{tpu_custom_call.1} parent=1 // pred_check_branch
      %36 = sbr.rel (0) target = $region25
    $region24: #{tpu_custom_call.1} parent=1 // pred_region
      _
    $region25: #{tpu_custom_call.1} parent=1 // pred_fallthru
      _
    // Predicated region
    $region26: #{tpu_custom_call.1} parent=1 // pred_check
      _
    $region27: #{tpu_custom_call.1} parent=1 // pred_check_branch
      %38 = sbr.rel (0) target = $region29
    $region28: #{tpu_custom_call.1} parent=1 // pred_region
      _
    $region29: #{tpu_custom_call.1} parent=1 // pred_fallthru
      _
    // Predicated region
    $region30: #{tpu_custom_call.1} parent=1 // pred_check
      _
    $region31: #{tpu_custom_call.1} parent=1 // pred_check_branch
      %40 = sbr.rel (0) target = $region33
    $region32: #{tpu_custom_call.1} parent=1 // pred_region
      %41 = dma.done [#allocation4], 8192
    $region33: #{tpu_custom_call.1} parent=1 // pred_fallthru
      _
    %v43 = vld [vmem:[%s0] sm:$0xff]
    %v44 = vld [vmem:[%s0 + $0x8] sm:$0xff]
    %v45 = vld [vmem:[%s0 + $0x10] sm:$0xff]
    %v46 = vld [vmem:[%s0 + $0x18] sm:$0xff]
    %v47 = vld [vmem:[%s0 + $0x20] sm:$0xff]
    %v48 = vld [vmem:[%s0 + $0x28] sm:$0xff]
    %v49 = vld [vmem:[%s0 + $0x30] sm:$0xff]
    %v50 = vld [vmem:[%s0 + $0x38] sm:$0xff]
    %v51 = vld [vmem:[%s0 + $0x40] sm:$0xff]
    %v52 = vld [vmem:[%s0 + $0x48] sm:$0xff]
    %v53 = vld [vmem:[%s0 + $0x50] sm:$0xff]
    %v54 = vld [vmem:[%s0 + $0x58] sm:$0xff]
    %v55 = vld [vmem:[%s0 + $0x60] sm:$0xff]
    %v56 = vld [vmem:[%s0 + $0x68] sm:$0xff]
    %v57 = vld [vmem:[%s0 + $0x70] sm:$0xff]
    %v58 = vld [vmem:[%s0 + $0x78] sm:$0xff]
    %v59 = vld [vmem:[%s0 + $0x80] sm:$0xff]
    %v60 = vld [vmem:[%s0 + $0x88] sm:$0xff]
    %v61 = vld [vmem:[%s0 + $0x90] sm:$0xff]
    %v62 = vld [vmem:[%s0 + $0x98] sm:$0xff]
    %v63 = vld [vmem:[%s0 + $0xa0] sm:$0xff]
    %v64 = vld [vmem:[%s0 + $0xa8] sm:$0xff]
    %v65 = vld [vmem:[%s0 + $0xb0] sm:$0xff]
    %v66 = vld [vmem:[%s0 + $0xb8] sm:$0xff]
    %v67 = vld [vmem:[%s0 + $0xc0] sm:$0xff]
    %v68 = vld [vmem:[%s0 + $0xc8] sm:$0xff]
    %v69 = vld [vmem:[%s0 + $0xd0] sm:$0xff]
    %v70 = vld [vmem:[%s0 + $0xd8] sm:$0xff]
    %v71 = vld [vmem:[%s0 + $0xe0] sm:$0xff]
    %v72 = vld [vmem:[%s0 + $0xe8] sm:$0xff]
    %v73 = vld [vmem:[%s0 + $0xf0] sm:$0xff]
    %v74 = vld [vmem:[%s0 + $0xf8] sm:$0xff]
    %v75 = vld [vmem:[%s0 + $0x100] sm:$0xff]
    %v76 = vld [vmem:[%s0 + $0x108] sm:$0xff]
    %v77 = vld [vmem:[%s0 + $0x110] sm:$0xff]
    %v78 = vld [vmem:[%s0 + $0x118] sm:$0xff]
    %v79 = vld [vmem:[%s0 + $0x120] sm:$0xff]
    %v80 = vld [vmem:[%s0 + $0x128] sm:$0xff]
    %v81 = vld [vmem:[%s0 + $0x130] sm:$0xff]
    %v82 = vld [vmem:[%s0 + $0x138] sm:$0xff]
    %v83 = vld [vmem:[%s0 + $0x140] sm:$0xff]
    %v84 = vld [vmem:[%s0 + $0x148] sm:$0xff]
    %v85 = vld [vmem:[%s0 + $0x150] sm:$0xff]
    %v86 = vld [vmem:[%s0 + $0x158] sm:$0xff]
    %v87 = vld [vmem:[%s0 + $0x160] sm:$0xff]
    %v88 = vld [vmem:[%s0 + $0x168] sm:$0xff]
    %v89 = vld [vmem:[%s0 + $0x170] sm:$0xff]
    %v90 = vld [vmem:[%s0 + $0x178] sm:$0xff]
    %v91 = vld [vmem:[%s0 + $0x180] sm:$0xff]
    %v92 = vld [vmem:[%s0 + $0x188] sm:$0xff]
    %v93 = vld [vmem:[%s0 + $0x190] sm:$0xff]
    %v94 = vld [vmem:[%s0 + $0x198] sm:$0xff]
    %v95 = vld [vmem:[%s0 + $0x1a0] sm:$0xff]
    %v96 = vld [vmem:[%s0 + $0x1a8] sm:$0xff]
    %v97 = vld [vmem:[%s0 + $0x1b0] sm:$0xff]
    %v98 = vld [vmem:[%s0 + $0x1b8] sm:$0xff]
    %v99 = vld [vmem:[%s0 + $0x1c0] sm:$0xff]
    %v100 = vld [vmem:[%s0 + $0x1c8] sm:$0xff]
    %v101 = vld [vmem:[%s0 + $0x1d0] sm:$0xff]
    %v102 = vld [vmem:[%s0 + $0x1d8] sm:$0xff]
    %v103 = vld [vmem:[%s0 + $0x1e0] sm:$0xff]
    %v104 = vld [vmem:[%s0 + $0x1e8] sm:$0xff]
    %v105 = vld [vmem:[%s0 + $0x1f0] sm:$0xff]
    %v106 = vld [vmem:[%s0 + $0x1f8] sm:$0xff]
    %v107 = vld [vmem:[%s0 + $0x200] sm:$0xff]
    %v108 = vld [vmem:[%s0 + $0x208] sm:$0xff]
    %v109 = vld [vmem:[%s0 + $0x210] sm:$0xff]
    %v110 = vld [vmem:[%s0 + $0x218] sm:$0xff]
    %v111 = vld [vmem:[%s0 + $0x220] sm:$0xff]
    %v112 = vld [vmem:[%s0 + $0x228] sm:$0xff]
    %v113 = vld [vmem:[%s0 + $0x230] sm:$0xff]
    %v114 = vld [vmem:[%s0 + $0x238] sm:$0xff]
    %v115 = vld [vmem:[%s0 + $0x240] sm:$0xff]
    %v116 = vld [vmem:[%s0 + $0x248] sm:$0xff]
    %v117 = vld [vmem:[%s0 + $0x250] sm:$0xff]
    %v118 = vld [vmem:[%s0 + $0x258] sm:$0xff]
    %v119 = vld [vmem:[%s0 + $0x260] sm:$0xff]
    %v120 = vld [vmem:[%s0 + $0x268] sm:$0xff]
    %v121 = vld [vmem:[%s0 + $0x270] sm:$0xff]
    %v122 = vld [vmem:[%s0 + $0x278] sm:$0xff]
    %v123 = vld [vmem:[%s0 + $0x280] sm:$0xff]
    %v124 = vld [vmem:[%s0 + $0x288] sm:$0xff]
    %v125 = vld [vmem:[%s0 + $0x290] sm:$0xff]
    %v126 = vld [vmem:[%s0 + $0x298] sm:$0xff]
    %v127 = vld [vmem:[%s0 + $0x2a0] sm:$0xff]
    %v128 = vld [vmem:[%s0 + $0x2a8] sm:$0xff]
    %v129 = vld [vmem:[%s0 + $0x2b0] sm:$0xff]
    %v130 = vld [vmem:[%s0 + $0x2b8] sm:$0xff]
    %v131 = vld [vmem:[%s0 + $0x2c0] sm:$0xff]
    %v132 = vld [vmem:[%s0 + $0x2c8] sm:$0xff]
    %v133 = vld [vmem:[%s0 + $0x2d0] sm:$0xff]
    %v134 = vld [vmem:[%s0 + $0x2d8] sm:$0xff]
    %v135 = vld [vmem:[%s0 + $0x2e0] sm:$0xff]
    %v136 = vld [vmem:[%s0 + $0x2e8] sm:$0xff]
    %v137 = vld [vmem:[%s0 + $0x2f0] sm:$0xff]
    %v138 = vld [vmem:[%s0 + $0x2f8] sm:$0xff]
    %v139 = vld [vmem:[%s0 + $0x300] sm:$0xff]
    %v140 = vld [vmem:[%s0 + $0x308] sm:$0xff]
    %v141 = vld [vmem:[%s0 + $0x310] sm:$0xff]
    %v142 = vld [vmem:[%s0 + $0x318] sm:$0xff]
    %v143 = vld [vmem:[%s0 + $0x320] sm:$0xff]
    %v144 = vld [vmem:[%s0 + $0x328] sm:$0xff]
    %v145 = vld [vmem:[%s0 + $0x330] sm:$0xff]
    %v146 = vld [vmem:[%s0 + $0x338] sm:$0xff]
    %v147 = vld [vmem:[%s0 + $0x340] sm:$0xff]
    %v148 = vld [vmem:[%s0 + $0x348] sm:$0xff]
    %v149 = vld [vmem:[%s0 + $0x350] sm:$0xff]
    %v150 = vld [vmem:[%s0 + $0x358] sm:$0xff]
    %v151 = vld [vmem:[%s0 + $0x360] sm:$0xff]
    %v152 = vld [vmem:[%s0 + $0x368] sm:$0xff]
    %v153 = vld [vmem:[%s0 + $0x370] sm:$0xff]
    %v154 = vld [vmem:[%s0 + $0x378] sm:$0xff]
    %v155 = vpack.c.bf16 %v50, %v43
    %v156 = vpack.c.bf16 %v51, %v44
    %v157 = vpack.c.bf16 %v52, %v45
    %v158 = vpack.c.bf16 %v53, %v46
    %v159 = vpack.c.bf16 %v54, %v47
    %v160 = vpack.c.bf16 %v55, %v48
    %v161 = vpack.c.bf16 %v56, %v49
    %v162 = vpack.c.bf16 %v64, %v57
    %v163 = vpack.c.bf16 %v65, %v58
    %v164 = vpack.c.bf16 %v66, %v59
    %v165 = vpack.c.bf16 %v67, %v60
    %v166 = vpack.c.bf16 %v68, %v61
    %v167 = vpack.c.bf16 %v69, %v62
    %v168 = vpack.c.bf16 %v70, %v63
    %v169 = vpack.c.bf16 %v78, %v71
    %v170 = vpack.c.bf16 %v79, %v72
    %v171 = vpack.c.bf16 %v80, %v73
    %v172 = vpack.c.bf16 %v81, %v74
    %v173 = vpack.c.bf16 %v82, %v75
    %v174 = vpack.c.bf16 %v83, %v76
    %v175 = vpack.c.bf16 %v84, %v77
    %v176 = vpack.c.bf16 %v92, %v85
    %v177 = vpack.c.bf16 %v93, %v86
    %v178 = vpack.c.bf16 %v94, %v87
    %v179 = vpack.c.bf16 %v95, %v88
    %v180 = vpack.c.bf16 %v96, %v89
    %v181 = vpack.c.bf16 %v97, %v90
    %v182 = vpack.c.bf16 %v98, %v91
    %v183 = vpack.c.bf16 %v106, %v99
    %v184 = vpack.c.bf16 %v107, %v100
    %v185 = vpack.c.bf16 %v108, %v101
    %v186 = vpack.c.bf16 %v109, %v102
    %v187 = vpack.c.bf16 %v110, %v103
    %v188 = vpack.c.bf16 %v111, %v104
    %v189 = vpack.c.bf16 %v112, %v105
    %v190 = vpack.c.bf16 %v120, %v113
    %v191 = vpack.c.bf16 %v121, %v114
    %v192 = vpack.c.bf16 %v122, %v115
    %v193 = vpack.c.bf16 %v123, %v116
    %v194 = vpack.c.bf16 %v124, %v117
    %v195 = vpack.c.bf16 %v125, %v118
    %v196 = vpack.c.bf16 %v126, %v119
    %v197 = vpack.c.bf16 %v134, %v127
    %v198 = vpack.c.bf16 %v135, %v128
    %v199 = vpack.c.bf16 %v136, %v129
    %v200 = vpack.c.bf16 %v137, %v130
    %v201 = vpack.c.bf16 %v138, %v131
    %v202 = vpack.c.bf16 %v139, %v132
    %v203 = vpack.c.bf16 %v140, %v133
    %v204 = vpack.c.bf16 %v148, %v141
    %v205 = vpack.c.bf16 %v149, %v142
    %v206 = vpack.c.bf16 %v150, %v143
    %v207 = vpack.c.bf16 %v151, %v144
    %v208 = vpack.c.bf16 %v152, %v145
    %v209 = vpack.c.bf16 %v153, %v146
    %v210 = vpack.c.bf16 %v154, %v147
    %v211 = vld [vmem:[%s1] sm:$0xff]
    %v212 = vld [vmem:[%s1 + $0x8] sm:$0xff]
    %v213 = vld [vmem:[%s1 + $0x10] sm:$0xff]
    %v214 = vld [vmem:[%s1 + $0x18] sm:$0xff]
    %v215 = vld [vmem:[%s1 + $0x20] sm:$0xff]
    %v216 = vld [vmem:[%s1 + $0x28] sm:$0xff]
    %v217 = vld [vmem:[%s1 + $0x30] sm:$0xff]
    %v218 = vld [vmem:[%s1 + $0x38] sm:$0xff]
    %v219 = vld [vmem:[%s1 + $0x40] sm:$0xff]
    %v220 = vld [vmem:[%s1 + $0x48] sm:$0xff]
    %v221 = vld [vmem:[%s1 + $0x50] sm:$0xff]
    %v222 = vld [vmem:[%s1 + $0x58] sm:$0xff]
    %v223 = vld [vmem:[%s1 + $0x60] sm:$0xff]
    %v224 = vld [vmem:[%s1 + $0x68] sm:$0xff]
    %v225 = vld [vmem:[%s1 + $0x70] sm:$0xff]
    %v226 = vld [vmem:[%s1 + $0x78] sm:$0xff]
    %v227 = vld [vmem:[%s1 + $0x80] sm:$0xff]
    %v228 = vld [vmem:[%s1 + $0x88] sm:$0xff]
    %v229 = vld [vmem:[%s1 + $0x90] sm:$0xff]
    %v230 = vld [vmem:[%s1 + $0x98] sm:$0xff]
    %v231 = vld [vmem:[%s1 + $0xa0] sm:$0xff]
    %v232 = vld [vmem:[%s1 + $0xa8] sm:$0xff]
    %v233 = vld [vmem:[%s1 + $0xb0] sm:$0xff]
    %v234 = vld [vmem:[%s1 + $0xb8] sm:$0xff]
    %v235 = vld [vmem:[%s1 + $0xc0] sm:$0xff]
    %v236 = vld [vmem:[%s1 + $0xc8] sm:$0xff]
    %v237 = vld [vmem:[%s1 + $0xd0] sm:$0xff]
    %v238 = vld [vmem:[%s1 + $0xd8] sm:$0xff]
    %v239 = vld [vmem:[%s1 + $0xe0] sm:$0xff]
    %v240 = vld [vmem:[%s1 + $0xe8] sm:$0xff]
    %v241 = vld [vmem:[%s1 + $0xf0] sm:$0xff]
    %v242 = vld [vmem:[%s1 + $0xf8] sm:$0xff]
    %v243 = vld [vmem:[%s1 + $0x100] sm:$0xff]
    %v244 = vld [vmem:[%s1 + $0x108] sm:$0xff]
    %v245 = vld [vmem:[%s1 + $0x110] sm:$0xff]
    %v246 = vld [vmem:[%s1 + $0x118] sm:$0xff]
    %v247 = vld [vmem:[%s1 + $0x120] sm:$0xff]
    %v248 = vld [vmem:[%s1 + $0x128] sm:$0xff]
    %v249 = vld [vmem:[%s1 + $0x130] sm:$0xff]
    %v250 = vld [vmem:[%s1 + $0x138] sm:$0xff]
    %v251 = vld [vmem:[%s1 + $0x140] sm:$0xff]
    %v252 = vld [vmem:[%s1 + $0x148] sm:$0xff]
    %v253 = vld [vmem:[%s1 + $0x150] sm:$0xff]
    %v254 = vld [vmem:[%s1 + $0x158] sm:$0xff]
    %v255 = vld [vmem:[%s1 + $0x160] sm:$0xff]
    %v256 = vld [vmem:[%s1 + $0x168] sm:$0xff]
    %v257 = vld [vmem:[%s1 + $0x170] sm:$0xff]
    %v258 = vld [vmem:[%s1 + $0x178] sm:$0xff]
    %v259 = vld [vmem:[%s1 + $0x180] sm:$0xff]
    %v260 = vld [vmem:[%s1 + $0x188] sm:$0xff]
    %v261 = vld [vmem:[%s1 + $0x190] sm:$0xff]
    %v262 = vld [vmem:[%s1 + $0x198] sm:$0xff]
    %v263 = vld [vmem:[%s1 + $0x1a0] sm:$0xff]
    %v264 = vld [vmem:[%s1 + $0x1a8] sm:$0xff]
    %v265 = vld [vmem:[%s1 + $0x1b0] sm:$0xff]
    %v266 = vld [vmem:[%s1 + $0x1b8] sm:$0xff]
    %v267 = vld [vmem:[%s1 + $0x1c0] sm:$0xff]
    %v268 = vld [vmem:[%s1 + $0x1c8] sm:$0xff]
    %v269 = vld [vmem:[%s1 + $0x1d0] sm:$0xff]
    %v270 = vld [vmem:[%s1 + $0x1d8] sm:$0xff]
    %v271 = vld [vmem:[%s1 + $0x1e0] sm:$0xff]
    %v272 = vld [vmem:[%s1 + $0x1e8] sm:$0xff]
    %v273 = vld [vmem:[%s1 + $0x1f0] sm:$0xff]
    %v274 = vld [vmem:[%s1 + $0x1f8] sm:$0xff]
    %v275 = vld [vmem:[%s1 + $0x200] sm:$0xff]
    %v276 = vld [vmem:[%s1 + $0x208] sm:$0xff]
    %v277 = vld [vmem:[%s1 + $0x210] sm:$0xff]
    %v278 = vld [vmem:[%s1 + $0x218] sm:$0xff]
    %v279 = vld [vmem:[%s1 + $0x220] sm:$0xff]
    %v280 = vld [vmem:[%s1 + $0x228] sm:$0xff]
    %v281 = vld [vmem:[%s1 + $0x230] sm:$0xff]
    %v282 = vld [vmem:[%s1 + $0x238] sm:$0xff]
    %v283 = vld [vmem:[%s1 + $0x240] sm:$0xff]
    %v284 = vld [vmem:[%s1 + $0x248] sm:$0xff]
    %v285 = vld [vmem:[%s1 + $0x250] sm:$0xff]
    %v286 = vld [vmem:[%s1 + $0x258] sm:$0xff]
    %v287 = vld [vmem:[%s1 + $0x260] sm:$0xff]
    %v288 = vld [vmem:[%s1 + $0x268] sm:$0xff]
    %v289 = vld [vmem:[%s1 + $0x270] sm:$0xff]
    %v290 = vld [vmem:[%s1 + $0x278] sm:$0xff]
    %v291 = vld [vmem:[%s1 + $0x280] sm:$0xff]
    %v292 = vld [vmem:[%s1 + $0x288] sm:$0xff]
    %v293 = vld [vmem:[%s1 + $0x290] sm:$0xff]
    %v294 = vld [vmem:[%s1 + $0x298] sm:$0xff]
    %v295 = vld [vmem:[%s1 + $0x2a0] sm:$0xff]
    %v296 = vld [vmem:[%s1 + $0x2a8] sm:$0xff]
    %v297 = vld [vmem:[%s1 + $0x2b0] sm:$0xff]
    %v298 = vld [vmem:[%s1 + $0x2b8] sm:$0xff]
    %v299 = vld [vmem:[%s1 + $0x2c0] sm:$0xff]
    %v300 = vld [vmem:[%s1 + $0x2c8] sm:$0xff]
    %v301 = vld [vmem:[%s1 + $0x2d0] sm:$0xff]
    %v302 = vld [vmem:[%s1 + $0x2d8] sm:$0xff]
    %v303 = vld [vmem:[%s1 + $0x2e0] sm:$0xff]
    %v304 = vld [vmem:[%s1 + $0x2e8] sm:$0xff]
    %v305 = vld [vmem:[%s1 + $0x2f0] sm:$0xff]
    %v306 = vld [vmem:[%s1 + $0x2f8] sm:$0xff]
    %v307 = vld [vmem:[%s1 + $0x300] sm:$0xff]
    %v308 = vld [vmem:[%s1 + $0x308] sm:$0xff]
    %v309 = vld [vmem:[%s1 + $0x310] sm:$0xff]
    %v310 = vld [vmem:[%s1 + $0x318] sm:$0xff]
    %v311 = vld [vmem:[%s1 + $0x320] sm:$0xff]
    %v312 = vld [vmem:[%s1 + $0x328] sm:$0xff]
    %v313 = vld [vmem:[%s1 + $0x330] sm:$0xff]
    %v314 = vld [vmem:[%s1 + $0x338] sm:$0xff]
    %v315 = vld [vmem:[%s1 + $0x340] sm:$0xff]
    %v316 = vld [vmem:[%s1 + $0x348] sm:$0xff]
    %v317 = vld [vmem:[%s1 + $0x350] sm:$0xff]
    %v318 = vld [vmem:[%s1 + $0x358] sm:$0xff]
    %v319 = vld [vmem:[%s1 + $0x360] sm:$0xff]
    %v320 = vld [vmem:[%s1 + $0x368] sm:$0xff]
    %v321 = vld [vmem:[%s1 + $0x370] sm:$0xff]
    %v322 = vld [vmem:[%s1 + $0x378] sm:$0xff]
    %v323 = vld [vmem:[%s1 + $0x380] sm:$0xff]
    %v324 = vld [vmem:[%s1 + $0x388] sm:$0xff]
    %v325 = vld [vmem:[%s1 + $0x390] sm:$0xff]
    %v326 = vld [vmem:[%s1 + $0x398] sm:$0xff]
    %v327 = vld [vmem:[%s1 + $0x3a0] sm:$0xff]
    %v328 = vld [vmem:[%s1 + $0x3a8] sm:$0xff]
    %v329 = vld [vmem:[%s1 + $0x3b0] sm:$0xff]
    %v330 = vld [vmem:[%s1 + $0x3b8] sm:$0xff]
    %v331 = vld [vmem:[%s1 + $0x3c0] sm:$0xff]
    %v332 = vld [vmem:[%s1 + $0x3c8] sm:$0xff]
    %v333 = vld [vmem:[%s1 + $0x3d0] sm:$0xff]
    %v334 = vld [vmem:[%s1 + $0x3d8] sm:$0xff]
    %v335 = vld [vmem:[%s1 + $0x3e0] sm:$0xff]
    %v336 = vld [vmem:[%s1 + $0x3e8] sm:$0xff]
    %v337 = vld [vmem:[%s1 + $0x3f0] sm:$0xff]
    %v338 = vld [vmem:[%s1 + $0x3f8] sm:$0xff]
    %v339 = vld [vmem:[%s1 + $0x400] sm:$0xff]
    %v340 = vld [vmem:[%s1 + $0x408] sm:$0xff]
    %v341 = vld [vmem:[%s1 + $0x410] sm:$0xff]
    %v342 = vld [vmem:[%s1 + $0x418] sm:$0xff]
    %v343 = vld [vmem:[%s1 + $0x420] sm:$0xff]
    %v344 = vld [vmem:[%s1 + $0x428] sm:$0xff]
    %v345 = vld [vmem:[%s1 + $0x430] sm:$0xff]
    %v346 = vld [vmem:[%s1 + $0x438] sm:$0xff]
    %v347 = vld [vmem:[%s1 + $0x440] sm:$0xff]
    %v348 = vld [vmem:[%s1 + $0x448] sm:$0xff]
    %v349 = vld [vmem:[%s1 + $0x450] sm:$0xff]
    %v350 = vld [vmem:[%s1 + $0x458] sm:$0xff]
    %v351 = vld [vmem:[%s1 + $0x460] sm:$0xff]
    %v352 = vld [vmem:[%s1 + $0x468] sm:$0xff]
    %v353 = vld [vmem:[%s1 + $0x470] sm:$0xff]
    %v354 = vld [vmem:[%s1 + $0x478] sm:$0xff]
    %v355 = vld [vmem:[%s1 + $0x480] sm:$0xff]
    %v356 = vld [vmem:[%s1 + $0x488] sm:$0xff]
    %v357 = vld [vmem:[%s1 + $0x490] sm:$0xff]
    %v358 = vld [vmem:[%s1 + $0x498] sm:$0xff]
    %v359 = vld [vmem:[%s1 + $0x4a0] sm:$0xff]
    %v360 = vld [vmem:[%s1 + $0x4a8] sm:$0xff]
    %v361 = vld [vmem:[%s1 + $0x4b0] sm:$0xff]
    %v362 = vld [vmem:[%s1 + $0x4b8] sm:$0xff]
    %v363 = vld [vmem:[%s1 + $0x4c0] sm:$0xff]
    %v364 = vld [vmem:[%s1 + $0x4c8] sm:$0xff]
    %v365 = vld [vmem:[%s1 + $0x4d0] sm:$0xff]
    %v366 = vld [vmem:[%s1 + $0x4d8] sm:$0xff]
    %v367 = vld [vmem:[%s1 + $0x4e0] sm:$0xff]
    %v368 = vld [vmem:[%s1 + $0x4e8] sm:$0xff]
    %v369 = vld [vmem:[%s1 + $0x4f0] sm:$0xff]
    %v370 = vld [vmem:[%s1 + $0x4f8] sm:$0xff]
    %v371 = vld [vmem:[%s1 + $0x500] sm:$0xff]
    %v372 = vld [vmem:[%s1 + $0x508] sm:$0xff]
    %v373 = vld [vmem:[%s1 + $0x510] sm:$0xff]
    %v374 = vld [vmem:[%s1 + $0x518] sm:$0xff]
    %v375 = vld [vmem:[%s1 + $0x520] sm:$0xff]
    %v376 = vld [vmem:[%s1 + $0x528] sm:$0xff]
    %v377 = vld [vmem:[%s1 + $0x530] sm:$0xff]
    %v378 = vld [vmem:[%s1 + $0x538] sm:$0xff]
    %v379 = vld [vmem:[%s1 + $0x540] sm:$0xff]
    %v380 = vld [vmem:[%s1 + $0x548] sm:$0xff]
    %v381 = vld [vmem:[%s1 + $0x550] sm:$0xff]
    %v382 = vld [vmem:[%s1 + $0x558] sm:$0xff]
    %v383 = vld [vmem:[%s1 + $0x560] sm:$0xff]
    %v384 = vld [vmem:[%s1 + $0x568] sm:$0xff]
    %v385 = vld [vmem:[%s1 + $0x570] sm:$0xff]
    %v386 = vld [vmem:[%s1 + $0x578] sm:$0xff]
    %v387 = vld [vmem:[%s1 + $0x580] sm:$0xff]
    %v388 = vld [vmem:[%s1 + $0x588] sm:$0xff]
    %v389 = vld [vmem:[%s1 + $0x590] sm:$0xff]
    %v390 = vld [vmem:[%s1 + $0x598] sm:$0xff]
    %v391 = vld [vmem:[%s1 + $0x5a0] sm:$0xff]
    %v392 = vld [vmem:[%s1 + $0x5a8] sm:$0xff]
    %v393 = vld [vmem:[%s1 + $0x5b0] sm:$0xff]
    %v394 = vld [vmem:[%s1 + $0x5b8] sm:$0xff]
    %v395 = vld [vmem:[%s1 + $0x5c0] sm:$0xff]
    %v396 = vld [vmem:[%s1 + $0x5c8] sm:$0xff]
    %v397 = vld [vmem:[%s1 + $0x5d0] sm:$0xff]
    %v398 = vld [vmem:[%s1 + $0x5d8] sm:$0xff]
    %v399 = vld [vmem:[%s1 + $0x5e0] sm:$0xff]
    %v400 = vld [vmem:[%s1 + $0x5e8] sm:$0xff]
    %v401 = vld [vmem:[%s1 + $0x5f0] sm:$0xff]
    %v402 = vld [vmem:[%s1 + $0x5f8] sm:$0xff]
    %v403 = vld [vmem:[%s1 + $0x600] sm:$0xff]
    %v404 = vld [vmem:[%s1 + $0x608] sm:$0xff]
    %v405 = vld [vmem:[%s1 + $0x610] sm:$0xff]
    %v406 = vld [vmem:[%s1 + $0x618] sm:$0xff]
    %v407 = vld [vmem:[%s2] sm:$0xf]
    %v409 = vlaneseq
    %v410 = vshrl.u32 %v409, 7
    %v411 = vsub.s32 0, %v410
    %v412 = vrot.slane %v407, %v411
    %v413 = vlaneseq
    %v414 = vshrl.u32 %v413, 7
    %v415 = vsub.s32 1, %v414
    %v416 = vrot.slane %v407, %v415
    %v417 = vlaneseq
    %v418 = vshrl.u32 %v417, 7
    %v419 = vsub.s32 2, %v418
    %v420 = vrot.slane %v407, %v419
    %v421 = vlaneseq
    %v422 = vshrl.u32 %v421, 7
    %v423 = vsub.s32 3, %v422
    %v424 = vrot.slane %v407, %v423
    %v625 = vunpack.c.l.b16 %v211
    %v626 = vunpack.c.h.b16 %v211
    %v627 = vunpack.c.l.b16 %v212
    %v628 = vunpack.c.h.b16 %v212
    %v629 = vunpack.c.l.b16 %v213
    %v630 = vunpack.c.h.b16 %v213
    %v631 = vunpack.c.l.b16 %v214
    %v632 = vunpack.c.h.b16 %v214
    %v633 = vunpack.c.l.b16 %v215
    %v634 = vunpack.c.h.b16 %v215
    %v635 = vunpack.c.l.b16 %v216
    %v636 = vunpack.c.h.b16 %v216
    %v637 = vunpack.c.l.b16 %v217
    %v638 = vunpack.c.h.b16 %v217
    %v639 = vunpack.c.l.b16 %v218
    %v640 = vunpack.c.h.b16 %v218
    %v641 = vunpack.c.l.b16 %v219
    %v642 = vunpack.c.h.b16 %v219
    %v643 = vunpack.c.l.b16 %v220
    %v644 = vunpack.c.h.b16 %v220
    %v645 = vunpack.c.l.b16 %v221
    %v646 = vunpack.c.h.b16 %v221
    %v647 = vunpack.c.l.b16 %v222
    %v648 = vunpack.c.h.b16 %v222
    %v649 = vunpack.c.l.b16 %v223
    %v650 = vunpack.c.h.b16 %v223
    %v651 = vunpack.c.l.b16 %v224
    %v652 = vunpack.c.h.b16 %v224
    %v653 = vunpack.c.l.b16 %v225
    %v654 = vunpack.c.h.b16 %v225
    %v655 = vunpack.c.l.b16 %v226
    %v656 = vunpack.c.h.b16 %v226
    %v657 = vunpack.c.l.b16 %v227
    %v658 = vunpack.c.h.b16 %v227
    %v659 = vunpack.c.l.b16 %v228
    %v660 = vunpack.c.h.b16 %v228
    %v661 = vunpack.c.l.b16 %v229
    %v662 = vunpack.c.h.b16 %v229
    %v663 = vunpack.c.l.b16 %v230
    %v664 = vunpack.c.h.b16 %v230
    %v665 = vunpack.c.l.b16 %v231
    %v666 = vunpack.c.h.b16 %v231
    %v667 = vunpack.c.l.b16 %v232
    %v668 = vunpack.c.h.b16 %v232
    %v669 = vunpack.c.l.b16 %v233
    %v670 = vunpack.c.h.b16 %v233
    %v671 = vunpack.c.l.b16 %v234
    %v672 = vunpack.c.h.b16 %v234
    %v673 = vunpack.c.l.b16 %v235
    %v674 = vunpack.c.h.b16 %v235
    %v675 = vunpack.c.l.b16 %v236
    %v676 = vunpack.c.h.b16 %v236
    %v677 = vunpack.c.l.b16 %v237
    %v678 = vunpack.c.h.b16 %v237
    %v679 = vunpack.c.l.b16 %v238
    %v680 = vunpack.c.h.b16 %v238
    %v681 = vunpack.c.l.b16 %v239
    %v682 = vunpack.c.h.b16 %v239
    %v683 = vunpack.c.l.b16 %v240
    %v684 = vunpack.c.h.b16 %v240
    %v685 = vunpack.c.l.b16 %v241
    %v686 = vunpack.c.h.b16 %v241
    %v687 = vunpack.c.l.b16 %v242
    %v688 = vunpack.c.h.b16 %v242
    %v689 = vunpack.c.l.b16 %v243
    %v690 = vunpack.c.h.b16 %v243
    %v691 = vunpack.c.l.b16 %v244
    %v692 = vunpack.c.h.b16 %v244
    %v693 = vunpack.c.l.b16 %v245
    %v694 = vunpack.c.h.b16 %v245
    %v695 = vunpack.c.l.b16 %v246
    %v696 = vunpack.c.h.b16 %v246
    %v697 = vunpack.c.l.b16 %v247
    %v698 = vunpack.c.h.b16 %v247
    %v699 = vunpack.c.l.b16 %v248
    %v700 = vunpack.c.h.b16 %v248
    %v701 = vunpack.c.l.b16 %v249
    %v702 = vunpack.c.h.b16 %v249
    %v703 = vunpack.c.l.b16 %v250
    %v704 = vunpack.c.h.b16 %v250
    %v705 = vunpack.c.l.b16 %v251
    %v706 = vunpack.c.h.b16 %v251
    %v707 = vunpack.c.l.b16 %v252
    %v708 = vunpack.c.h.b16 %v252
    %v709 = vunpack.c.l.b16 %v253
    %v710 = vunpack.c.h.b16 %v253
    %v711 = vunpack.c.l.b16 %v254
    %v712 = vunpack.c.h.b16 %v254
    %v713 = vunpack.c.l.b16 %v255
    %v714 = vunpack.c.h.b16 %v255
    %v715 = vunpack.c.l.b16 %v256
    %v716 = vunpack.c.h.b16 %v256
    %v717 = vunpack.c.l.b16 %v257
    %v718 = vunpack.c.h.b16 %v257
    %v719 = vunpack.c.l.b16 %v258
    %v720 = vunpack.c.h.b16 %v258
    %v721 = vunpack.c.l.b16 %v259
    %v722 = vunpack.c.h.b16 %v259
    %v723 = vunpack.c.l.b16 %v260
    %v724 = vunpack.c.h.b16 %v260
    %v725 = vunpack.c.l.b16 %v261
    %v726 = vunpack.c.h.b16 %v261
    %v727 = vunpack.c.l.b16 %v262
    %v728 = vunpack.c.h.b16 %v262
    %v729 = vunpack.c.l.b16 %v263
    %v730 = vunpack.c.h.b16 %v263
    %v731 = vunpack.c.l.b16 %v264
    %v732 = vunpack.c.h.b16 %v264
    %v733 = vunpack.c.l.b16 %v265
    %v734 = vunpack.c.h.b16 %v265
    %v735 = vunpack.c.l.b16 %v266
    %v736 = vunpack.c.h.b16 %v266
    %v737 = vunpack.c.l.b16 %v267
    %v738 = vunpack.c.h.b16 %v267
    %v739 = vunpack.c.l.b16 %v268
    %v740 = vunpack.c.h.b16 %v268
    %v741 = vunpack.c.l.b16 %v269
    %v742 = vunpack.c.h.b16 %v269
    %v743 = vunpack.c.l.b16 %v270
    %v744 = vunpack.c.h.b16 %v270
    %v745 = vunpack.c.l.b16 %v271
    %v746 = vunpack.c.h.b16 %v271
    %v747 = vunpack.c.l.b16 %v272
    %v748 = vunpack.c.h.b16 %v272
    %v749 = vunpack.c.l.b16 %v273
    %v750 = vunpack.c.h.b16 %v273
    %v751 = vunpack.c.l.b16 %v274
    %v752 = vunpack.c.h.b16 %v274
    %v753 = vunpack.c.l.b16 %v275
    %v754 = vunpack.c.h.b16 %v275
    %v755 = vunpack.c.l.b16 %v276
    %v756 = vunpack.c.h.b16 %v276
    %v757 = vunpack.c.l.b16 %v277
    %v758 = vunpack.c.h.b16 %v277
    %v759 = vunpack.c.l.b16 %v278
    %v760 = vunpack.c.h.b16 %v278
    %v761 = vunpack.c.l.b16 %v279
    %v762 = vunpack.c.h.b16 %v279
    %v763 = vunpack.c.l.b16 %v280
    %v764 = vunpack.c.h.b16 %v280
    %v765 = vunpack.c.l.b16 %v281
    %v766 = vunpack.c.h.b16 %v281
    %v767 = vunpack.c.l.b16 %v282
    %v768 = vunpack.c.h.b16 %v282
    %v769 = vunpack.c.l.b16 %v283
    %v770 = vunpack.c.h.b16 %v283
    %v771 = vunpack.c.l.b16 %v284
    %v772 = vunpack.c.h.b16 %v284
    %v773 = vunpack.c.l.b16 %v285
    %v774 = vunpack.c.h.b16 %v285
    %v775 = vunpack.c.l.b16 %v286
    %v776 = vunpack.c.h.b16 %v286
    %v777 = vunpack.c.l.b16 %v287
    %v778 = vunpack.c.h.b16 %v287
    %v779 = vunpack.c.l.b16 %v288
    %v780 = vunpack.c.h.b16 %v288
    %v781 = vunpack.c.l.b16 %v289
    %v782 = vunpack.c.h.b16 %v289
    %v783 = vunpack.c.l.b16 %v290
    %v784 = vunpack.c.h.b16 %v290
    %v785 = vunpack.c.l.b16 %v291
    %v786 = vunpack.c.h.b16 %v291
    %v787 = vunpack.c.l.b16 %v292
    %v788 = vunpack.c.h.b16 %v292
    %v789 = vunpack.c.l.b16 %v293
    %v790 = vunpack.c.h.b16 %v293
    %v791 = vunpack.c.l.b16 %v294
    %v792 = vunpack.c.h.b16 %v294
    %v793 = vunpack.c.l.b16 %v295
    %v794 = vunpack.c.h.b16 %v295
    %v795 = vunpack.c.l.b16 %v296
    %v796 = vunpack.c.h.b16 %v296
    %v797 = vunpack.c.l.b16 %v297
    %v798 = vunpack.c.h.b16 %v297
    %v799 = vunpack.c.l.b16 %v298
    %v800 = vunpack.c.h.b16 %v298
    %v801 = vunpack.c.l.b16 %v299
    %v802 = vunpack.c.h.b16 %v299
    %v803 = vunpack.c.l.b16 %v300
    %v804 = vunpack.c.h.b16 %v300
    %v805 = vunpack.c.l.b16 %v301
    %v806 = vunpack.c.h.b16 %v301
    %v807 = vunpack.c.l.b16 %v302
    %v808 = vunpack.c.h.b16 %v302
    %v809 = vunpack.c.l.b16 %v303
    %v810 = vunpack.c.h.b16 %v303
    %v811 = vunpack.c.l.b16 %v304
    %v812 = vunpack.c.h.b16 %v304
    %v813 = vunpack.c.l.b16 %v305
    %v814 = vunpack.c.h.b16 %v305
    %v815 = vunpack.c.l.b16 %v306
    %v816 = vunpack.c.h.b16 %v306
    %v817 = vunpack.c.l.b16 %v307
    %v818 = vunpack.c.h.b16 %v307
    %v819 = vunpack.c.l.b16 %v308
    %v820 = vunpack.c.h.b16 %v308
    %v821 = vunpack.c.l.b16 %v309
    %v822 = vunpack.c.h.b16 %v309
    %v823 = vunpack.c.l.b16 %v310
    %v824 = vunpack.c.h.b16 %v310
    %v825 = vunpack.c.l.b16 %v311
    %v826 = vunpack.c.h.b16 %v311
    %v827 = vunpack.c.l.b16 %v312
    %v828 = vunpack.c.h.b16 %v312
    %v829 = vunpack.c.l.b16 %v313
    %v830 = vunpack.c.h.b16 %v313
    %v831 = vunpack.c.l.b16 %v314
    %v832 = vunpack.c.h.b16 %v314
    %v833 = vunpack.c.l.b16 %v315
    %v834 = vunpack.c.h.b16 %v315
    %v835 = vunpack.c.l.b16 %v316
    %v836 = vunpack.c.h.b16 %v316
    %v837 = vunpack.c.l.b16 %v317
    %v838 = vunpack.c.h.b16 %v317
    %v839 = vunpack.c.l.b16 %v318
    %v840 = vunpack.c.h.b16 %v318
    %v841 = vunpack.c.l.b16 %v319
    %v842 = vunpack.c.h.b16 %v319
    %v843 = vunpack.c.l.b16 %v320
    %v844 = vunpack.c.h.b16 %v320
    %v845 = vunpack.c.l.b16 %v321
    %v846 = vunpack.c.h.b16 %v321
    %v847 = vunpack.c.l.b16 %v322
    %v848 = vunpack.c.h.b16 %v322
    %v849 = vunpack.c.l.b16 %v323
    %v850 = vunpack.c.h.b16 %v323
    %v851 = vunpack.c.l.b16 %v324
    %v852 = vunpack.c.h.b16 %v324
    %v853 = vunpack.c.l.b16 %v325
    %v854 = vunpack.c.h.b16 %v325
    %v855 = vunpack.c.l.b16 %v326
    %v856 = vunpack.c.h.b16 %v326
    %v857 = vunpack.c.l.b16 %v327
    %v858 = vunpack.c.h.b16 %v327
    %v859 = vunpack.c.l.b16 %v328
    %v860 = vunpack.c.h.b16 %v328
    %v861 = vunpack.c.l.b16 %v329
    %v862 = vunpack.c.h.b16 %v329
    %v863 = vunpack.c.l.b16 %v330
    %v864 = vunpack.c.h.b16 %v330
    %v865 = vunpack.c.l.b16 %v331
    %v866 = vunpack.c.h.b16 %v331
    %v867 = vunpack.c.l.b16 %v332
    %v868 = vunpack.c.h.b16 %v332
    %v869 = vunpack.c.l.b16 %v333
    %v870 = vunpack.c.h.b16 %v333
    %v871 = vunpack.c.l.b16 %v334
    %v872 = vunpack.c.h.b16 %v334
    %v873 = vunpack.c.l.b16 %v335
    %v874 = vunpack.c.h.b16 %v335
    %v875 = vunpack.c.l.b16 %v336
    %v876 = vunpack.c.h.b16 %v336
    %v877 = vunpack.c.l.b16 %v337
    %v878 = vunpack.c.h.b16 %v337
    %v879 = vunpack.c.l.b16 %v338
    %v880 = vunpack.c.h.b16 %v338
    %v881 = vunpack.c.l.b16 %v339
    %v882 = vunpack.c.h.b16 %v339
    %v883 = vunpack.c.l.b16 %v340
    %v884 = vunpack.c.h.b16 %v340
    %v885 = vunpack.c.l.b16 %v341
    %v886 = vunpack.c.h.b16 %v341
    %v887 = vunpack.c.l.b16 %v342
    %v888 = vunpack.c.h.b16 %v342
    %v889 = vunpack.c.l.b16 %v343
    %v890 = vunpack.c.h.b16 %v343
    %v891 = vunpack.c.l.b16 %v344
    %v892 = vunpack.c.h.b16 %v344
    %v893 = vunpack.c.l.b16 %v345
    %v894 = vunpack.c.h.b16 %v345
    %v895 = vunpack.c.l.b16 %v346
    %v896 = vunpack.c.h.b16 %v346
    %v897 = vunpack.c.l.b16 %v347
    %v898 = vunpack.c.h.b16 %v347
    %v899 = vunpack.c.l.b16 %v348
    %v900 = vunpack.c.h.b16 %v348
    %v901 = vunpack.c.l.b16 %v349
    %v902 = vunpack.c.h.b16 %v349
    %v903 = vunpack.c.l.b16 %v350
    %v904 = vunpack.c.h.b16 %v350
    %v905 = vunpack.c.l.b16 %v351
    %v906 = vunpack.c.h.b16 %v351
    %v907 = vunpack.c.l.b16 %v352
    %v908 = vunpack.c.h.b16 %v352
    %v909 = vunpack.c.l.b16 %v353
    %v910 = vunpack.c.h.b16 %v353
    %v911 = vunpack.c.l.b16 %v354
    %v912 = vunpack.c.h.b16 %v354
    %v913 = vunpack.c.l.b16 %v355
    %v914 = vunpack.c.h.b16 %v355
    %v915 = vunpack.c.l.b16 %v356
    %v916 = vunpack.c.h.b16 %v356
    %v917 = vunpack.c.l.b16 %v357
    %v918 = vunpack.c.h.b16 %v357
    %v919 = vunpack.c.l.b16 %v358
    %v920 = vunpack.c.h.b16 %v358
    %v921 = vunpack.c.l.b16 %v359
    %v922 = vunpack.c.h.b16 %v359
    %v923 = vunpack.c.l.b16 %v360
    %v924 = vunpack.c.h.b16 %v360
    %v925 = vunpack.c.l.b16 %v361
    %v926 = vunpack.c.h.b16 %v361
    %v927 = vunpack.c.l.b16 %v362
    %v928 = vunpack.c.h.b16 %v362
    %v929 = vunpack.c.l.b16 %v363
    %v930 = vunpack.c.h.b16 %v363
    %v931 = vunpack.c.l.b16 %v364
    %v932 = vunpack.c.h.b16 %v364
    %v933 = vunpack.c.l.b16 %v365
    %v934 = vunpack.c.h.b16 %v365
    %v935 = vunpack.c.l.b16 %v366
    %v936 = vunpack.c.h.b16 %v366
    %v937 = vunpack.c.l.b16 %v367
    %v938 = vunpack.c.h.b16 %v367
    %v939 = vunpack.c.l.b16 %v368
    %v940 = vunpack.c.h.b16 %v368
    %v941 = vunpack.c.l.b16 %v369
    %v942 = vunpack.c.h.b16 %v369
    %v943 = vunpack.c.l.b16 %v370
    %v944 = vunpack.c.h.b16 %v370
    %v945 = vunpack.c.l.b16 %v371
    %v946 = vunpack.c.h.b16 %v371
    %v947 = vunpack.c.l.b16 %v372
    %v948 = vunpack.c.h.b16 %v372
    %v949 = vunpack.c.l.b16 %v373
    %v950 = vunpack.c.h.b16 %v373
    %v951 = vunpack.c.l.b16 %v374
    %v952 = vunpack.c.h.b16 %v374
    %v953 = vunpack.c.l.b16 %v375
    %v954 = vunpack.c.h.b16 %v375
    %v955 = vunpack.c.l.b16 %v376
    %v956 = vunpack.c.h.b16 %v376
    %v957 = vunpack.c.l.b16 %v377
    %v958 = vunpack.c.h.b16 %v377
    %v959 = vunpack.c.l.b16 %v378
    %v960 = vunpack.c.h.b16 %v378
    %v961 = vunpack.c.l.b16 %v379
    %v962 = vunpack.c.h.b16 %v379
    %v963 = vunpack.c.l.b16 %v380
    %v964 = vunpack.c.h.b16 %v380
    %v965 = vunpack.c.l.b16 %v381
    %v966 = vunpack.c.h.b16 %v381
    %v967 = vunpack.c.l.b16 %v382
    %v968 = vunpack.c.h.b16 %v382
    %v969 = vunpack.c.l.b16 %v383
    %v970 = vunpack.c.h.b16 %v383
    %v971 = vunpack.c.l.b16 %v384
    %v972 = vunpack.c.h.b16 %v384
    %v973 = vunpack.c.l.b16 %v385
    %v974 = vunpack.c.h.b16 %v385
    %v975 = vunpack.c.l.b16 %v386
    %v976 = vunpack.c.h.b16 %v386
    %v977 = vunpack.c.l.b16 %v387
    %v978 = vunpack.c.h.b16 %v387
    %v979 = vunpack.c.l.b16 %v388
    %v980 = vunpack.c.h.b16 %v388
    %v981 = vunpack.c.l.b16 %v389
    %v982 = vunpack.c.h.b16 %v389
    %v983 = vunpack.c.l.b16 %v390
    %v984 = vunpack.c.h.b16 %v390
    %v985 = vunpack.c.l.b16 %v391
    %v986 = vunpack.c.h.b16 %v391
    %v987 = vunpack.c.l.b16 %v392
    %v988 = vunpack.c.h.b16 %v392
    %v989 = vunpack.c.l.b16 %v393
    %v990 = vunpack.c.h.b16 %v393
    %v991 = vunpack.c.l.b16 %v394
    %v992 = vunpack.c.h.b16 %v394
    %v993 = vunpack.c.l.b16 %v395
    %v994 = vunpack.c.h.b16 %v395
    %v995 = vunpack.c.l.b16 %v396
    %v996 = vunpack.c.h.b16 %v396
    %v997 = vunpack.c.l.b16 %v397
    %v998 = vunpack.c.h.b16 %v397
    %v999 = vunpack.c.l.b16 %v398
    %v1000 = vunpack.c.h.b16 %v398
    %v1001 = vunpack.c.l.b16 %v399
    %v1002 = vunpack.c.h.b16 %v399
    %v1003 = vunpack.c.l.b16 %v400
    %v1004 = vunpack.c.h.b16 %v400
    %v1005 = vunpack.c.l.b16 %v401
    %v1006 = vunpack.c.h.b16 %v401
    %v1007 = vunpack.c.l.b16 %v402
    %v1008 = vunpack.c.h.b16 %v402
    %v1009 = vunpack.c.l.b16 %v403
    %v1010 = vunpack.c.h.b16 %v403
    %v1011 = vunpack.c.l.b16 %v404
    %v1012 = vunpack.c.h.b16 %v404
    %v1013 = vunpack.c.l.b16 %v405
    %v1014 = vunpack.c.h.b16 %v405
    %v1015 = vunpack.c.l.b16 %v406
    %v1016 = vunpack.c.h.b16 %v406
    %v1017 = vpack.c.b16 %v629, %v625
    %v1018 = vpack.c.b16 %v630, %v626
    %v1019 = vpack.c.b16 %v631, %v627
    %v1020 = vpack.c.b16 %v632, %v628
    %v1021 = vpack.c.b16 %v637, %v633
    %v1022 = vpack.c.b16 %v638, %v634
    %v1023 = vpack.c.b16 %v639, %v635
    %v1024 = vpack.c.b16 %v640, %v636
    %v1025 = vpack.c.b16 %v645, %v641
    %v1026 = vpack.c.b16 %v646, %v642
    %v1027 = vpack.c.b16 %v647, %v643
    %v1028 = vpack.c.b16 %v648, %v644
    %v1029 = vpack.c.b16 %v653, %v649
    %v1030 = vpack.c.b16 %v654, %v650
    %v1031 = vpack.c.b16 %v655, %v651
    %v1032 = vpack.c.b16 %v656, %v652
    %v1033 = vpack.c.b16 %v661, %v657
    %v1034 = vpack.c.b16 %v662, %v658
    %v1035 = vpack.c.b16 %v663, %v659
    %v1036 = vpack.c.b16 %v664, %v660
    %v1037 = vpack.c.b16 %v669, %v665
    %v1038 = vpack.c.b16 %v670, %v666
    %v1039 = vpack.c.b16 %v671, %v667
    %v1040 = vpack.c.b16 %v672, %v668
    %v1041 = vpack.c.b16 %v677, %v673
    %v1042 = vpack.c.b16 %v678, %v674
    %v1043 = vpack.c.b16 %v679, %v675
    %v1044 = vpack.c.b16 %v680, %v676
    %v1045 = vpack.c.b16 %v685, %v681
    %v1046 = vpack.c.b16 %v686, %v682
    %v1047 = vpack.c.b16 %v687, %v683
    %v1048 = vpack.c.b16 %v688, %v684
    %v1049 = vpack.c.b16 %v693, %v689
    %v1050 = vpack.c.b16 %v694, %v690
    %v1051 = vpack.c.b16 %v695, %v691
    %v1052 = vpack.c.b16 %v696, %v692
    %v1053 = vpack.c.b16 %v701, %v697
    %v1054 = vpack.c.b16 %v702, %v698
    %v1055 = vpack.c.b16 %v703, %v699
    %v1056 = vpack.c.b16 %v704, %v700
    %v1057 = vpack.c.b16 %v709, %v705
    %v1058 = vpack.c.b16 %v710, %v706
    %v1059 = vpack.c.b16 %v711, %v707
    %v1060 = vpack.c.b16 %v712, %v708
    %v1061 = vpack.c.b16 %v717, %v713
    %v1062 = vpack.c.b16 %v718, %v714
    %v1063 = vpack.c.b16 %v719, %v715
    %v1064 = vpack.c.b16 %v720, %v716
    %v1065 = vpack.c.b16 %v725, %v721
    %v1066 = vpack.c.b16 %v726, %v722
    %v1067 = vpack.c.b16 %v727, %v723
    %v1068 = vpack.c.b16 %v728, %v724
    %v1069 = vpack.c.b16 %v733, %v729
    %v1070 = vpack.c.b16 %v734, %v730
    %v1071 = vpack.c.b16 %v735, %v731
    %v1072 = vpack.c.b16 %v736, %v732
    %v1073 = vpack.c.b16 %v741, %v737
    %v1074 = vpack.c.b16 %v742, %v738
    %v1075 = vpack.c.b16 %v743, %v739
    %v1076 = vpack.c.b16 %v744, %v740
    %v1077 = vpack.c.b16 %v749, %v745
    %v1078 = vpack.c.b16 %v750, %v746
    %v1079 = vpack.c.b16 %v751, %v747
    %v1080 = vpack.c.b16 %v752, %v748
    %v1081 = vpack.c.b16 %v757, %v753
    %v1082 = vpack.c.b16 %v758, %v754
    %v1083 = vpack.c.b16 %v759, %v755
    %v1084 = vpack.c.b16 %v760, %v756
    %v1085 = vpack.c.b16 %v765, %v761
    %v1086 = vpack.c.b16 %v766, %v762
    %v1087 = vpack.c.b16 %v767, %v763
    %v1088 = vpack.c.b16 %v768, %v764
    %v1089 = vpack.c.b16 %v773, %v769
    %v1090 = vpack.c.b16 %v774, %v770
    %v1091 = vpack.c.b16 %v775, %v771
    %v1092 = vpack.c.b16 %v776, %v772
    %v1093 = vpack.c.b16 %v781, %v777
    %v1094 = vpack.c.b16 %v782, %v778
    %v1095 = vpack.c.b16 %v783, %v779
    %v1096 = vpack.c.b16 %v784, %v780
    %v1097 = vpack.c.b16 %v789, %v785
    %v1098 = vpack.c.b16 %v790, %v786
    %v1099 = vpack.c.b16 %v791, %v787
    %v1100 = vpack.c.b16 %v792, %v788
    %v1101 = vpack.c.b16 %v797, %v793
    %v1102 = vpack.c.b16 %v798, %v794
    %v1103 = vpack.c.b16 %v799, %v795
    %v1104 = vpack.c.b16 %v800, %v796
    %v1105 = vpack.c.b16 %v805, %v801
    %v1106 = vpack.c.b16 %v806, %v802
    %v1107 = vpack.c.b16 %v807, %v803
    %v1108 = vpack.c.b16 %v808, %v804
    %v1109 = vpack.c.b16 %v813, %v809
    %v1110 = vpack.c.b16 %v814, %v810
    %v1111 = vpack.c.b16 %v815, %v811
    %v1112 = vpack.c.b16 %v816, %v812
    %v1113 = vpack.c.b16 %v821, %v817
    %v1114 = vpack.c.b16 %v822, %v818
    %v1115 = vpack.c.b16 %v823, %v819
    %v1116 = vpack.c.b16 %v824, %v820
    %v1117 = vpack.c.b16 %v829, %v825
    %v1118 = vpack.c.b16 %v830, %v826
    %v1119 = vpack.c.b16 %v831, %v827
    %v1120 = vpack.c.b16 %v832, %v828
    %v1121 = vpack.c.b16 %v837, %v833
    %v1122 = vpack.c.b16 %v838, %v834
    %v1123 = vpack.c.b16 %v839, %v835
    %v1124 = vpack.c.b16 %v840, %v836
    %v1125 = vpack.c.b16 %v845, %v841
    %v1126 = vpack.c.b16 %v846, %v842
    %v1127 = vpack.c.b16 %v847, %v843
    %v1128 = vpack.c.b16 %v848, %v844
    %v1129 = vpack.c.b16 %v853, %v849
    %v1130 = vpack.c.b16 %v854, %v850
    %v1131 = vpack.c.b16 %v855, %v851
    %v1132 = vpack.c.b16 %v856, %v852
    %v1133 = vpack.c.b16 %v861, %v857
    %v1134 = vpack.c.b16 %v862, %v858
    %v1135 = vpack.c.b16 %v863, %v859
    %v1136 = vpack.c.b16 %v864, %v860
    %v1137 = vpack.c.b16 %v869, %v865
    %v1138 = vpack.c.b16 %v870, %v866
    %v1139 = vpack.c.b16 %v871, %v867
    %v1140 = vpack.c.b16 %v872, %v868
    %v1141 = vpack.c.b16 %v877, %v873
    %v1142 = vpack.c.b16 %v878, %v874
    %v1143 = vpack.c.b16 %v879, %v875
    %v1144 = vpack.c.b16 %v880, %v876
    %v1145 = vpack.c.b16 %v885, %v881
    %v1146 = vpack.c.b16 %v886, %v882
    %v1147 = vpack.c.b16 %v887, %v883
    %v1148 = vpack.c.b16 %v888, %v884
    %v1149 = vpack.c.b16 %v893, %v889
    %v1150 = vpack.c.b16 %v894, %v890
    %v1151 = vpack.c.b16 %v895, %v891
    %v1152 = vpack.c.b16 %v896, %v892
    %v1153 = vpack.c.b16 %v901, %v897
    %v1154 = vpack.c.b16 %v902, %v898
    %v1155 = vpack.c.b16 %v903, %v899
    %v1156 = vpack.c.b16 %v904, %v900
    %v1157 = vpack.c.b16 %v909, %v905
    %v1158 = vpack.c.b16 %v910, %v906
    %v1159 = vpack.c.b16 %v911, %v907
    %v1160 = vpack.c.b16 %v912, %v908
    %v1161 = vpack.c.b16 %v917, %v913
    %v1162 = vpack.c.b16 %v918, %v914
    %v1163 = vpack.c.b16 %v919, %v915
    %v1164 = vpack.c.b16 %v920, %v916
    %v1165 = vpack.c.b16 %v925, %v921
    %v1166 = vpack.c.b16 %v926, %v922
    %v1167 = vpack.c.b16 %v927, %v923
    %v1168 = vpack.c.b16 %v928, %v924
    %v1169 = vpack.c.b16 %v933, %v929
    %v1170 = vpack.c.b16 %v934, %v930
    %v1171 = vpack.c.b16 %v935, %v931
    %v1172 = vpack.c.b16 %v936, %v932
    %v1173 = vpack.c.b16 %v941, %v937
    %v1174 = vpack.c.b16 %v942, %v938
    %v1175 = vpack.c.b16 %v943, %v939
    %v1176 = vpack.c.b16 %v944, %v940
    %v1177 = vpack.c.b16 %v949, %v945
    %v1178 = vpack.c.b16 %v950, %v946
    %v1179 = vpack.c.b16 %v951, %v947
    %v1180 = vpack.c.b16 %v952, %v948
    %v1181 = vpack.c.b16 %v957, %v953
    %v1182 = vpack.c.b16 %v958, %v954
    %v1183 = vpack.c.b16 %v959, %v955
    %v1184 = vpack.c.b16 %v960, %v956
    %v1185 = vpack.c.b16 %v965, %v961
    %v1186 = vpack.c.b16 %v966, %v962
    %v1187 = vpack.c.b16 %v967, %v963
    %v1188 = vpack.c.b16 %v968, %v964
    %v1189 = vpack.c.b16 %v973, %v969
    %v1190 = vpack.c.b16 %v974, %v970
    %v1191 = vpack.c.b16 %v975, %v971
    %v1192 = vpack.c.b16 %v976, %v972
    %v1193 = vpack.c.b16 %v981, %v977
    %v1194 = vpack.c.b16 %v982, %v978
    %v1195 = vpack.c.b16 %v983, %v979
    %v1196 = vpack.c.b16 %v984, %v980
    %v1197 = vpack.c.b16 %v989, %v985
    %v1198 = vpack.c.b16 %v990, %v986
    %v1199 = vpack.c.b16 %v991, %v987
    %v1200 = vpack.c.b16 %v992, %v988
    %v1201 = vpack.c.b16 %v997, %v993
    %v1202 = vpack.c.b16 %v998, %v994
    %v1203 = vpack.c.b16 %v999, %v995
    %v1204 = vpack.c.b16 %v1000, %v996
    %v1205 = vpack.c.b16 %v1005, %v1001
    %v1206 = vpack.c.b16 %v1006, %v1002
    %v1207 = vpack.c.b16 %v1007, %v1003
    %v1208 = vpack.c.b16 %v1008, %v1004
    %v1209 = vpack.c.b16 %v1013, %v1009
    %v1210 = vpack.c.b16 %v1014, %v1010
    %v1211 = vpack.c.b16 %v1015, %v1011
    %v1212 = vpack.c.b16 %v1016, %v1012
    %vm1409 = vcmask 130048
    %v1411 = vsel %vm1409, %v161, 0
    %v1414 = vsel %vm1409, %v168, 0
    %v1417 = vsel %vm1409, %v175, 0
    %v1420 = vsel %vm1409, %v182, 0
    %v1423 = vsel %vm1409, %v189, 0
    %v1426 = vsel %vm1409, %v196, 0
    %v1429 = vsel %vm1409, %v203, 0
    %v1432 = vsel %vm1409, %v210, 0
    %1434 = vmatprep.subr.bf16.mxu0 %v1018
    %1435 = vmatpush1.bf16.msra.mxu0 %v1017
    %1436 = vmatprep.subr.bf16.mxu0 %v1022
    %1437 = vmatpush1.bf16.msra.mxu0 %v1021
    %1438 = vmatprep.subr.bf16.mxu0 %v1026
    %1439 = vmatpush1.bf16.msra.mxu0 %v1025
    %1440 = vmatprep.subr.bf16.mxu0 %v1030
    %1441 = vmatpush1.bf16.msra.mxu0 %v1029
    %1442 = vmatprep.subr.bf16.mxu0 %v1034
    %1443 = vmatpush1.bf16.msra.mxu0 %v1033
    %1444 = vmatprep.subr.bf16.mxu0 %v1038
    %1445 = vmatpush1.bf16.msra.mxu0 %v1037
    %1446 = vmatprep.subr.bf16.mxu0 %v1042
    %1447 = vmatpush1.bf16.msra.mxu0 %v1041
    %1448 = vmatprep.subr.bf16.mxu0 %v1046
    %1449 = vmatpush1.bf16.msra.mxu0 %v1045
    %1450 = vmatprep.subr.bf16.mxu0 %v1050
    %1451 = vmatpush1.bf16.msra.mxu0 %v1049
    %1452 = vmatprep.subr.bf16.mxu0 %v1054
    %1453 = vmatpush1.bf16.msra.mxu0 %v1053
    %1454 = vmatprep.subr.bf16.mxu0 %v1058
    %1455 = vmatpush1.bf16.msra.mxu0 %v1057
    %1456 = vmatprep.subr.bf16.mxu0 %v1062
    %1457 = vmatpush1.bf16.msra.mxu0 %v1061
    %1458 = vmatprep.subr.bf16.mxu0 %v1066
    %1459 = vmatpush1.bf16.msra.mxu0 %v1065
    %1460 = vmatprep.subr.bf16.mxu0 %v1070
    %1461 = vmatpush1.bf16.msra.mxu0 %v1069
    %1462 = vmatprep.subr.bf16.mxu0 %v1074
    %1463 = vmatpush1.bf16.msra.mxu0 %v1073
    %1464 = vmatprep.subr.bf16.mxu0 %v1078
    %1465 = vmatpush1.bf16.msra.mxu0 %v1077
    %1466 = vmatprep.mubr.bf16.mxu0 %v156
    %1467 = vmatmul.mubr.bf16.gmra.mrb[0].mxu0 %v155
    %v1468 = vpop.f32.mrb[0].mxu0
    %v1469 = vadd.f32 %v412, %v1468
    %v1470 = vpop.f32.mrb[0].mxu0
    %v1471 = vadd.f32 %v416, %v1470
    %v1472 = vpop.f32.mrb[0].mxu0
    %v1473 = vadd.f32 %v412, %v1472
    %v1474 = vpop.f32.mrb[0].mxu0
    %v1475 = vadd.f32 %v416, %v1474
    %1476 = vmatprep.mubr.bf16.mxu0 %v163
    %1477 = vmatmul.mubr.bf16.gmra.mrb[0].mxu0 %v162
    %v1478 = vpop.f32.mrb[0].mxu0
    %v1479 = vadd.f32 %v412, %v1478
    %v1480 = vpop.f32.mrb[0].mxu0
    %v1481 = vadd.f32 %v416, %v1480
    %v1482 = vpop.f32.mrb[0].mxu0
    %v1483 = vadd.f32 %v412, %v1482
    %v1484 = vpop.f32.mrb[0].mxu0
    %v1485 = vadd.f32 %v416, %v1484
    %1486 = vmatprep.mubr.bf16.mxu0 %v170
    %1487 = vmatmul.mubr.bf16.gmra.mrb[0].mxu0 %v169
    %v1488 = vpop.f32.mrb[0].mxu0
    %v1489 = vadd.f32 %v412, %v1488
    %v1490 = vpop.f32.mrb[0].mxu0
    %v1491 = vadd.f32 %v416, %v1490
    %v1492 = vpop.f32.mrb[0].mxu0
    %v1493 = vadd.f32 %v412, %v1492
    %v1494 = vpop.f32.mrb[0].mxu0
    %v1495 = vadd.f32 %v416, %v1494
    %1496 = vmatprep.mubr.bf16.mxu0 %v177
    %1497 = vmatmul.mubr.bf16.gmra.mrb[0].mxu0 %v176
    %v1498 = vpop.f32.mrb[0].mxu0
    %v1499 = vadd.f32 %v412, %v1498
    %v1500 = vpop.f32.mrb[0].mxu0
    %v1501 = vadd.f32 %v416, %v1500
    %v1502 = vpop.f32.mrb[0].mxu0
    %v1503 = vadd.f32 %v412, %v1502
    %v1504 = vpop.f32.mrb[0].mxu0
    %v1505 = vadd.f32 %v416, %v1504
    %1506 = vmatprep.mubr.bf16.mxu0 %v184
    %1507 = vmatmul.mubr.bf16.gmra.mrb[0].mxu0 %v183
    %v1508 = vpop.f32.mrb[0].mxu0
    %v1509 = vadd.f32 %v412, %v1508
    %v1510 = vpop.f32.mrb[0].mxu0
    %v1511 = vadd.f32 %v416, %v1510
    %v1512 = vpop.f32.mrb[0].mxu0
    %v1513 = vadd.f32 %v412, %v1512
    %v1514 = vpop.f32.mrb[0].mxu0
    %v1515 = vadd.f32 %v416, %v1514
    %1516 = vmatprep.mubr.bf16.mxu0 %v191
    %1517 = vmatmul.mubr.bf16.gmra.mrb[0].mxu0 %v190
    %v1518 = vpop.f32.mrb[0].mxu0
    %v1519 = vadd.f32 %v412, %v1518
    %v1520 = vpop.f32.mrb[0].mxu0
    %v1521 = vadd.f32 %v416, %v1520
    %v1522 = vpop.f32.mrb[0].mxu0
    %v1523 = vadd.f32 %v412, %v1522
    %v1524 = vpop.f32.mrb[0].mxu0
    %v1525 = vadd.f32 %v416, %v1524
    %1526 = vmatprep.mubr.bf16.mxu0 %v198
    %1527 = vmatmul.mubr.bf16.gmra.mrb[0].mxu0 %v197
    %v1528 = vpop.f32.mrb[0].mxu0
    %v1529 = vadd.f32 %v412, %v1528
    %v1530 = vpop.f32.mrb[0].mxu0
    %v1531 = vadd.f32 %v416, %v1530
    %v1532 = vpop.f32.mrb[0].mxu0
    %v1533 = vadd.f32 %v412, %v1532
    %v1534 = vpop.f32.mrb[0].mxu0
    %v1535 = vadd.f32 %v416, %v1534
    %1536 = vmatprep.mubr.bf16.mxu0 %v205
    %1537 = vmatmul.mubr.bf16.gmra.mrb[0].mxu0 %v204
    %v1538 = vpop.f32.mrb[0].mxu0
    %v1539 = vadd.f32 %v412, %v1538
    %v1540 = vpop.f32.mrb[0].mxu0
    %v1541 = vadd.f32 %v416, %v1540
    %v1542 = vpop.f32.mrb[0].mxu0
    %v1543 = vadd.f32 %v412, %v1542
    %v1544 = vpop.f32.mrb[0].mxu0
    %v1545 = vadd.f32 %v416, %v1544
    %1546 = vdwg.mxu0
    %1547 = vmatprep.subr.bf16.mxu0 %v1082
    %1548 = vmatpush1.bf16.msra.mxu0 %v1081
    %1549 = vmatprep.subr.bf16.mxu0 %v1086
    %1550 = vmatpush1.bf16.msra.mxu0 %v1085
    %1551 = vmatprep.subr.bf16.mxu0 %v1090
    %1552 = vmatpush1.bf16.msra.mxu0 %v1089
    %1553 = vmatprep.subr.bf16.mxu0 %v1094
    %1554 = vmatpush1.bf16.msra.mxu0 %v1093
    %1555 = vmatprep.subr.bf16.mxu0 %v1098
    %1556 = vmatpush1.bf16.msra.mxu0 %v1097
    %1557 = vmatprep.subr.bf16.mxu0 %v1102
    %1558 = vmatpush1.bf16.msra.mxu0 %v1101
    %1559 = vmatprep.subr.bf16.mxu0 %v1106
    %1560 = vmatpush1.bf16.msra.mxu0 %v1105
    %1561 = vmatprep.subr.bf16.mxu0 %v1110
    %1562 = vmatpush1.bf16.msra.mxu0 %v1109
    %1563 = vmatprep.subr.bf16.mxu0 %v1114
    %1564 = vmatpush1.bf16.msra.mxu0 %v1113
    %1565 = vmatprep.subr.bf16.mxu0 %v1118
    %1566 = vmatpush1.bf16.msra.mxu0 %v1117
    %1567 = vmatprep.subr.bf16.mxu0 %v1122
    %1568 = vmatpush1.bf16.msra.mxu0 %v1121
    %1569 = vmatprep.subr.bf16.mxu0 %v1126
    %1570 = vmatpush1.bf16.msra.mxu0 %v1125
    %1571 = vmatprep.subr.bf16.mxu0 %v1130
    %1572 = vmatpush1.bf16.msra.mxu0 %v1129
    %1573 = vmatprep.subr.bf16.mxu0 %v1134
    %1574 = vmatpush1.bf16.msra.mxu0 %v1133
    %1575 = vmatprep.subr.bf16.mxu0 %v1138
    %1576 = vmatpush1.bf16.msra.mxu0 %v1137
    %1577 = vmatprep.subr.bf16.mxu0 %v1142
    %1578 = vmatpush1.bf16.msra.mxu0 %v1141
    %1579 = vmatprep.mubr.bf16.mxu0 %v158
    %1580 = vmatmul.mubr.bf16.gmra.mrb[0].mxu0 %v157
    %v1581 = vpop.f32.mrb[0].mxu0
    %v1582 = vadd.f32 %v1469, %v1581
    %v1583 = vpop.f32.mrb[0].mxu0
    %v1584 = vadd.f32 %v1471, %v1583
    %v1585 = vpop.f32.mrb[0].mxu0
    %v1586 = vadd.f32 %v1473, %v1585
    %v1587 = vpop.f32.mrb[0].mxu0
    %v1588 = vadd.f32 %v1475, %v1587
    %1589 = vmatprep.mubr.bf16.mxu0 %v165
    %1590 = vmatmul.mubr.bf16.gmra.mrb[0].mxu0 %v164
    %v1591 = vpop.f32.mrb[0].mxu0
    %v1592 = vadd.f32 %v1479, %v1591
    %v1593 = vpop.f32.mrb[0].mxu0
    %v1594 = vadd.f32 %v1481, %v1593
    %v1595 = vpop.f32.mrb[0].mxu0
    %v1596 = vadd.f32 %v1483, %v1595
    %v1597 = vpop.f32.mrb[0].mxu0
    %v1598 = vadd.f32 %v1485, %v1597
    %1599 = vmatprep.mubr.bf16.mxu0 %v172
    %1600 = vmatmul.mubr.bf16.gmra.mrb[0].mxu0 %v171
    %v1601 = vpop.f32.mrb[0].mxu0
    %v1602 = vadd.f32 %v1489, %v1601
    %v1603 = vpop.f32.mrb[0].mxu0
    %v1604 = vadd.f32 %v1491, %v1603
    %v1605 = vpop.f32.mrb[0].mxu0
    %v1606 = vadd.f32 %v1493, %v1605
    %v1607 = vpop.f32.mrb[0].mxu0
    %v1608 = vadd.f32 %v1495, %v1607
    %1609 = vmatprep.mubr.bf16.mxu0 %v179
    %1610 = vmatmul.mubr.bf16.gmra.mrb[0].mxu0 %v178
    %v1611 = vpop.f32.mrb[0].mxu0
    %v1612 = vadd.f32 %v1499, %v1611
    %v1613 = vpop.f32.mrb[0].mxu0
    %v1614 = vadd.f32 %v1501, %v1613
    %v1615 = vpop.f32.mrb[0].mxu0
    %v1616 = vadd.f32 %v1503, %v1615
    %v1617 = vpop.f32.mrb[0].mxu0
    %v1618 = vadd.f32 %v1505, %v1617
    %1619 = vmatprep.mubr.bf16.mxu0 %v186
    %1620 = vmatmul.mubr.bf16.gmra.mrb[0].mxu0 %v185
    %v1621 = vpop.f32.mrb[0].mxu0
    %v1622 = vadd.f32 %v1509, %v1621
    %v1623 = vpop.f32.mrb[0].mxu0
    %v1624 = vadd.f32 %v1511, %v1623
    %v1625 = vpop.f32.mrb[0].mxu0
    %v1626 = vadd.f32 %v1513, %v1625
    %v1627 = vpop.f32.mrb[0].mxu0
    %v1628 = vadd.f32 %v1515, %v1627
    %1629 = vmatprep.mubr.bf16.mxu0 %v193
    %1630 = vmatmul.mubr.bf16.gmra.mrb[0].mxu0 %v192
    %v1631 = vpop.f32.mrb[0].mxu0
    %v1632 = vadd.f32 %v1519, %v1631
    %v1633 = vpop.f32.mrb[0].mxu0
    %v1634 = vadd.f32 %v1521, %v1633
    %v1635 = vpop.f32.mrb[0].mxu0
    %v1636 = vadd.f32 %v1523, %v1635
    %v1637 = vpop.f32.mrb[0].mxu0
    %v1638 = vadd.f32 %v1525, %v1637
    %1639 = vmatprep.mubr.bf16.mxu0 %v200
    %1640 = vmatmul.mubr.bf16.gmra.mrb[0].mxu0 %v199
    %v1641 = vpop.f32.mrb[0].mxu0
    %v1642 = vadd.f32 %v1529, %v1641
    %v1643 = vpop.f32.mrb[0].mxu0
    %v1644 = vadd.f32 %v1531, %v1643
    %v1645 = vpop.f32.mrb[0].mxu0
    %v1646 = vadd.f32 %v1533, %v1645
    %v1647 = vpop.f32.mrb[0].mxu0
    %v1648 = vadd.f32 %v1535, %v1647
    %1649 = vmatprep.mubr.bf16.mxu0 %v207
    %1650 = vmatmul.mubr.bf16.gmra.mrb[0].mxu0 %v206
    %v1651 = vpop.f32.mrb[0].mxu0
    %v1652 = vadd.f32 %v1539, %v1651
    %v1653 = vpop.f32.mrb[0].mxu0
    %v1654 = vadd.f32 %v1541, %v1653
    %v1655 = vpop.f32.mrb[0].mxu0
    %v1656 = vadd.f32 %v1543, %v1655
    %v1657 = vpop.f32.mrb[0].mxu0
    %v1658 = vadd.f32 %v1545, %v1657
    %1659 = vdwg.mxu0
    %1660 = vmatprep.subr.bf16.mxu0 %v1146
    %1661 = vmatpush1.bf16.msra.mxu0 %v1145
    %1662 = vmatprep.subr.bf16.mxu0 %v1150
    %1663 = vmatpush1.bf16.msra.mxu0 %v1149
    %1664 = vmatprep.subr.bf16.mxu0 %v1154
    %1665 = vmatpush1.bf16.msra.mxu0 %v1153
    %1666 = vmatprep.subr.bf16.mxu0 %v1158
    %1667 = vmatpush1.bf16.msra.mxu0 %v1157
    %1668 = vmatprep.subr.bf16.mxu0 %v1162
    %1669 = vmatpush1.bf16.msra.mxu0 %v1161
    %1670 = vmatprep.subr.bf16.mxu0 %v1166
    %1671 = vmatpush1.bf16.msra.mxu0 %v1165
    %1672 = vmatprep.subr.bf16.mxu0 %v1170
    %1673 = vmatpush1.bf16.msra.mxu0 %v1169
    %1674 = vmatprep.subr.bf16.mxu0 %v1174
    %1675 = vmatpush1.bf16.msra.mxu0 %v1173
    %1676 = vmatprep.subr.bf16.mxu0 %v1178
    %1677 = vmatpush1.bf16.msra.mxu0 %v1177
    %1678 = vmatprep.subr.bf16.mxu0 %v1182
    %1679 = vmatpush1.bf16.msra.mxu0 %v1181
    %1680 = vmatprep.subr.bf16.mxu0 %v1186
    %1681 = vmatpush1.bf16.msra.mxu0 %v1185
    %1682 = vmatprep.subr.bf16.mxu0 %v1190
    %1683 = vmatpush1.bf16.msra.mxu0 %v1189
    %1684 = vmatprep.subr.bf16.mxu0 %v1194
    %1685 = vmatpush1.bf16.msra.mxu0 %v1193
    %1686 = vmatprep.subr.bf16.mxu0 %v1198
    %1687 = vmatpush1.bf16.msra.mxu0 %v1197
    %1688 = vmatprep.subr.bf16.mxu0 %v1202
    %1689 = vmatpush1.bf16.msra.mxu0 %v1201
    %1690 = vmatprep.subr.bf16.mxu0 %v1206
    %1691 = vmatpush1.bf16.msra.mxu0 %v1205
    %1692 = vmatprep.mubr.bf16.mxu0 %v160
    %1693 = vmatmul.mubr.bf16.gmra.mrb[0].mxu0 %v159
    %v1694 = vpop.f32.mrb[0].mxu0
    %v1695 = vadd.f32 %v1582, %v1694
    %v1696 = vpop.f32.mrb[0].mxu0
    %v1697 = vadd.f32 %v1584, %v1696
    %v1698 = vpop.f32.mrb[0].mxu0
    %v1699 = vadd.f32 %v1586, %v1698
    %v1700 = vpop.f32.mrb[0].mxu0
    %v1701 = vadd.f32 %v1588, %v1700
    %1702 = vmatprep.mubr.bf16.mxu0 %v167
    %1703 = vmatmul.mubr.bf16.gmra.mrb[0].mxu0 %v166
    %v1704 = vpop.f32.mrb[0].mxu0
    %v1705 = vadd.f32 %v1592, %v1704
    %v1706 = vpop.f32.mrb[0].mxu0
    %v1707 = vadd.f32 %v1594, %v1706
    %v1708 = vpop.f32.mrb[0].mxu0
    %v1709 = vadd.f32 %v1596, %v1708
    %v1710 = vpop.f32.mrb[0].mxu0
    %v1711 = vadd.f32 %v1598, %v1710
    %1712 = vmatprep.mubr.bf16.mxu0 %v174
    %1713 = vmatmul.mubr.bf16.gmra.mrb[0].mxu0 %v173
    %v1714 = vpop.f32.mrb[0].mxu0
    %v1715 = vadd.f32 %v1602, %v1714
    %v1716 = vpop.f32.mrb[0].mxu0
    %v1717 = vadd.f32 %v1604, %v1716
    %v1718 = vpop.f32.mrb[0].mxu0
    %v1719 = vadd.f32 %v1606, %v1718
    %v1720 = vpop.f32.mrb[0].mxu0
    %v1721 = vadd.f32 %v1608, %v1720
    %1722 = vmatprep.mubr.bf16.mxu0 %v181
    %1723 = vmatmul.mubr.bf16.gmra.mrb[0].mxu0 %v180
    %v1724 = vpop.f32.mrb[0].mxu0
    %v1725 = vadd.f32 %v1612, %v1724
    %v1726 = vpop.f32.mrb[0].mxu0
    %v1727 = vadd.f32 %v1614, %v1726
    %v1728 = vpop.f32.mrb[0].mxu0
    %v1729 = vadd.f32 %v1616, %v1728
    %v1730 = vpop.f32.mrb[0].mxu0
    %v1731 = vadd.f32 %v1618, %v1730
    %1732 = vmatprep.mubr.bf16.mxu0 %v188
    %1733 = vmatmul.mubr.bf16.gmra.mrb[0].mxu0 %v187
    %v1734 = vpop.f32.mrb[0].mxu0
    %v1735 = vadd.f32 %v1622, %v1734
    %v1736 = vpop.f32.mrb[0].mxu0
    %v1737 = vadd.f32 %v1624, %v1736
    %v1738 = vpop.f32.mrb[0].mxu0
    %v1739 = vadd.f32 %v1626, %v1738
    %v1740 = vpop.f32.mrb[0].mxu0
    %v1741 = vadd.f32 %v1628, %v1740
    %1742 = vmatprep.mubr.bf16.mxu0 %v195
    %1743 = vmatmul.mubr.bf16.gmra.mrb[0].mxu0 %v194
    %v1744 = vpop.f32.mrb[0].mxu0
    %v1745 = vadd.f32 %v1632, %v1744
    %v1746 = vpop.f32.mrb[0].mxu0
    %v1747 = vadd.f32 %v1634, %v1746
    %v1748 = vpop.f32.mrb[0].mxu0
    %v1749 = vadd.f32 %v1636, %v1748
    %v1750 = vpop.f32.mrb[0].mxu0
    %v1751 = vadd.f32 %v1638, %v1750
    %1752 = vmatprep.mubr.bf16.mxu0 %v202
    %1753 = vmatmul.mubr.bf16.gmra.mrb[0].mxu0 %v201
    %v1754 = vpop.f32.mrb[0].mxu0
    %v1755 = vadd.f32 %v1642, %v1754
    %v1756 = vpop.f32.mrb[0].mxu0
    %v1757 = vadd.f32 %v1644, %v1756
    %v1758 = vpop.f32.mrb[0].mxu0
    %v1759 = vadd.f32 %v1646, %v1758
    %v1760 = vpop.f32.mrb[0].mxu0
    %v1761 = vadd.f32 %v1648, %v1760
    %1762 = vmatprep.mubr.bf16.mxu0 %v209
    %1763 = vmatmul.mubr.bf16.gmra.mrb[0].mxu0 %v208
    %v1764 = vpop.f32.mrb[0].mxu0
    %v1765 = vadd.f32 %v1652, %v1764
    %v1766 = vpop.f32.mrb[0].mxu0
    %v1767 = vadd.f32 %v1654, %v1766
    %v1768 = vpop.f32.mrb[0].mxu0
    %v1769 = vadd.f32 %v1656, %v1768
    %v1770 = vpop.f32.mrb[0].mxu0
    %v1771 = vadd.f32 %v1658, %v1770
    %1772 = vdwg.mxu0
    %1773 = vmatprep.subr.bf16.mxu0 %v1210
    %1774 = vmatpush1.bf16.msra.mxu0 %v1209
    %1775 = vmatprep.subr.bf16.mxu0 0
    %1776 = vmatpush1.bf16.msra.mxu0 0
    %1777 = vmatprep.subr.bf16.mxu0 0
    %1778 = vmatpush1.bf16.msra.mxu0 0
    %1779 = vmatprep.subr.bf16.mxu0 0
    %1780 = vmatpush1.bf16.msra.mxu0 0
    %1781 = vmatprep.subr.bf16.mxu0 0
    %1782 = vmatpush1.bf16.msra.mxu0 0
    %1783 = vmatprep.subr.bf16.mxu0 0
    %1784 = vmatpush1.bf16.msra.mxu0 0
    %1785 = vmatprep.subr.bf16.mxu0 0
    %1786 = vmatpush1.bf16.msra.mxu0 0
    %1787 = vmatprep.subr.bf16.mxu0 0
    %1788 = vmatpush1.bf16.msra.mxu0 0
    %1789 = vmatprep.subr.bf16.mxu0 0
    %1790 = vmatpush1.bf16.msra.mxu0 0
    %1791 = vmatprep.subr.bf16.mxu0 0
    %1792 = vmatpush1.bf16.msra.mxu0 0
    %1793 = vmatprep.subr.bf16.mxu0 0
    %1794 = vmatpush1.bf16.msra.mxu0 0
    %1795 = vmatprep.subr.bf16.mxu0 0
    %1796 = vmatpush1.bf16.msra.mxu0 0
    %1797 = vmatprep.subr.bf16.mxu0 0
    %1798 = vmatpush1.bf16.msra.mxu0 0
    %1799 = vmatprep.subr.bf16.mxu0 0
    %1800 = vmatpush1.bf16.msra.mxu0 0
    %1801 = vmatprep.subr.bf16.mxu0 0
    %1802 = vmatpush1.bf16.msra.mxu0 0
    %1803 = vmatprep.subr.bf16.mxu0 0
    %1804 = vmatpush1.bf16.msra.mxu0 0
    %1805 = vmatprep.mubr.bf16.mxu0 0
    %1806 = vmatmul.mubr.bf16.gmra.mrb[0].mxu0 %v1411
    %v1807 = vpop.f32.mrb[0].mxu0
    %v1808 = vadd.f32 %v1695, %v1807
    %v1809 = vpop.f32.mrb[0].mxu0
    %v1810 = vadd.f32 %v1697, %v1809
    %v1811 = vpop.f32.mrb[0].mxu0
    %v1812 = vadd.f32 %v1699, %v1811
    %v1813 = vpop.f32.mrb[0].mxu0
    %v1814 = vadd.f32 %v1701, %v1813
    %1815 = vmatprep.mubr.bf16.mxu0 0
    %1816 = vmatmul.mubr.bf16.gmra.mrb[0].mxu0 %v1414
    %v1817 = vpop.f32.mrb[0].mxu0
    %v1818 = vadd.f32 %v1705, %v1817
    %v1819 = vpop.f32.mrb[0].mxu0
    %v1820 = vadd.f32 %v1707, %v1819
    %v1821 = vpop.f32.mrb[0].mxu0
    %v1822 = vadd.f32 %v1709, %v1821
    %v1823 = vpop.f32.mrb[0].mxu0
    %v1824 = vadd.f32 %v1711, %v1823
    %1825 = vmatprep.mubr.bf16.mxu0 0
    %1826 = vmatmul.mubr.bf16.gmra.mrb[0].mxu0 %v1417
    %v1827 = vpop.f32.mrb[0].mxu0
    %v1828 = vadd.f32 %v1715, %v1827
    %v1829 = vpop.f32.mrb[0].mxu0
    %v1830 = vadd.f32 %v1717, %v1829
    %v1831 = vpop.f32.mrb[0].mxu0
    %v1832 = vadd.f32 %v1719, %v1831
    %v1833 = vpop.f32.mrb[0].mxu0
    %v1834 = vadd.f32 %v1721, %v1833
    %1835 = vmatprep.mubr.bf16.mxu0 0
    %1836 = vmatmul.mubr.bf16.gmra.mrb[0].mxu0 %v1420
    %v1837 = vpop.f32.mrb[0].mxu0
    %v1838 = vadd.f32 %v1725, %v1837
    %v1839 = vpop.f32.mrb[0].mxu0
    %v1840 = vadd.f32 %v1727, %v1839
    %v1841 = vpop.f32.mrb[0].mxu0
    %v1842 = vadd.f32 %v1729, %v1841
    %v1843 = vpop.f32.mrb[0].mxu0
    %v1844 = vadd.f32 %v1731, %v1843
    %1845 = vmatprep.mubr.bf16.mxu0 0
    %1846 = vmatmul.mubr.bf16.gmra.mrb[0].mxu0 %v1423
    %v1847 = vpop.f32.mrb[0].mxu0
    %v1848 = vadd.f32 %v1735, %v1847
    %v1849 = vpop.f32.mrb[0].mxu0
    %v1850 = vadd.f32 %v1737, %v1849
    %v1851 = vpop.f32.mrb[0].mxu0
    %v1852 = vadd.f32 %v1739, %v1851
    %v1853 = vpop.f32.mrb[0].mxu0
    %v1854 = vadd.f32 %v1741, %v1853
    %1855 = vmatprep.mubr.bf16.mxu0 0
    %1856 = vmatmul.mubr.bf16.gmra.mrb[0].mxu0 %v1426
    %v1857 = vpop.f32.mrb[0].mxu0
    %v1858 = vadd.f32 %v1745, %v1857
    %v1859 = vpop.f32.mrb[0].mxu0
    %v1860 = vadd.f32 %v1747, %v1859
    %v1861 = vpop.f32.mrb[0].mxu0
    %v1862 = vadd.f32 %v1749, %v1861
    %v1863 = vpop.f32.mrb[0].mxu0
    %v1864 = vadd.f32 %v1751, %v1863
    %1865 = vmatprep.mubr.bf16.mxu0 0
    %1866 = vmatmul.mubr.bf16.gmra.mrb[0].mxu0 %v1429
    %v1867 = vpop.f32.mrb[0].mxu0
    %v1868 = vadd.f32 %v1755, %v1867
    %v1869 = vpop.f32.mrb[0].mxu0
    %v1870 = vadd.f32 %v1757, %v1869
    %v1871 = vpop.f32.mrb[0].mxu0
    %v1872 = vadd.f32 %v1759, %v1871
    %v1873 = vpop.f32.mrb[0].mxu0
    %v1874 = vadd.f32 %v1761, %v1873
    %1875 = vmatprep.mubr.bf16.mxu0 0
    %1876 = vmatmul.mubr.bf16.gmra.mrb[0].mxu0 %v1432
    %v1877 = vpop.f32.mrb[0].mxu0
    %v1878 = vadd.f32 %v1765, %v1877
    %v1879 = vpop.f32.mrb[0].mxu0
    %v1880 = vadd.f32 %v1767, %v1879
    %v1881 = vpop.f32.mrb[0].mxu0
    %v1882 = vadd.f32 %v1769, %v1881
    %v1883 = vpop.f32.mrb[0].mxu0
    %v1884 = vadd.f32 %v1771, %v1883
    %1885 = vdwg.mxu0
    %1886 = vmatprep.subr.bf16.mxu0 %v1020
    %1887 = vmatpush1.bf16.msra.mxu0 %v1019
    %1888 = vmatprep.subr.bf16.mxu0 %v1024
    %1889 = vmatpush1.bf16.msra.mxu0 %v1023
    %1890 = vmatprep.subr.bf16.mxu0 %v1028
    %1891 = vmatpush1.bf16.msra.mxu0 %v1027
    %1892 = vmatprep.subr.bf16.mxu0 %v1032
    %1893 = vmatpush1.bf16.msra.mxu0 %v1031
    %1894 = vmatprep.subr.bf16.mxu0 %v1036
    %1895 = vmatpush1.bf16.msra.mxu0 %v1035
    %1896 = vmatprep.subr.bf16.mxu0 %v1040
    %1897 = vmatpush1.bf16.msra.mxu0 %v1039
    %1898 = vmatprep.subr.bf16.mxu0 %v1044
    %1899 = vmatpush1.bf16.msra.mxu0 %v1043
    %1900 = vmatprep.subr.bf16.mxu0 %v1048
    %1901 = vmatpush1.bf16.msra.mxu0 %v1047
    %1902 = vmatprep.subr.bf16.mxu0 %v1052
    %1903 = vmatpush1.bf16.msra.mxu0 %v1051
    %1904 = vmatprep.subr.bf16.mxu0 %v1056
    %1905 = vmatpush1.bf16.msra.mxu0 %v1055
    %1906 = vmatprep.subr.bf16.mxu0 %v1060
    %1907 = vmatpush1.bf16.msra.mxu0 %v1059
    %1908 = vmatprep.subr.bf16.mxu0 %v1064
    %1909 = vmatpush1.bf16.msra.mxu0 %v1063
    %1910 = vmatprep.subr.bf16.mxu0 %v1068
    %1911 = vmatpush1.bf16.msra.mxu0 %v1067
    %1912 = vmatprep.subr.bf16.mxu0 %v1072
    %1913 = vmatpush1.bf16.msra.mxu0 %v1071
    %1914 = vmatprep.subr.bf16.mxu0 %v1076
    %1915 = vmatpush1.bf16.msra.mxu0 %v1075
    %1916 = vmatprep.subr.bf16.mxu0 %v1080
    %1917 = vmatpush1.bf16.msra.mxu0 %v1079
    %1918 = vmatprep.mubr.bf16.mxu0 %v156
    %1919 = vmatmul.mubr.bf16.gmra.mrb[0].mxu0 %v155
    %v1920 = vpop.f32.mrb[0].mxu0
    %v1921 = vadd.f32 %v420, %v1920
    %v1922 = vpop.f32.mrb[0].mxu0
    %v1923 = vadd.f32 %v424, %v1922
    %v1924 = vpop.f32.mrb[0].mxu0
    %v1925 = vadd.f32 %v420, %v1924
    %v1926 = vpop.f32.mrb[0].mxu0
    %v1927 = vadd.f32 %v424, %v1926
    %1928 = vmatprep.mubr.bf16.mxu0 %v163
    %1929 = vmatmul.mubr.bf16.gmra.mrb[0].mxu0 %v162
    %v1930 = vpop.f32.mrb[0].mxu0
    %v1931 = vadd.f32 %v420, %v1930
    %v1932 = vpop.f32.mrb[0].mxu0
    %v1933 = vadd.f32 %v424, %v1932
    %v1934 = vpop.f32.mrb[0].mxu0
    %v1935 = vadd.f32 %v420, %v1934
    %v1936 = vpop.f32.mrb[0].mxu0
    %v1937 = vadd.f32 %v424, %v1936
    %1938 = vmatprep.mubr.bf16.mxu0 %v170
    %1939 = vmatmul.mubr.bf16.gmra.mrb[0].mxu0 %v169
    %v1940 = vpop.f32.mrb[0].mxu0
    %v1941 = vadd.f32 %v420, %v1940
    %v1942 = vpop.f32.mrb[0].mxu0
    %v1943 = vadd.f32 %v424, %v1942
    %v1944 = vpop.f32.mrb[0].mxu0
    %v1945 = vadd.f32 %v420, %v1944
    %v1946 = vpop.f32.mrb[0].mxu0
    %v1947 = vadd.f32 %v424, %v1946
    %1948 = vmatprep.mubr.bf16.mxu0 %v177
    %1949 = vmatmul.mubr.bf16.gmra.mrb[0].mxu0 %v176
    %v1950 = vpop.f32.mrb[0].mxu0
    %v1951 = vadd.f32 %v420, %v1950
    %v1952 = vpop.f32.mrb[0].mxu0
    %v1953 = vadd.f32 %v424, %v1952
    %v1954 = vpop.f32.mrb[0].mxu0
    %v1955 = vadd.f32 %v420, %v1954
    %v1956 = vpop.f32.mrb[0].mxu0
    %v1957 = vadd.f32 %v424, %v1956
    %1958 = vmatprep.mubr.bf16.mxu0 %v184
    %1959 = vmatmul.mubr.bf16.gmra.mrb[0].mxu0 %v183
    %v1960 = vpop.f32.mrb[0].mxu0
    %v1961 = vadd.f32 %v420, %v1960
    %v1962 = vpop.f32.mrb[0].mxu0
    %v1963 = vadd.f32 %v424, %v1962
    %v1964 = vpop.f32.mrb[0].mxu0
    %v1965 = vadd.f32 %v420, %v1964
    %v1966 = vpop.f32.mrb[0].mxu0
    %v1967 = vadd.f32 %v424, %v1966
    %1968 = vmatprep.mubr.bf16.mxu0 %v191
    %1969 = vmatmul.mubr.bf16.gmra.mrb[0].mxu0 %v190
    %v1970 = vpop.f32.mrb[0].mxu0
    %v1971 = vadd.f32 %v420, %v1970
    %v1972 = vpop.f32.mrb[0].mxu0
    %v1973 = vadd.f32 %v424, %v1972
    %v1974 = vpop.f32.mrb[0].mxu0
    %v1975 = vadd.f32 %v420, %v1974
    %v1976 = vpop.f32.mrb[0].mxu0
    %v1977 = vadd.f32 %v424, %v1976
    %1978 = vmatprep.mubr.bf16.mxu0 %v198
    %1979 = vmatmul.mubr.bf16.gmra.mrb[0].mxu0 %v197
    %v1980 = vpop.f32.mrb[0].mxu0
    %v1981 = vadd.f32 %v420, %v1980
    %v1982 = vpop.f32.mrb[0].mxu0
    %v1983 = vadd.f32 %v424, %v1982
    %v1984 = vpop.f32.mrb[0].mxu0
    %v1985 = vadd.f32 %v420, %v1984
    %v1986 = vpop.f32.mrb[0].mxu0
    %v1987 = vadd.f32 %v424, %v1986
    %1988 = vmatprep.mubr.bf16.mxu0 %v205
    %1989 = vmatmul.mubr.bf16.gmra.mrb[0].mxu0 %v204
    %v1990 = vpop.f32.mrb[0].mxu0
    %v1991 = vadd.f32 %v420, %v1990
    %v1992 = vpop.f32.mrb[0].mxu0
    %v1993 = vadd.f32 %v424, %v1992
    %v1994 = vpop.f32.mrb[0].mxu0
    %v1995 = vadd.f32 %v420, %v1994
    %v1996 = vpop.f32.mrb[0].mxu0
    %v1997 = vadd.f32 %v424, %v1996
    %1998 = vdwg.mxu0
    %1999 = vmatprep.subr.bf16.mxu0 %v1084
    %2000 = vmatpush1.bf16.msra.mxu0 %v1083
    %2001 = vmatprep.subr.bf16.mxu0 %v1088
    %2002 = vmatpush1.bf16.msra.mxu0 %v1087
    %2003 = vmatprep.subr.bf16.mxu0 %v1092
    %2004 = vmatpush1.bf16.msra.mxu0 %v1091
    %2005 = vmatprep.subr.bf16.mxu0 %v1096
    %2006 = vmatpush1.bf16.msra.mxu0 %v1095
    %2007 = vmatprep.subr.bf16.mxu0 %v1100
    %2008 = vmatpush1.bf16.msra.mxu0 %v1099
    %2009 = vmatprep.subr.bf16.mxu0 %v1104
    %2010 = vmatpush1.bf16.msra.mxu0 %v1103
    %2011 = vmatprep.subr.bf16.mxu0 %v1108
    %2012 = vmatpush1.bf16.msra.mxu0 %v1107
    %2013 = vmatprep.subr.bf16.mxu0 %v1112
    %2014 = vmatpush1.bf16.msra.mxu0 %v1111
    %2015 = vmatprep.subr.bf16.mxu0 %v1116
    %2016 = vmatpush1.bf16.msra.mxu0 %v1115
    %2017 = vmatprep.subr.bf16.mxu0 %v1120
    %2018 = vmatpush1.bf16.msra.mxu0 %v1119
    %2019 = vmatprep.subr.bf16.mxu0 %v1124
    %2020 = vmatpush1.bf16.msra.mxu0 %v1123
    %2021 = vmatprep.subr.bf16.mxu0 %v1128
    %2022 = vmatpush1.bf16.msra.mxu0 %v1127
    %2023 = vmatprep.subr.bf16.mxu0 %v1132
    %2024 = vmatpush1.bf16.msra.mxu0 %v1131
    %2025 = vmatprep.subr.bf16.mxu0 %v1136
    %2026 = vmatpush1.bf16.msra.mxu0 %v1135
    %2027 = vmatprep.subr.bf16.mxu0 %v1140
    %2028 = vmatpush1.bf16.msra.mxu0 %v1139
    %2029 = vmatprep.subr.bf16.mxu0 %v1144
    %2030 = vmatpush1.bf16.msra.mxu0 %v1143
    %2031 = vmatprep.mubr.bf16.mxu0 %v158
    %2032 = vmatmul.mubr.bf16.gmra.mrb[0].mxu0 %v157
    %v2033 = vpop.f32.mrb[0].mxu0
    %v2034 = vadd.f32 %v1921, %v2033
    %v2035 = vpop.f32.mrb[0].mxu0
    %v2036 = vadd.f32 %v1923, %v2035
    %v2037 = vpop.f32.mrb[0].mxu0
    %v2038 = vadd.f32 %v1925, %v2037
    %v2039 = vpop.f32.mrb[0].mxu0
    %v2040 = vadd.f32 %v1927, %v2039
    %2041 = vmatprep.mubr.bf16.mxu0 %v165
    %2042 = vmatmul.mubr.bf16.gmra.mrb[0].mxu0 %v164
    %v2043 = vpop.f32.mrb[0].mxu0
    %v2044 = vadd.f32 %v1931, %v2043
    %v2045 = vpop.f32.mrb[0].mxu0
    %v2046 = vadd.f32 %v1933, %v2045
    %v2047 = vpop.f32.mrb[0].mxu0
    %v2048 = vadd.f32 %v1935, %v2047
    %v2049 = vpop.f32.mrb[0].mxu0
    %v2050 = vadd.f32 %v1937, %v2049
    %2051 = vmatprep.mubr.bf16.mxu0 %v172
    %2052 = vmatmul.mubr.bf16.gmra.mrb[0].mxu0 %v171
    %v2053 = vpop.f32.mrb[0].mxu0
    %v2054 = vadd.f32 %v1941, %v2053
    %v2055 = vpop.f32.mrb[0].mxu0
    %v2056 = vadd.f32 %v1943, %v2055
    %v2057 = vpop.f32.mrb[0].mxu0
    %v2058 = vadd.f32 %v1945, %v2057
    %v2059 = vpop.f32.mrb[0].mxu0
    %v2060 = vadd.f32 %v1947, %v2059
    %2061 = vmatprep.mubr.bf16.mxu0 %v179
    %2062 = vmatmul.mubr.bf16.gmra.mrb[0].mxu0 %v178
    %v2063 = vpop.f32.mrb[0].mxu0
    %v2064 = vadd.f32 %v1951, %v2063
    %v2065 = vpop.f32.mrb[0].mxu0
    %v2066 = vadd.f32 %v1953, %v2065
    %v2067 = vpop.f32.mrb[0].mxu0
    %v2068 = vadd.f32 %v1955, %v2067
    %v2069 = vpop.f32.mrb[0].mxu0
    %v2070 = vadd.f32 %v1957, %v2069
    %2071 = vmatprep.mubr.bf16.mxu0 %v186
    %2072 = vmatmul.mubr.bf16.gmra.mrb[0].mxu0 %v185
    %v2073 = vpop.f32.mrb[0].mxu0
    %v2074 = vadd.f32 %v1961, %v2073
    %v2075 = vpop.f32.mrb[0].mxu0
    %v2076 = vadd.f32 %v1963, %v2075
    %v2077 = vpop.f32.mrb[0].mxu0
    %v2078 = vadd.f32 %v1965, %v2077
    %v2079 = vpop.f32.mrb[0].mxu0
    %v2080 = vadd.f32 %v1967, %v2079
    %2081 = vmatprep.mubr.bf16.mxu0 %v193
    %2082 = vmatmul.mubr.bf16.gmra.mrb[0].mxu0 %v192
    %v2083 = vpop.f32.mrb[0].mxu0
    %v2084 = vadd.f32 %v1971, %v2083
    %v2085 = vpop.f32.mrb[0].mxu0
    %v2086 = vadd.f32 %v1973, %v2085
    %v2087 = vpop.f32.mrb[0].mxu0
    %v2088 = vadd.f32 %v1975, %v2087
    %v2089 = vpop.f32.mrb[0].mxu0
    %v2090 = vadd.f32 %v1977, %v2089
    %2091 = vmatprep.mubr.bf16.mxu0 %v200
    %2092 = vmatmul.mubr.bf16.gmra.mrb[0].mxu0 %v199
    %v2093 = vpop.f32.mrb[0].mxu0
    %v2094 = vadd.f32 %v1981, %v2093
    %v2095 = vpop.f32.mrb[0].mxu0
    %v2096 = vadd.f32 %v1983, %v2095
    %v2097 = vpop.f32.mrb[0].mxu0
    %v2098 = vadd.f32 %v1985, %v2097
    %v2099 = vpop.f32.mrb[0].mxu0
    %v2100 = vadd.f32 %v1987, %v2099
    %2101 = vmatprep.mubr.bf16.mxu0 %v207
    %2102 = vmatmul.mubr.bf16.gmra.mrb[0].mxu0 %v206
    %v2103 = vpop.f32.mrb[0].mxu0
    %v2104 = vadd.f32 %v1991, %v2103
    %v2105 = vpop.f32.mrb[0].mxu0
    %v2106 = vadd.f32 %v1993, %v2105
    %v2107 = vpop.f32.mrb[0].mxu0
    %v2108 = vadd.f32 %v1995, %v2107
    %v2109 = vpop.f32.mrb[0].mxu0
    %v2110 = vadd.f32 %v1997, %v2109
    %2111 = vdwg.mxu0
    %2112 = vmatprep.subr.bf16.mxu0 %v1148
    %2113 = vmatpush1.bf16.msra.mxu0 %v1147
    %2114 = vmatprep.subr.bf16.mxu0 %v1152
    %2115 = vmatpush1.bf16.msra.mxu0 %v1151
    %2116 = vmatprep.subr.bf16.mxu0 %v1156
    %2117 = vmatpush1.bf16.msra.mxu0 %v1155
    %2118 = vmatprep.subr.bf16.mxu0 %v1160
    %2119 = vmatpush1.bf16.msra.mxu0 %v1159
    %2120 = vmatprep.subr.bf16.mxu0 %v1164
    %2121 = vmatpush1.bf16.msra.mxu0 %v1163
    %2122 = vmatprep.subr.bf16.mxu0 %v1168
    %2123 = vmatpush1.bf16.msra.mxu0 %v1167
    %2124 = vmatprep.subr.bf16.mxu0 %v1172
    %2125 = vmatpush1.bf16.msra.mxu0 %v1171
    %2126 = vmatprep.subr.bf16.mxu0 %v1176
    %2127 = vmatpush1.bf16.msra.mxu0 %v1175
    %2128 = vmatprep.subr.bf16.mxu0 %v1180
    %2129 = vmatpush1.bf16.msra.mxu0 %v1179
    %2130 = vmatprep.subr.bf16.mxu0 %v1184
    %2131 = vmatpush1.bf16.msra.mxu0 %v1183
    %2132 = vmatprep.subr.bf16.mxu0 %v1188
    %2133 = vmatpush1.bf16.msra.mxu0 %v1187
    %2134 = vmatprep.subr.bf16.mxu0 %v1192
    %2135 = vmatpush1.bf16.msra.mxu0 %v1191
    %2136 = vmatprep.subr.bf16.mxu0 %v1196
    %2137 = vmatpush1.bf16.msra.mxu0 %v1195
    %2138 = vmatprep.subr.bf16.mxu0 %v1200
    %2139 = vmatpush1.bf16.msra.mxu0 %v1199
    %2140 = vmatprep.subr.bf16.mxu0 %v1204
    %2141 = vmatpush1.bf16.msra.mxu0 %v1203
    %2142 = vmatprep.subr.bf16.mxu0 %v1208
    %2143 = vmatpush1.bf16.msra.mxu0 %v1207
    %2144 = vmatprep.mubr.bf16.mxu0 %v160
    %2145 = vmatmul.mubr.bf16.gmra.mrb[0].mxu0 %v159
    %v2146 = vpop.f32.mrb[0].mxu0
    %v2147 = vadd.f32 %v2034, %v2146
    %v2148 = vpop.f32.mrb[0].mxu0
    %v2149 = vadd.f32 %v2036, %v2148
    %v2150 = vpop.f32.mrb[0].mxu0
    %v2151 = vadd.f32 %v2038, %v2150
    %v2152 = vpop.f32.mrb[0].mxu0
    %v2153 = vadd.f32 %v2040, %v2152
    %2154 = vmatprep.mubr.bf16.mxu0 %v167
    %2155 = vmatmul.mubr.bf16.gmra.mrb[0].mxu0 %v166
    %v2156 = vpop.f32.mrb[0].mxu0
    %v2157 = vadd.f32 %v2044, %v2156
    %v2158 = vpop.f32.mrb[0].mxu0
    %v2159 = vadd.f32 %v2046, %v2158
    %v2160 = vpop.f32.mrb[0].mxu0
    %v2161 = vadd.f32 %v2048, %v2160
    %v2162 = vpop.f32.mrb[0].mxu0
    %v2163 = vadd.f32 %v2050, %v2162
    %2164 = vmatprep.mubr.bf16.mxu0 %v174
    %2165 = vmatmul.mubr.bf16.gmra.mrb[0].mxu0 %v173
    %v2166 = vpop.f32.mrb[0].mxu0
    %v2167 = vadd.f32 %v2054, %v2166
    %v2168 = vpop.f32.mrb[0].mxu0
    %v2169 = vadd.f32 %v2056, %v2168
    %v2170 = vpop.f32.mrb[0].mxu0
    %v2171 = vadd.f32 %v2058, %v2170
    %v2172 = vpop.f32.mrb[0].mxu0
    %v2173 = vadd.f32 %v2060, %v2172
    %2174 = vmatprep.mubr.bf16.mxu0 %v181
    %2175 = vmatmul.mubr.bf16.gmra.mrb[0].mxu0 %v180
    %v2176 = vpop.f32.mrb[0].mxu0
    %v2177 = vadd.f32 %v2064, %v2176
    %v2178 = vpop.f32.mrb[0].mxu0
    %v2179 = vadd.f32 %v2066, %v2178
    %v2180 = vpop.f32.mrb[0].mxu0
    %v2181 = vadd.f32 %v2068, %v2180
    %v2182 = vpop.f32.mrb[0].mxu0
    %v2183 = vadd.f32 %v2070, %v2182
    %2184 = vmatprep.mubr.bf16.mxu0 %v188
    %2185 = vmatmul.mubr.bf16.gmra.mrb[0].mxu0 %v187
    %v2186 = vpop.f32.mrb[0].mxu0
    %v2187 = vadd.f32 %v2074, %v2186
    %v2188 = vpop.f32.mrb[0].mxu0
    %v2189 = vadd.f32 %v2076, %v2188
    %v2190 = vpop.f32.mrb[0].mxu0
    %v2191 = vadd.f32 %v2078, %v2190
    %v2192 = vpop.f32.mrb[0].mxu0
    %v2193 = vadd.f32 %v2080, %v2192
    %2194 = vmatprep.mubr.bf16.mxu0 %v195
    %2195 = vmatmul.mubr.bf16.gmra.mrb[0].mxu0 %v194
    %v2196 = vpop.f32.mrb[0].mxu0
    %v2197 = vadd.f32 %v2084, %v2196
    %v2198 = vpop.f32.mrb[0].mxu0
    %v2199 = vadd.f32 %v2086, %v2198
    %v2200 = vpop.f32.mrb[0].mxu0
    %v2201 = vadd.f32 %v2088, %v2200
    %v2202 = vpop.f32.mrb[0].mxu0
    %v2203 = vadd.f32 %v2090, %v2202
    %2204 = vmatprep.mubr.bf16.mxu0 %v202
    %2205 = vmatmul.mubr.bf16.gmra.mrb[0].mxu0 %v201
    %v2206 = vpop.f32.mrb[0].mxu0
    %v2207 = vadd.f32 %v2094, %v2206
    %v2208 = vpop.f32.mrb[0].mxu0
    %v2209 = vadd.f32 %v2096, %v2208
    %v2210 = vpop.f32.mrb[0].mxu0
    %v2211 = vadd.f32 %v2098, %v2210
    %v2212 = vpop.f32.mrb[0].mxu0
    %v2213 = vadd.f32 %v2100, %v2212
    %2214 = vmatprep.mubr.bf16.mxu0 %v209
    %2215 = vmatmul.mubr.bf16.gmra.mrb[0].mxu0 %v208
    %v2216 = vpop.f32.mrb[0].mxu0
    %v2217 = vadd.f32 %v2104, %v2216
    %v2218 = vpop.f32.mrb[0].mxu0
    %v2219 = vadd.f32 %v2106, %v2218
    %v2220 = vpop.f32.mrb[0].mxu0
    %v2221 = vadd.f32 %v2108, %v2220
    %v2222 = vpop.f32.mrb[0].mxu0
    %v2223 = vadd.f32 %v2110, %v2222
    %2224 = vdwg.mxu0
    %2225 = vmatprep.subr.bf16.mxu0 %v1212
    %2226 = vmatpush1.bf16.msra.mxu0 %v1211
    %2227 = vmatprep.subr.bf16.mxu0 0
    %2228 = vmatpush1.bf16.msra.mxu0 0
    %2229 = vmatprep.subr.bf16.mxu0 0
    %2230 = vmatpush1.bf16.msra.mxu0 0
    %2231 = vmatprep.subr.bf16.mxu0 0
    %2232 = vmatpush1.bf16.msra.mxu0 0
    %2233 = vmatprep.subr.bf16.mxu0 0
    %2234 = vmatpush1.bf16.msra.mxu0 0
    %2235 = vmatprep.subr.bf16.mxu0 0
    %2236 = vmatpush1.bf16.msra.mxu0 0
    %2237 = vmatprep.subr.bf16.mxu0 0
    %2238 = vmatpush1.bf16.msra.mxu0 0
    %2239 = vmatprep.subr.bf16.mxu0 0
    %2240 = vmatpush1.bf16.msra.mxu0 0
    %2241 = vmatprep.subr.bf16.mxu0 0
    %2242 = vmatpush1.bf16.msra.mxu0 0
    %2243 = vmatprep.subr.bf16.mxu0 0
    %2244 = vmatpush1.bf16.msra.mxu0 0
    %2245 = vmatprep.subr.bf16.mxu0 0
    %2246 = vmatpush1.bf16.msra.mxu0 0
    %2247 = vmatprep.subr.bf16.mxu0 0
    %2248 = vmatpush1.bf16.msra.mxu0 0
    %2249 = vmatprep.subr.bf16.mxu0 0
    %2250 = vmatpush1.bf16.msra.mxu0 0
    %2251 = vmatprep.subr.bf16.mxu0 0
    %2252 = vmatpush1.bf16.msra.mxu0 0
    %2253 = vmatprep.subr.bf16.mxu0 0
    %2254 = vmatpush1.bf16.msra.mxu0 0
    %2255 = vmatprep.subr.bf16.mxu0 0
    %2256 = vmatpush1.bf16.msra.mxu0 0
    %2257 = vmatprep.mubr.bf16.mxu0 0
    %2258 = vmatmul.mubr.bf16.gmra.mrb[0].mxu0 %v1411
    %v2259 = vpop.f32.mrb[0].mxu0
    %v2260 = vadd.f32 %v2147, %v2259
    %v2261 = vpop.f32.mrb[0].mxu0
    %v2262 = vadd.f32 %v2149, %v2261
    %v2263 = vpop.f32.mrb[0].mxu0
    %v2264 = vadd.f32 %v2151, %v2263
    %v2265 = vpop.f32.mrb[0].mxu0
    %v2266 = vadd.f32 %v2153, %v2265
    %2267 = vmatprep.mubr.bf16.mxu0 0
    %2268 = vmatmul.mubr.bf16.gmra.mrb[0].mxu0 %v1414
    %v2269 = vpop.f32.mrb[0].mxu0
    %v2270 = vadd.f32 %v2157, %v2269
    %v2271 = vpop.f32.mrb[0].mxu0
    %v2272 = vadd.f32 %v2159, %v2271
    %v2273 = vpop.f32.mrb[0].mxu0
    %v2274 = vadd.f32 %v2161, %v2273
    %v2275 = vpop.f32.mrb[0].mxu0
    %v2276 = vadd.f32 %v2163, %v2275
    %2277 = vmatprep.mubr.bf16.mxu0 0
    %2278 = vmatmul.mubr.bf16.gmra.mrb[0].mxu0 %v1417
    %v2279 = vpop.f32.mrb[0].mxu0
    %v2280 = vadd.f32 %v2167, %v2279
    %v2281 = vpop.f32.mrb[0].mxu0
    %v2282 = vadd.f32 %v2169, %v2281
    %v2283 = vpop.f32.mrb[0].mxu0
    %v2284 = vadd.f32 %v2171, %v2283
    %v2285 = vpop.f32.mrb[0].mxu0
    %v2286 = vadd.f32 %v2173, %v2285
    %2287 = vmatprep.mubr.bf16.mxu0 0
    %2288 = vmatmul.mubr.bf16.gmra.mrb[0].mxu0 %v1420
    %v2289 = vpop.f32.mrb[0].mxu0
    %v2290 = vadd.f32 %v2177, %v2289
    %v2291 = vpop.f32.mrb[0].mxu0
    %v2292 = vadd.f32 %v2179, %v2291
    %v2293 = vpop.f32.mrb[0].mxu0
    %v2294 = vadd.f32 %v2181, %v2293
    %v2295 = vpop.f32.mrb[0].mxu0
    %v2296 = vadd.f32 %v2183, %v2295
    %2297 = vmatprep.mubr.bf16.mxu0 0
    %2298 = vmatmul.mubr.bf16.gmra.mrb[0].mxu0 %v1423
    %v2299 = vpop.f32.mrb[0].mxu0
    %v2300 = vadd.f32 %v2187, %v2299
    %v2301 = vpop.f32.mrb[0].mxu0
    %v2302 = vadd.f32 %v2189, %v2301
    %v2303 = vpop.f32.mrb[0].mxu0
    %v2304 = vadd.f32 %v2191, %v2303
    %v2305 = vpop.f32.mrb[0].mxu0
    %v2306 = vadd.f32 %v2193, %v2305
    %2307 = vmatprep.mubr.bf16.mxu0 0
    %2308 = vmatmul.mubr.bf16.gmra.mrb[0].mxu0 %v1426
    %v2309 = vpop.f32.mrb[0].mxu0
    %v2310 = vadd.f32 %v2197, %v2309
    %v2311 = vpop.f32.mrb[0].mxu0
    %v2312 = vadd.f32 %v2199, %v2311
    %v2313 = vpop.f32.mrb[0].mxu0
    %v2314 = vadd.f32 %v2201, %v2313
    %v2315 = vpop.f32.mrb[0].mxu0
    %v2316 = vadd.f32 %v2203, %v2315
    %2317 = vmatprep.mubr.bf16.mxu0 0
    %2318 = vmatmul.mubr.bf16.gmra.mrb[0].mxu0 %v1429
    %v2319 = vpop.f32.mrb[0].mxu0
    %v2320 = vadd.f32 %v2207, %v2319
    %v2321 = vpop.f32.mrb[0].mxu0
    %v2322 = vadd.f32 %v2209, %v2321
    %v2323 = vpop.f32.mrb[0].mxu0
    %v2324 = vadd.f32 %v2211, %v2323
    %v2325 = vpop.f32.mrb[0].mxu0
    %v2326 = vadd.f32 %v2213, %v2325
    %2327 = vmatprep.mubr.bf16.mxu0 0
    %2328 = vmatmul.mubr.bf16.gmra.mrb[0].mxu0 %v1432
    %v2329 = vpop.f32.mrb[0].mxu0
    %v2330 = vadd.f32 %v2217, %v2329
    %v2331 = vpop.f32.mrb[0].mxu0
    %v2332 = vadd.f32 %v2219, %v2331
    %v2333 = vpop.f32.mrb[0].mxu0
    %v2334 = vadd.f32 %v2221, %v2333
    %v2335 = vpop.f32.mrb[0].mxu0
    %v2336 = vadd.f32 %v2223, %v2335
    %2337 = vdwg.mxu0
    %vm2338 = vcmp.gt.f32.partialorder %v1808, 0.0
    %vm2339 = vcmp.gt.f32.partialorder %v1810, 0.0
    %vm2340 = vcmp.gt.f32.partialorder %v2260, 0.0
    %vm2341 = vcmp.gt.f32.partialorder %v2262, 0.0
    %vm2342 = vcmp.gt.f32.partialorder %v1812, 0.0
    %vm2343 = vcmp.gt.f32.partialorder %v1814, 0.0
    %vm2344 = vcmp.gt.f32.partialorder %v2264, 0.0
    %vm2345 = vcmp.gt.f32.partialorder %v2266, 0.0
    %vm2346 = vcmp.gt.f32.partialorder %v1818, 0.0
    %vm2347 = vcmp.gt.f32.partialorder %v1820, 0.0
    %vm2348 = vcmp.gt.f32.partialorder %v2270, 0.0
    %vm2349 = vcmp.gt.f32.partialorder %v2272, 0.0
    %vm2350 = vcmp.gt.f32.partialorder %v1822, 0.0
    %vm2351 = vcmp.gt.f32.partialorder %v1824, 0.0
    %vm2352 = vcmp.gt.f32.partialorder %v2274, 0.0
    %vm2353 = vcmp.gt.f32.partialorder %v2276, 0.0
    %vm2354 = vcmp.gt.f32.partialorder %v1828, 0.0
    %vm2355 = vcmp.gt.f32.partialorder %v1830, 0.0
    %vm2356 = vcmp.gt.f32.partialorder %v2280, 0.0
    %vm2357 = vcmp.gt.f32.partialorder %v2282, 0.0
    %vm2358 = vcmp.gt.f32.partialorder %v1832, 0.0
    %vm2359 = vcmp.gt.f32.partialorder %v1834, 0.0
    %vm2360 = vcmp.gt.f32.partialorder %v2284, 0.0
    %vm2361 = vcmp.gt.f32.partialorder %v2286, 0.0
    %vm2362 = vcmp.gt.f32.partialorder %v1838, 0.0
    %vm2363 = vcmp.gt.f32.partialorder %v1840, 0.0
    %vm2364 = vcmp.gt.f32.partialorder %v2290, 0.0
    %vm2365 = vcmp.gt.f32.partialorder %v2292, 0.0
    %vm2366 = vcmp.gt.f32.partialorder %v1842, 0.0
    %vm2367 = vcmp.gt.f32.partialorder %v1844, 0.0
    %vm2368 = vcmp.gt.f32.partialorder %v2294, 0.0
    %vm2369 = vcmp.gt.f32.partialorder %v2296, 0.0
    %vm2370 = vcmp.gt.f32.partialorder %v1848, 0.0
    %vm2371 = vcmp.gt.f32.partialorder %v1850, 0.0
    %vm2372 = vcmp.gt.f32.partialorder %v2300, 0.0
    %vm2373 = vcmp.gt.f32.partialorder %v2302, 0.0
    %vm2374 = vcmp.gt.f32.partialorder %v1852, 0.0
    %vm2375 = vcmp.gt.f32.partialorder %v1854, 0.0
    %vm2376 = vcmp.gt.f32.partialorder %v2304, 0.0
    %vm2377 = vcmp.gt.f32.partialorder %v2306, 0.0
    %vm2378 = vcmp.gt.f32.partialorder %v1858, 0.0
    %vm2379 = vcmp.gt.f32.partialorder %v1860, 0.0
    %vm2380 = vcmp.gt.f32.partialorder %v2310, 0.0
    %vm2381 = vcmp.gt.f32.partialorder %v2312, 0.0
    %vm2382 = vcmp.gt.f32.partialorder %v1862, 0.0
    %vm2383 = vcmp.gt.f32.partialorder %v1864, 0.0
    %vm2384 = vcmp.gt.f32.partialorder %v2314, 0.0
    %vm2385 = vcmp.gt.f32.partialorder %v2316, 0.0
    %vm2386 = vcmp.gt.f32.partialorder %v1868, 0.0
    %vm2387 = vcmp.gt.f32.partialorder %v1870, 0.0
    %vm2388 = vcmp.gt.f32.partialorder %v2320, 0.0
    %vm2389 = vcmp.gt.f32.partialorder %v2322, 0.0
    %vm2390 = vcmp.gt.f32.partialorder %v1872, 0.0
    %vm2391 = vcmp.gt.f32.partialorder %v1874, 0.0
    %vm2392 = vcmp.gt.f32.partialorder %v2324, 0.0
    %vm2393 = vcmp.gt.f32.partialorder %v2326, 0.0
    %vm2394 = vcmp.gt.f32.partialorder %v1878, 0.0
    %vm2395 = vcmp.gt.f32.partialorder %v1880, 0.0
    %vm2396 = vcmp.gt.f32.partialorder %v2330, 0.0
    %vm2397 = vcmp.gt.f32.partialorder %v2332, 0.0
    %vm2398 = vcmp.gt.f32.partialorder %v1882, 0.0
    %vm2399 = vcmp.gt.f32.partialorder %v1884, 0.0
    %vm2400 = vcmp.gt.f32.partialorder %v2334, 0.0
    %vm2401 = vcmp.gt.f32.partialorder %v2336, 0.0
    %v2402 = vmul.f32 %v1808, 0.2
    %v2403 = vmul.f32 %v1810, 0.2
    %v2404 = vmul.f32 %v2260, 0.2
    %v2405 = vmul.f32 %v2262, 0.2
    %v2406 = vmul.f32 %v1812, 0.2
    %v2407 = vmul.f32 %v1814, 0.2
    %v2408 = vmul.f32 %v2264, 0.2
    %v2409 = vmul.f32 %v2266, 0.2
    %v2410 = vmul.f32 %v1818, 0.2
    %v2411 = vmul.f32 %v1820, 0.2
    %v2412 = vmul.f32 %v2270, 0.2
    %v2413 = vmul.f32 %v2272, 0.2
    %v2414 = vmul.f32 %v1822, 0.2
    %v2415 = vmul.f32 %v1824, 0.2
    %v2416 = vmul.f32 %v2274, 0.2
    %v2417 = vmul.f32 %v2276, 0.2
    %v2418 = vmul.f32 %v1828, 0.2
    %v2419 = vmul.f32 %v1830, 0.2
    %v2420 = vmul.f32 %v2280, 0.2
    %v2421 = vmul.f32 %v2282, 0.2
    %v2422 = vmul.f32 %v1832, 0.2
    %v2423 = vmul.f32 %v1834, 0.2
    %v2424 = vmul.f32 %v2284, 0.2
    %v2425 = vmul.f32 %v2286, 0.2
    %v2426 = vmul.f32 %v1838, 0.2
    %v2427 = vmul.f32 %v1840, 0.2
    %v2428 = vmul.f32 %v2290, 0.2
    %v2429 = vmul.f32 %v2292, 0.2
    %v2430 = vmul.f32 %v1842, 0.2
    %v2431 = vmul.f32 %v1844, 0.2
    %v2432 = vmul.f32 %v2294, 0.2
    %v2433 = vmul.f32 %v2296, 0.2
    %v2434 = vmul.f32 %v1848, 0.2
    %v2435 = vmul.f32 %v1850, 0.2
    %v2436 = vmul.f32 %v2300, 0.2
    %v2437 = vmul.f32 %v2302, 0.2
    %v2438 = vmul.f32 %v1852, 0.2
    %v2439 = vmul.f32 %v1854, 0.2
    %v2440 = vmul.f32 %v2304, 0.2
    %v2441 = vmul.f32 %v2306, 0.2
    %v2442 = vmul.f32 %v1858, 0.2
    %v2443 = vmul.f32 %v1860, 0.2
    %v2444 = vmul.f32 %v2310, 0.2
    %v2445 = vmul.f32 %v2312, 0.2
    %v2446 = vmul.f32 %v1862, 0.2
    %v2447 = vmul.f32 %v1864, 0.2
    %v2448 = vmul.f32 %v2314, 0.2
    %v2449 = vmul.f32 %v2316, 0.2
    %v2450 = vmul.f32 %v1868, 0.2
    %v2451 = vmul.f32 %v1870, 0.2
    %v2452 = vmul.f32 %v2320, 0.2
    %v2453 = vmul.f32 %v2322, 0.2
    %v2454 = vmul.f32 %v1872, 0.2
    %v2455 = vmul.f32 %v1874, 0.2
    %v2456 = vmul.f32 %v2324, 0.2
    %v2457 = vmul.f32 %v2326, 0.2
    %v2458 = vmul.f32 %v1878, 0.2
    %v2459 = vmul.f32 %v1880, 0.2
    %v2460 = vmul.f32 %v2330, 0.2
    %v2461 = vmul.f32 %v2332, 0.2
    %v2462 = vmul.f32 %v1882, 0.2
    %v2463 = vmul.f32 %v1884, 0.2
    %v2464 = vmul.f32 %v2334, 0.2
    %v2465 = vmul.f32 %v2336, 0.2
    %v2466 = vsel %vm2338, %v1808, %v2402
    %v2467 = vsel %vm2339, %v1810, %v2403
    %v2468 = vsel %vm2340, %v2260, %v2404
    %v2469 = vsel %vm2341, %v2262, %v2405
    %v2470 = vsel %vm2342, %v1812, %v2406
    %v2471 = vsel %vm2343, %v1814, %v2407
    %v2472 = vsel %vm2344, %v2264, %v2408
    %v2473 = vsel %vm2345, %v2266, %v2409
    %v2474 = vsel %vm2346, %v1818, %v2410
    %v2475 = vsel %vm2347, %v1820, %v2411
    %v2476 = vsel %vm2348, %v2270, %v2412
    %v2477 = vsel %vm2349, %v2272, %v2413
    %v2478 = vsel %vm2350, %v1822, %v2414
    %v2479 = vsel %vm2351, %v1824, %v2415
    %v2480 = vsel %vm2352, %v2274, %v2416
    %v2481 = vsel %vm2353, %v2276, %v2417
    %v2482 = vsel %vm2354, %v1828, %v2418
    %v2483 = vsel %vm2355, %v1830, %v2419
    %v2484 = vsel %vm2356, %v2280, %v2420
    %v2485 = vsel %vm2357, %v2282, %v2421
    %v2486 = vsel %vm2358, %v1832, %v2422
    %v2487 = vsel %vm2359, %v1834, %v2423
    %v2488 = vsel %vm2360, %v2284, %v2424
    %v2489 = vsel %vm2361, %v2286, %v2425
    %v2490 = vsel %vm2362, %v1838, %v2426
    %v2491 = vsel %vm2363, %v1840, %v2427
    %v2492 = vsel %vm2364, %v2290, %v2428
    %v2493 = vsel %vm2365, %v2292, %v2429
    %v2494 = vsel %vm2366, %v1842, %v2430
    %v2495 = vsel %vm2367, %v1844, %v2431
    %v2496 = vsel %vm2368, %v2294, %v2432
    %v2497 = vsel %vm2369, %v2296, %v2433
    %v2498 = vsel %vm2370, %v1848, %v2434
    %v2499 = vsel %vm2371, %v1850, %v2435
    %v2500 = vsel %vm2372, %v2300, %v2436
    %v2501 = vsel %vm2373, %v2302, %v2437
    %v2502 = vsel %vm2374, %v1852, %v2438
    %v2503 = vsel %vm2375, %v1854, %v2439
    %v2504 = vsel %vm2376, %v2304, %v2440
    %v2505 = vsel %vm2377, %v2306, %v2441
    %v2506 = vsel %vm2378, %v1858, %v2442
    %v2507 = vsel %vm2379, %v1860, %v2443
    %v2508 = vsel %vm2380, %v2310, %v2444
    %v2509 = vsel %vm2381, %v2312, %v2445
    %v2510 = vsel %vm2382, %v1862, %v2446
    %v2511 = vsel %vm2383, %v1864, %v2447
    %v2512 = vsel %vm2384, %v2314, %v2448
    %v2513 = vsel %vm2385, %v2316, %v2449
    %v2514 = vsel %vm2386, %v1868, %v2450
    %v2515 = vsel %vm2387, %v1870, %v2451
    %v2516 = vsel %vm2388, %v2320, %v2452
    %v2517 = vsel %vm2389, %v2322, %v2453
    %v2518 = vsel %vm2390, %v1872, %v2454
    %v2519 = vsel %vm2391, %v1874, %v2455
    %v2520 = vsel %vm2392, %v2324, %v2456
    %v2521 = vsel %vm2393, %v2326, %v2457
    %v2522 = vsel %vm2394, %v1878, %v2458
    %v2523 = vsel %vm2395, %v1880, %v2459
    %v2524 = vsel %vm2396, %v2330, %v2460
    %v2525 = vsel %vm2397, %v2332, %v2461
    %v2526 = vsel %vm2398, %v1882, %v2462
    %v2527 = vsel %vm2399, %v1884, %v2463
    %v2528 = vsel %vm2400, %v2334, %v2464
    %v2529 = vsel %vm2401, %v2336, %v2465
    %v2530 = vpack.c.bf16 %v2470, %v2466
    %v2531 = vpack.c.bf16 %v2471, %v2467
    %v2532 = vpack.c.bf16 %v2472, %v2468
    %v2533 = vpack.c.bf16 %v2473, %v2469
    %v2534 = vpack.c.bf16 %v2478, %v2474
    %v2535 = vpack.c.bf16 %v2479, %v2475
    %v2536 = vpack.c.bf16 %v2480, %v2476
    %v2537 = vpack.c.bf16 %v2481, %v2477
    %v2538 = vpack.c.bf16 %v2486, %v2482
    %v2539 = vpack.c.bf16 %v2487, %v2483
    %v2540 = vpack.c.bf16 %v2488, %v2484
    %v2541 = vpack.c.bf16 %v2489, %v2485
    %v2542 = vpack.c.bf16 %v2494, %v2490
    %v2543 = vpack.c.bf16 %v2495, %v2491
    %v2544 = vpack.c.bf16 %v2496, %v2492
    %v2545 = vpack.c.bf16 %v2497, %v2493
    %v2546 = vpack.c.bf16 %v2502, %v2498
    %v2547 = vpack.c.bf16 %v2503, %v2499
    %v2548 = vpack.c.bf16 %v2504, %v2500
    %v2549 = vpack.c.bf16 %v2505, %v2501
    %v2550 = vpack.c.bf16 %v2510, %v2506
    %v2551 = vpack.c.bf16 %v2511, %v2507
    %v2552 = vpack.c.bf16 %v2512, %v2508
    %v2553 = vpack.c.bf16 %v2513, %v2509
    %v2554 = vpack.c.bf16 %v2518, %v2514
    %v2555 = vpack.c.bf16 %v2519, %v2515
    %v2556 = vpack.c.bf16 %v2520, %v2516
    %v2557 = vpack.c.bf16 %v2521, %v2517
    %v2558 = vpack.c.bf16 %v2526, %v2522
    %v2559 = vpack.c.bf16 %v2527, %v2523
    %v2560 = vpack.c.bf16 %v2528, %v2524
    %v2561 = vpack.c.bf16 %v2529, %v2525
    %v2562 = vld [vmem:[#allocation3] sm:$0xff]
    %v2563 = vld [vmem:[#allocation3 + $0x8] sm:$0xff]
    %v2564 = vld [vmem:[#allocation3 + $0x10] sm:$0xff]
    %v2565 = vld [vmem:[#allocation3 + $0x18] sm:$0xff]
    %v2566 = vld [vmem:[#allocation3 + $0x20] sm:$0xff]
    %v2567 = vld [vmem:[#allocation3 + $0x28] sm:$0xff]
    %v2568 = vld [vmem:[#allocation3 + $0x30] sm:$0xff]
    %v2569 = vld [vmem:[#allocation3 + $0x38] sm:$0xff]
    %v2570 = vld [vmem:[#allocation3 + $0x40] sm:$0xff]
    %v2571 = vld [vmem:[#allocation3 + $0x48] sm:$0xff]
    %v2572 = vld [vmem:[#allocation3 + $0x50] sm:$0xff]
    %v2573 = vld [vmem:[#allocation3 + $0x58] sm:$0xff]
    %v2574 = vld [vmem:[#allocation3 + $0x60] sm:$0xff]
    %v2575 = vld [vmem:[#allocation3 + $0x68] sm:$0xff]
    %v2576 = vld [vmem:[#allocation3 + $0x70] sm:$0xff]
    %v2577 = vld [vmem:[#allocation3 + $0x78] sm:$0xff]
    %v2578 = vld [vmem:[#allocation3 + $0x80] sm:$0xff]
    %v2579 = vld [vmem:[#allocation3 + $0x88] sm:$0xff]
    %v2580 = vld [vmem:[#allocation3 + $0x90] sm:$0xff]
    %v2581 = vld [vmem:[#allocation3 + $0x98] sm:$0xff]
    %v2582 = vld [vmem:[#allocation3 + $0xa0] sm:$0xff]
    %v2583 = vld [vmem:[#allocation3 + $0xa8] sm:$0xff]
    %v2584 = vld [vmem:[#allocation3 + $0xb0] sm:$0xff]
    %v2585 = vld [vmem:[#allocation3 + $0xb8] sm:$0xff]
    %v2586 = vld [vmem:[#allocation3 + $0xc0] sm:$0xff]
    %v2587 = vld [vmem:[#allocation3 + $0xc8] sm:$0xff]
    %v2588 = vld [vmem:[#allocation3 + $0xd0] sm:$0xff]
    %v2589 = vld [vmem:[#allocation3 + $0xd8] sm:$0xff]
    %v2590 = vld [vmem:[#allocation3 + $0xe0] sm:$0xff]
    %v2591 = vld [vmem:[#allocation3 + $0xe8] sm:$0xff]
    %v2592 = vld [vmem:[#allocation3 + $0xf0] sm:$0xff]
    %v2593 = vld [vmem:[#allocation3 + $0xf8] sm:$0xff]
    %v2594 = vld [vmem:[#allocation3 + $0x100] sm:$0xff]
    %v2595 = vld [vmem:[#allocation3 + $0x108] sm:$0xff]
    %v2596 = vld [vmem:[#allocation3 + $0x110] sm:$0xff]
    %v2597 = vld [vmem:[#allocation3 + $0x118] sm:$0xff]
    %v2598 = vld [vmem:[#allocation3 + $0x120] sm:$0xff]
    %v2599 = vld [vmem:[#allocation3 + $0x128] sm:$0xff]
    %v2600 = vld [vmem:[#allocation3 + $0x130] sm:$0xff]
    %v2601 = vld [vmem:[#allocation3 + $0x138] sm:$0xff]
    %v2602 = vld [vmem:[#allocation3 + $0x140] sm:$0xff]
    %v2603 = vld [vmem:[#allocation3 + $0x148] sm:$0xff]
    %v2604 = vld [vmem:[#allocation3 + $0x150] sm:$0xff]
    %v2605 = vld [vmem:[#allocation3 + $0x158] sm:$0xff]
    %v2606 = vld [vmem:[#allocation3 + $0x160] sm:$0xff]
    %v2607 = vld [vmem:[#allocation3 + $0x168] sm:$0xff]
    %v2608 = vld [vmem:[#allocation3 + $0x170] sm:$0xff]
    %v2609 = vld [vmem:[#allocation3 + $0x178] sm:$0xff]
    %v2610 = vld [vmem:[#allocation3 + $0x180] sm:$0xff]
    %v2611 = vld [vmem:[#allocation3 + $0x188] sm:$0xff]
    %v2612 = vld [vmem:[#allocation3 + $0x190] sm:$0xff]
    %v2613 = vld [vmem:[#allocation3 + $0x198] sm:$0xff]
    %v2614 = vld [vmem:[#allocation3 + $0x1a0] sm:$0xff]
    %v2615 = vld [vmem:[#allocation3 + $0x1a8] sm:$0xff]
    %v2616 = vld [vmem:[#allocation3 + $0x1b0] sm:$0xff]
    %v2617 = vld [vmem:[#allocation3 + $0x1b8] sm:$0xff]
    %v2618 = vld [vmem:[#allocation3 + $0x1c0] sm:$0xff]
    %v2619 = vld [vmem:[#allocation3 + $0x1c8] sm:$0xff]
    %v2620 = vld [vmem:[#allocation3 + $0x1d0] sm:$0xff]
    %v2621 = vld [vmem:[#allocation3 + $0x1d8] sm:$0xff]
    %v2622 = vld [vmem:[#allocation3 + $0x1e0] sm:$0xff]
    %v2623 = vld [vmem:[#allocation3 + $0x1e8] sm:$0xff]
    %v2624 = vld [vmem:[#allocation3 + $0x1f0] sm:$0xff]
    %v2625 = vld [vmem:[#allocation3 + $0x1f8] sm:$0xff]
    %v2626 = vld [vmem:[%s4] sm:$0x3]
    %v2628 = vlaneseq
    %v2629 = vshrl.u32 %v2628, 7
    %v2630 = vsub.s32 0, %v2629
    %v2631 = vrot.slane %v2626, %v2630
    %v2632 = vlaneseq
    %v2633 = vshrl.u32 %v2632, 7
    %v2634 = vsub.s32 1, %v2633
    %v2635 = vrot.slane %v2626, %v2634
    %v2702 = vunpack.c.l.b16 %v2562
    %v2703 = vunpack.c.h.b16 %v2562
    %v2704 = vunpack.c.l.b16 %v2563
    %v2705 = vunpack.c.h.b16 %v2563
    %v2706 = vunpack.c.l.b16 %v2564
    %v2707 = vunpack.c.h.b16 %v2564
    %v2708 = vunpack.c.l.b16 %v2565
    %v2709 = vunpack.c.h.b16 %v2565
    %v2710 = vunpack.c.l.b16 %v2566
    %v2711 = vunpack.c.h.b16 %v2566
    %v2712 = vunpack.c.l.b16 %v2567
    %v2713 = vunpack.c.h.b16 %v2567
    %v2714 = vunpack.c.l.b16 %v2568
    %v2715 = vunpack.c.h.b16 %v2568
    %v2716 = vunpack.c.l.b16 %v2569
    %v2717 = vunpack.c.h.b16 %v2569
    %v2718 = vunpack.c.l.b16 %v2570
    %v2719 = vunpack.c.h.b16 %v2570
    %v2720 = vunpack.c.l.b16 %v2571
    %v2721 = vunpack.c.h.b16 %v2571
    %v2722 = vunpack.c.l.b16 %v2572
    %v2723 = vunpack.c.h.b16 %v2572
    %v2724 = vunpack.c.l.b16 %v2573
    %v2725 = vunpack.c.h.b16 %v2573
    %v2726 = vunpack.c.l.b16 %v2574
    %v2727 = vunpack.c.h.b16 %v2574
    %v2728 = vunpack.c.l.b16 %v2575
    %v2729 = vunpack.c.h.b16 %v2575
    %v2730 = vunpack.c.l.b16 %v2576
    %v2731 = vunpack.c.h.b16 %v2576
    %v2732 = vunpack.c.l.b16 %v2577
    %v2733 = vunpack.c.h.b16 %v2577
    %v2734 = vunpack.c.l.b16 %v2578
    %v2735 = vunpack.c.h.b16 %v2578
    %v2736 = vunpack.c.l.b16 %v2579
    %v2737 = vunpack.c.h.b16 %v2579
    %v2738 = vunpack.c.l.b16 %v2580
    %v2739 = vunpack.c.h.b16 %v2580
    %v2740 = vunpack.c.l.b16 %v2581
    %v2741 = vunpack.c.h.b16 %v2581
    %v2742 = vunpack.c.l.b16 %v2582
    %v2743 = vunpack.c.h.b16 %v2582
    %v2744 = vunpack.c.l.b16 %v2583
    %v2745 = vunpack.c.h.b16 %v2583
    %v2746 = vunpack.c.l.b16 %v2584
    %v2747 = vunpack.c.h.b16 %v2584
    %v2748 = vunpack.c.l.b16 %v2585
    %v2749 = vunpack.c.h.b16 %v2585
    %v2750 = vunpack.c.l.b16 %v2586
    %v2751 = vunpack.c.h.b16 %v2586
    %v2752 = vunpack.c.l.b16 %v2587
    %v2753 = vunpack.c.h.b16 %v2587
    %v2754 = vunpack.c.l.b16 %v2588
    %v2755 = vunpack.c.h.b16 %v2588
    %v2756 = vunpack.c.l.b16 %v2589
    %v2757 = vunpack.c.h.b16 %v2589
    %v2758 = vunpack.c.l.b16 %v2590
    %v2759 = vunpack.c.h.b16 %v2590
    %v2760 = vunpack.c.l.b16 %v2591
    %v2761 = vunpack.c.h.b16 %v2591
    %v2762 = vunpack.c.l.b16 %v2592
    %v2763 = vunpack.c.h.b16 %v2592
    %v2764 = vunpack.c.l.b16 %v2593
    %v2765 = vunpack.c.h.b16 %v2593
    %v2766 = vunpack.c.l.b16 %v2594
    %v2767 = vunpack.c.h.b16 %v2594
    %v2768 = vunpack.c.l.b16 %v2595
    %v2769 = vunpack.c.h.b16 %v2595
    %v2770 = vunpack.c.l.b16 %v2596
    %v2771 = vunpack.c.h.b16 %v2596
    %v2772 = vunpack.c.l.b16 %v2597
    %v2773 = vunpack.c.h.b16 %v2597
    %v2774 = vunpack.c.l.b16 %v2598
    %v2775 = vunpack.c.h.b16 %v2598
    %v2776 = vunpack.c.l.b16 %v2599
    %v2777 = vunpack.c.h.b16 %v2599
    %v2778 = vunpack.c.l.b16 %v2600
    %v2779 = vunpack.c.h.b16 %v2600
    %v2780 = vunpack.c.l.b16 %v2601
    %v2781 = vunpack.c.h.b16 %v2601
    %v2782 = vunpack.c.l.b16 %v2602
    %v2783 = vunpack.c.h.b16 %v2602
    %v2784 = vunpack.c.l.b16 %v2603
    %v2785 = vunpack.c.h.b16 %v2603
    %v2786 = vunpack.c.l.b16 %v2604
    %v2787 = vunpack.c.h.b16 %v2604
    %v2788 = vunpack.c.l.b16 %v2605
    %v2789 = vunpack.c.h.b16 %v2605
    %v2790 = vunpack.c.l.b16 %v2606
    %v2791 = vunpack.c.h.b16 %v2606
    %v2792 = vunpack.c.l.b16 %v2607
    %v2793 = vunpack.c.h.b16 %v2607
    %v2794 = vunpack.c.l.b16 %v2608
    %v2795 = vunpack.c.h.b16 %v2608
    %v2796 = vunpack.c.l.b16 %v2609
    %v2797 = vunpack.c.h.b16 %v2609
    %v2798 = vunpack.c.l.b16 %v2610
    %v2799 = vunpack.c.h.b16 %v2610
    %v2800 = vunpack.c.l.b16 %v2611
    %v2801 = vunpack.c.h.b16 %v2611
    %v2802 = vunpack.c.l.b16 %v2612
    %v2803 = vunpack.c.h.b16 %v2612
    %v2804 = vunpack.c.l.b16 %v2613
    %v2805 = vunpack.c.h.b16 %v2613
    %v2806 = vunpack.c.l.b16 %v2614
    %v2807 = vunpack.c.h.b16 %v2614
    %v2808 = vunpack.c.l.b16 %v2615
    %v2809 = vunpack.c.h.b16 %v2615
    %v2810 = vunpack.c.l.b16 %v2616
    %v2811 = vunpack.c.h.b16 %v2616
    %v2812 = vunpack.c.l.b16 %v2617
    %v2813 = vunpack.c.h.b16 %v2617
    %v2814 = vunpack.c.l.b16 %v2618
    %v2815 = vunpack.c.h.b16 %v2618
    %v2816 = vunpack.c.l.b16 %v2619
    %v2817 = vunpack.c.h.b16 %v2619
    %v2818 = vunpack.c.l.b16 %v2620
    %v2819 = vunpack.c.h.b16 %v2620
    %v2820 = vunpack.c.l.b16 %v2621
    %v2821 = vunpack.c.h.b16 %v2621
    %v2822 = vunpack.c.l.b16 %v2622
    %v2823 = vunpack.c.h.b16 %v2622
    %v2824 = vunpack.c.l.b16 %v2623
    %v2825 = vunpack.c.h.b16 %v2623
    %v2826 = vunpack.c.l.b16 %v2624
    %v2827 = vunpack.c.h.b16 %v2624
    %v2828 = vunpack.c.l.b16 %v2625
    %v2829 = vunpack.c.h.b16 %v2625
    %v2830 = vpack.c.b16 %v2704, %v2702
    %v2831 = vpack.c.b16 %v2705, %v2703
    %v2832 = vpack.c.b16 %v2708, %v2706
    %v2833 = vpack.c.b16 %v2709, %v2707
    %v2834 = vpack.c.b16 %v2712, %v2710
    %v2835 = vpack.c.b16 %v2713, %v2711
    %v2836 = vpack.c.b16 %v2716, %v2714
    %v2837 = vpack.c.b16 %v2717, %v2715
    %v2838 = vpack.c.b16 %v2720, %v2718
    %v2839 = vpack.c.b16 %v2721, %v2719
    %v2840 = vpack.c.b16 %v2724, %v2722
    %v2841 = vpack.c.b16 %v2725, %v2723
    %v2842 = vpack.c.b16 %v2728, %v2726
    %v2843 = vpack.c.b16 %v2729, %v2727
    %v2844 = vpack.c.b16 %v2732, %v2730
    %v2845 = vpack.c.b16 %v2733, %v2731
    %v2846 = vpack.c.b16 %v2736, %v2734
    %v2847 = vpack.c.b16 %v2737, %v2735
    %v2848 = vpack.c.b16 %v2740, %v2738
    %v2849 = vpack.c.b16 %v2741, %v2739
    %v2850 = vpack.c.b16 %v2744, %v2742
    %v2851 = vpack.c.b16 %v2745, %v2743
    %v2852 = vpack.c.b16 %v2748, %v2746
    %v2853 = vpack.c.b16 %v2749, %v2747
    %v2854 = vpack.c.b16 %v2752, %v2750
    %v2855 = vpack.c.b16 %v2753, %v2751
    %v2856 = vpack.c.b16 %v2756, %v2754
    %v2857 = vpack.c.b16 %v2757, %v2755
    %v2858 = vpack.c.b16 %v2760, %v2758
    %v2859 = vpack.c.b16 %v2761, %v2759
    %v2860 = vpack.c.b16 %v2764, %v2762
    %v2861 = vpack.c.b16 %v2765, %v2763
    %v2862 = vpack.c.b16 %v2768, %v2766
    %v2863 = vpack.c.b16 %v2769, %v2767
    %v2864 = vpack.c.b16 %v2772, %v2770
    %v2865 = vpack.c.b16 %v2773, %v2771
    %v2866 = vpack.c.b16 %v2776, %v2774
    %v2867 = vpack.c.b16 %v2777, %v2775
    %v2868 = vpack.c.b16 %v2780, %v2778
    %v2869 = vpack.c.b16 %v2781, %v2779
    %v2870 = vpack.c.b16 %v2784, %v2782
    %v2871 = vpack.c.b16 %v2785, %v2783
    %v2872 = vpack.c.b16 %v2788, %v2786
    %v2873 = vpack.c.b16 %v2789, %v2787
    %v2874 = vpack.c.b16 %v2792, %v2790
    %v2875 = vpack.c.b16 %v2793, %v2791
    %v2876 = vpack.c.b16 %v2796, %v2794
    %v2877 = vpack.c.b16 %v2797, %v2795
    %v2878 = vpack.c.b16 %v2800, %v2798
    %v2879 = vpack.c.b16 %v2801, %v2799
    %v2880 = vpack.c.b16 %v2804, %v2802
    %v2881 = vpack.c.b16 %v2805, %v2803
    %v2882 = vpack.c.b16 %v2808, %v2806
    %v2883 = vpack.c.b16 %v2809, %v2807
    %v2884 = vpack.c.b16 %v2812, %v2810
    %v2885 = vpack.c.b16 %v2813, %v2811
    %v2886 = vpack.c.b16 %v2816, %v2814
    %v2887 = vpack.c.b16 %v2817, %v2815
    %v2888 = vpack.c.b16 %v2820, %v2818
    %v2889 = vpack.c.b16 %v2821, %v2819
    %v2890 = vpack.c.b16 %v2824, %v2822
    %v2891 = vpack.c.b16 %v2825, %v2823
    %v2892 = vpack.c.b16 %v2828, %v2826
    %v2893 = vpack.c.b16 %v2829, %v2827
    %2958 = vmatprep.subr.bf16.mxu0 %v2831
    %2959 = vmatpush1.bf16.msra.mxu0 %v2830
    %2960 = vmatprep.subr.bf16.mxu0 %v2833
    %2961 = vmatpush1.bf16.msra.mxu0 %v2832
    %2962 = vmatprep.subr.bf16.mxu0 %v2835
    %2963 = vmatpush1.bf16.msra.mxu0 %v2834
    %2964 = vmatprep.subr.bf16.mxu0 %v2837
    %2965 = vmatpush1.bf16.msra.mxu0 %v2836
    %2966 = vmatprep.subr.bf16.mxu0 %v2839
    %2967 = vmatpush1.bf16.msra.mxu0 %v2838
    %2968 = vmatprep.subr.bf16.mxu0 %v2841
    %2969 = vmatpush1.bf16.msra.mxu0 %v2840
    %2970 = vmatprep.subr.bf16.mxu0 %v2843
    %2971 = vmatpush1.bf16.msra.mxu0 %v2842
    %2972 = vmatprep.subr.bf16.mxu0 %v2845
    %2973 = vmatpush1.bf16.msra.mxu0 %v2844
    %2974 = vmatprep.subr.bf16.mxu0 %v2847
    %2975 = vmatpush1.bf16.msra.mxu0 %v2846
    %2976 = vmatprep.subr.bf16.mxu0 %v2849
    %2977 = vmatpush1.bf16.msra.mxu0 %v2848
    %2978 = vmatprep.subr.bf16.mxu0 %v2851
    %2979 = vmatpush1.bf16.msra.mxu0 %v2850
    %2980 = vmatprep.subr.bf16.mxu0 %v2853
    %2981 = vmatpush1.bf16.msra.mxu0 %v2852
    %2982 = vmatprep.subr.bf16.mxu0 %v2855
    %2983 = vmatpush1.bf16.msra.mxu0 %v2854
    %2984 = vmatprep.subr.bf16.mxu0 %v2857
    %2985 = vmatpush1.bf16.msra.mxu0 %v2856
    %2986 = vmatprep.subr.bf16.mxu0 %v2859
    %2987 = vmatpush1.bf16.msra.mxu0 %v2858
    %2988 = vmatprep.subr.bf16.mxu0 %v2861
    %2989 = vmatpush1.bf16.msra.mxu0 %v2860
    %2990 = vmatprep.mubr.bf16.mxu0 %v2531
    %2991 = vmatmul.mubr.bf16.gmra.mrb[0].mxu0 %v2530
    %v2992 = vpop.f32.mrb[0].mxu0
    %v2993 = vadd.f32 %v2631, %v2992
    %v2994 = vpop.f32.mrb[0].mxu0
    %v2995 = vadd.f32 %v2635, %v2994
    %v2996 = vpop.f32.mrb[0].mxu0
    %v2997 = vadd.f32 %v2631, %v2996
    %v2998 = vpop.f32.mrb[0].mxu0
    %v2999 = vadd.f32 %v2635, %v2998
    %3000 = vmatprep.mubr.bf16.mxu0 %v2535
    %3001 = vmatmul.mubr.bf16.gmra.mrb[0].mxu0 %v2534
    %v3002 = vpop.f32.mrb[0].mxu0
    %v3003 = vadd.f32 %v2631, %v3002
    %v3004 = vpop.f32.mrb[0].mxu0
    %v3005 = vadd.f32 %v2635, %v3004
    %v3006 = vpop.f32.mrb[0].mxu0
    %v3007 = vadd.f32 %v2631, %v3006
    %v3008 = vpop.f32.mrb[0].mxu0
    %v3009 = vadd.f32 %v2635, %v3008
    %3010 = vmatprep.mubr.bf16.mxu0 %v2539
    %3011 = vmatmul.mubr.bf16.gmra.mrb[0].mxu0 %v2538
    %v3012 = vpop.f32.mrb[0].mxu0
    %v3013 = vadd.f32 %v2631, %v3012
    %v3014 = vpop.f32.mrb[0].mxu0
    %v3015 = vadd.f32 %v2635, %v3014
    %v3016 = vpop.f32.mrb[0].mxu0
    %v3017 = vadd.f32 %v2631, %v3016
    %v3018 = vpop.f32.mrb[0].mxu0
    %v3019 = vadd.f32 %v2635, %v3018
    %3020 = vmatprep.mubr.bf16.mxu0 %v2543
    %3021 = vmatmul.mubr.bf16.gmra.mrb[0].mxu0 %v2542
    %v3022 = vpop.f32.mrb[0].mxu0
    %v3023 = vadd.f32 %v2631, %v3022
    %v3024 = vpop.f32.mrb[0].mxu0
    %v3025 = vadd.f32 %v2635, %v3024
    %v3026 = vpop.f32.mrb[0].mxu0
    %v3027 = vadd.f32 %v2631, %v3026
    %v3028 = vpop.f32.mrb[0].mxu0
    %v3029 = vadd.f32 %v2635, %v3028
    %3030 = vmatprep.mubr.bf16.mxu0 %v2547
    %3031 = vmatmul.mubr.bf16.gmra.mrb[0].mxu0 %v2546
    %v3032 = vpop.f32.mrb[0].mxu0
    %v3033 = vadd.f32 %v2631, %v3032
    %v3034 = vpop.f32.mrb[0].mxu0
    %v3035 = vadd.f32 %v2635, %v3034
    %v3036 = vpop.f32.mrb[0].mxu0
    %v3037 = vadd.f32 %v2631, %v3036
    %v3038 = vpop.f32.mrb[0].mxu0
    %v3039 = vadd.f32 %v2635, %v3038
    %3040 = vmatprep.mubr.bf16.mxu0 %v2551
    %3041 = vmatmul.mubr.bf16.gmra.mrb[0].mxu0 %v2550
    %v3042 = vpop.f32.mrb[0].mxu0
    %v3043 = vadd.f32 %v2631, %v3042
    %v3044 = vpop.f32.mrb[0].mxu0
    %v3045 = vadd.f32 %v2635, %v3044
    %v3046 = vpop.f32.mrb[0].mxu0
    %v3047 = vadd.f32 %v2631, %v3046
    %v3048 = vpop.f32.mrb[0].mxu0
    %v3049 = vadd.f32 %v2635, %v3048
    %3050 = vmatprep.mubr.bf16.mxu0 %v2555
    %3051 = vmatmul.mubr.bf16.gmra.mrb[0].mxu0 %v2554
    %v3052 = vpop.f32.mrb[0].mxu0
    %v3053 = vadd.f32 %v2631, %v3052
    %v3054 = vpop.f32.mrb[0].mxu0
    %v3055 = vadd.f32 %v2635, %v3054
    %v3056 = vpop.f32.mrb[0].mxu0
    %v3057 = vadd.f32 %v2631, %v3056
    %v3058 = vpop.f32.mrb[0].mxu0
    %v3059 = vadd.f32 %v2635, %v3058
    %3060 = vmatprep.mubr.bf16.mxu0 %v2559
    %3061 = vmatmul.mubr.bf16.gmra.mrb[0].mxu0 %v2558
    %v3062 = vpop.f32.mrb[0].mxu0
    %v3063 = vadd.f32 %v2631, %v3062
    %v3064 = vpop.f32.mrb[0].mxu0
    %v3065 = vadd.f32 %v2635, %v3064
    %v3066 = vpop.f32.mrb[0].mxu0
    %v3067 = vadd.f32 %v2631, %v3066
    %v3068 = vpop.f32.mrb[0].mxu0
    %v3069 = vadd.f32 %v2635, %v3068
    %3070 = vdwg.mxu0
    %3071 = vmatprep.subr.bf16.mxu0 %v2863
    %3072 = vmatpush1.bf16.msra.mxu0 %v2862
    %3073 = vmatprep.subr.bf16.mxu0 %v2865
    %3074 = vmatpush1.bf16.msra.mxu0 %v2864
    %3075 = vmatprep.subr.bf16.mxu0 %v2867
    %3076 = vmatpush1.bf16.msra.mxu0 %v2866
    %3077 = vmatprep.subr.bf16.mxu0 %v2869
    %3078 = vmatpush1.bf16.msra.mxu0 %v2868
    %3079 = vmatprep.subr.bf16.mxu0 %v2871
    %3080 = vmatpush1.bf16.msra.mxu0 %v2870
    %3081 = vmatprep.subr.bf16.mxu0 %v2873
    %3082 = vmatpush1.bf16.msra.mxu0 %v2872
    %3083 = vmatprep.subr.bf16.mxu0 %v2875
    %3084 = vmatpush1.bf16.msra.mxu0 %v2874
    %3085 = vmatprep.subr.bf16.mxu0 %v2877
    %3086 = vmatpush1.bf16.msra.mxu0 %v2876
    %3087 = vmatprep.subr.bf16.mxu0 %v2879
    %3088 = vmatpush1.bf16.msra.mxu0 %v2878
    %3089 = vmatprep.subr.bf16.mxu0 %v2881
    %3090 = vmatpush1.bf16.msra.mxu0 %v2880
    %3091 = vmatprep.subr.bf16.mxu0 %v2883
    %3092 = vmatpush1.bf16.msra.mxu0 %v2882
    %3093 = vmatprep.subr.bf16.mxu0 %v2885
    %3094 = vmatpush1.bf16.msra.mxu0 %v2884
    %3095 = vmatprep.subr.bf16.mxu0 %v2887
    %3096 = vmatpush1.bf16.msra.mxu0 %v2886
    %3097 = vmatprep.subr.bf16.mxu0 %v2889
    %3098 = vmatpush1.bf16.msra.mxu0 %v2888
    %3099 = vmatprep.subr.bf16.mxu0 %v2891
    %3100 = vmatpush1.bf16.msra.mxu0 %v2890
    %3101 = vmatprep.subr.bf16.mxu0 %v2893
    %3102 = vmatpush1.bf16.msra.mxu0 %v2892
    %3103 = vmatprep.mubr.bf16.mxu0 %v2533
    %3104 = vmatmul.mubr.bf16.gmra.mrb[0].mxu0 %v2532
    %v3105 = vpop.f32.mrb[0].mxu0
    %v3106 = vadd.f32 %v2993, %v3105
    %v3107 = vpop.f32.mrb[0].mxu0
    %v3108 = vadd.f32 %v2995, %v3107
    %v3109 = vpop.f32.mrb[0].mxu0
    %v3110 = vadd.f32 %v2997, %v3109
    %v3111 = vpop.f32.mrb[0].mxu0
    %v3112 = vadd.f32 %v2999, %v3111
    %3113 = vmatprep.mubr.bf16.mxu0 %v2537
    %3114 = vmatmul.mubr.bf16.gmra.mrb[0].mxu0 %v2536
    %v3115 = vpop.f32.mrb[0].mxu0
    %v3116 = vadd.f32 %v3003, %v3115
    %v3117 = vpop.f32.mrb[0].mxu0
    %v3118 = vadd.f32 %v3005, %v3117
    %v3119 = vpop.f32.mrb[0].mxu0
    %v3120 = vadd.f32 %v3007, %v3119
    %v3121 = vpop.f32.mrb[0].mxu0
    %v3122 = vadd.f32 %v3009, %v3121
    %3123 = vmatprep.mubr.bf16.mxu0 %v2541
    %3124 = vmatmul.mubr.bf16.gmra.mrb[0].mxu0 %v2540
    %v3125 = vpop.f32.mrb[0].mxu0
    %v3126 = vadd.f32 %v3013, %v3125
    %v3127 = vpop.f32.mrb[0].mxu0
    %v3128 = vadd.f32 %v3015, %v3127
    %v3129 = vpop.f32.mrb[0].mxu0
    %v3130 = vadd.f32 %v3017, %v3129
    %v3131 = vpop.f32.mrb[0].mxu0
    %v3132 = vadd.f32 %v3019, %v3131
    %3133 = vmatprep.mubr.bf16.mxu0 %v2545
    %3134 = vmatmul.mubr.bf16.gmra.mrb[0].mxu0 %v2544
    %v3135 = vpop.f32.mrb[0].mxu0
    %v3136 = vadd.f32 %v3023, %v3135
    %v3137 = vpop.f32.mrb[0].mxu0
    %v3138 = vadd.f32 %v3025, %v3137
    %v3139 = vpop.f32.mrb[0].mxu0
    %v3140 = vadd.f32 %v3027, %v3139
    %v3141 = vpop.f32.mrb[0].mxu0
    %v3142 = vadd.f32 %v3029, %v3141
    %3143 = vmatprep.mubr.bf16.mxu0 %v2549
    %3144 = vmatmul.mubr.bf16.gmra.mrb[0].mxu0 %v2548
    %v3145 = vpop.f32.mrb[0].mxu0
    %v3146 = vadd.f32 %v3033, %v3145
    %v3147 = vpop.f32.mrb[0].mxu0
    %v3148 = vadd.f32 %v3035, %v3147
    %v3149 = vpop.f32.mrb[0].mxu0
    %v3150 = vadd.f32 %v3037, %v3149
    %v3151 = vpop.f32.mrb[0].mxu0
    %v3152 = vadd.f32 %v3039, %v3151
    %3153 = vmatprep.mubr.bf16.mxu0 %v2553
    %3154 = vmatmul.mubr.bf16.gmra.mrb[0].mxu0 %v2552
    %v3155 = vpop.f32.mrb[0].mxu0
    %v3156 = vadd.f32 %v3043, %v3155
    %v3157 = vpop.f32.mrb[0].mxu0
    %v3158 = vadd.f32 %v3045, %v3157
    %v3159 = vpop.f32.mrb[0].mxu0
    %v3160 = vadd.f32 %v3047, %v3159
    %v3161 = vpop.f32.mrb[0].mxu0
    %v3162 = vadd.f32 %v3049, %v3161
    %3163 = vmatprep.mubr.bf16.mxu0 %v2557
    %3164 = vmatmul.mubr.bf16.gmra.mrb[0].mxu0 %v2556
    %v3165 = vpop.f32.mrb[0].mxu0
    %v3166 = vadd.f32 %v3053, %v3165
    %v3167 = vpop.f32.mrb[0].mxu0
    %v3168 = vadd.f32 %v3055, %v3167
    %v3169 = vpop.f32.mrb[0].mxu0
    %v3170 = vadd.f32 %v3057, %v3169
    %v3171 = vpop.f32.mrb[0].mxu0
    %v3172 = vadd.f32 %v3059, %v3171
    %3173 = vmatprep.mubr.bf16.mxu0 %v2561
    %3174 = vmatmul.mubr.bf16.gmra.mrb[0].mxu0 %v2560
    %v3175 = vpop.f32.mrb[0].mxu0
    %v3176 = vadd.f32 %v3063, %v3175
    %v3177 = vpop.f32.mrb[0].mxu0
    %v3178 = vadd.f32 %v3065, %v3177
    %v3179 = vpop.f32.mrb[0].mxu0
    %v3180 = vadd.f32 %v3067, %v3179
    %v3181 = vpop.f32.mrb[0].mxu0
    %v3182 = vadd.f32 %v3069, %v3181
    %3183 = vdwg.mxu0
    %vm3184 = vcmp.gt.f32.partialorder %v3106, 0.0
    %vm3185 = vcmp.gt.f32.partialorder %v3108, 0.0
    %vm3186 = vcmp.gt.f32.partialorder %v3110, 0.0
    %vm3187 = vcmp.gt.f32.partialorder %v3112, 0.0
    %vm3188 = vcmp.gt.f32.partialorder %v3116, 0.0
    %vm3189 = vcmp.gt.f32.partialorder %v3118, 0.0
    %vm3190 = vcmp.gt.f32.partialorder %v3120, 0.0
    %vm3191 = vcmp.gt.f32.partialorder %v3122, 0.0
    %vm3192 = vcmp.gt.f32.partialorder %v3126, 0.0
    %vm3193 = vcmp.gt.f32.partialorder %v3128, 0.0
    %vm3194 = vcmp.gt.f32.partialorder %v3130, 0.0
    %vm3195 = vcmp.gt.f32.partialorder %v3132, 0.0
    %vm3196 = vcmp.gt.f32.partialorder %v3136, 0.0
    %vm3197 = vcmp.gt.f32.partialorder %v3138, 0.0
    %vm3198 = vcmp.gt.f32.partialorder %v3140, 0.0
    %vm3199 = vcmp.gt.f32.partialorder %v3142, 0.0
    %vm3200 = vcmp.gt.f32.partialorder %v3146, 0.0
    %vm3201 = vcmp.gt.f32.partialorder %v3148, 0.0
    %vm3202 = vcmp.gt.f32.partialorder %v3150, 0.0
    %vm3203 = vcmp.gt.f32.partialorder %v3152, 0.0
    %vm3204 = vcmp.gt.f32.partialorder %v3156, 0.0
    %vm3205 = vcmp.gt.f32.partialorder %v3158, 0.0
    %vm3206 = vcmp.gt.f32.partialorder %v3160, 0.0
    %vm3207 = vcmp.gt.f32.partialorder %v3162, 0.0
    %vm3208 = vcmp.gt.f32.partialorder %v3166, 0.0
    %vm3209 = vcmp.gt.f32.partialorder %v3168, 0.0
    %vm3210 = vcmp.gt.f32.partialorder %v3170, 0.0
    %vm3211 = vcmp.gt.f32.partialorder %v3172, 0.0
    %vm3212 = vcmp.gt.f32.partialorder %v3176, 0.0
    %vm3213 = vcmp.gt.f32.partialorder %v3178, 0.0
    %vm3214 = vcmp.gt.f32.partialorder %v3180, 0.0
    %vm3215 = vcmp.gt.f32.partialorder %v3182, 0.0
    %v3216 = vmul.f32 %v3106, 0.2
    %v3217 = vmul.f32 %v3108, 0.2
    %v3218 = vmul.f32 %v3110, 0.2
    %v3219 = vmul.f32 %v3112, 0.2
    %v3220 = vmul.f32 %v3116, 0.2
    %v3221 = vmul.f32 %v3118, 0.2
    %v3222 = vmul.f32 %v3120, 0.2
    %v3223 = vmul.f32 %v3122, 0.2
    %v3224 = vmul.f32 %v3126, 0.2
    %v3225 = vmul.f32 %v3128, 0.2
    %v3226 = vmul.f32 %v3130, 0.2
    %v3227 = vmul.f32 %v3132, 0.2
    %v3228 = vmul.f32 %v3136, 0.2
    %v3229 = vmul.f32 %v3138, 0.2
    %v3230 = vmul.f32 %v3140, 0.2
    %v3231 = vmul.f32 %v3142, 0.2
    %v3232 = vmul.f32 %v3146, 0.2
    %v3233 = vmul.f32 %v3148, 0.2
    %v3234 = vmul.f32 %v3150, 0.2
    %v3235 = vmul.f32 %v3152, 0.2
    %v3236 = vmul.f32 %v3156, 0.2
    %v3237 = vmul.f32 %v3158, 0.2
    %v3238 = vmul.f32 %v3160, 0.2
    %v3239 = vmul.f32 %v3162, 0.2
    %v3240 = vmul.f32 %v3166, 0.2
    %v3241 = vmul.f32 %v3168, 0.2
    %v3242 = vmul.f32 %v3170, 0.2
    %v3243 = vmul.f32 %v3172, 0.2
    %v3244 = vmul.f32 %v3176, 0.2
    %v3245 = vmul.f32 %v3178, 0.2
    %v3246 = vmul.f32 %v3180, 0.2
    %v3247 = vmul.f32 %v3182, 0.2
    %v3248 = vsel %vm3184, %v3106, %v3216
    %v3249 = vsel %vm3185, %v3108, %v3217
    %v3250 = vsel %vm3186, %v3110, %v3218
    %v3251 = vsel %vm3187, %v3112, %v3219
    %v3252 = vsel %vm3188, %v3116, %v3220
    %v3253 = vsel %vm3189, %v3118, %v3221
    %v3254 = vsel %vm3190, %v3120, %v3222
    %v3255 = vsel %vm3191, %v3122, %v3223
    %v3256 = vsel %vm3192, %v3126, %v3224
    %v3257 = vsel %vm3193, %v3128, %v3225
    %v3258 = vsel %vm3194, %v3130, %v3226
    %v3259 = vsel %vm3195, %v3132, %v3227
    %v3260 = vsel %vm3196, %v3136, %v3228
    %v3261 = vsel %vm3197, %v3138, %v3229
    %v3262 = vsel %vm3198, %v3140, %v3230
    %v3263 = vsel %vm3199, %v3142, %v3231
    %v3264 = vsel %vm3200, %v3146, %v3232
    %v3265 = vsel %vm3201, %v3148, %v3233
    %v3266 = vsel %vm3202, %v3150, %v3234
    %v3267 = vsel %vm3203, %v3152, %v3235
    %v3268 = vsel %vm3204, %v3156, %v3236
    %v3269 = vsel %vm3205, %v3158, %v3237
    %v3270 = vsel %vm3206, %v3160, %v3238
    %v3271 = vsel %vm3207, %v3162, %v3239
    %v3272 = vsel %vm3208, %v3166, %v3240
    %v3273 = vsel %vm3209, %v3168, %v3241
    %v3274 = vsel %vm3210, %v3170, %v3242
    %v3275 = vsel %vm3211, %v3172, %v3243
    %v3276 = vsel %vm3212, %v3176, %v3244
    %v3277 = vsel %vm3213, %v3178, %v3245
    %v3278 = vsel %vm3214, %v3180, %v3246
    %v3279 = vsel %vm3215, %v3182, %v3247
    %v3280 = vld [vmem:[%s5] sm:$0x3]
    %v3282 = vlaneseq
    %v3283 = vshrl.u32 %v3282, 7
    %v3284 = vsub.s32 0, %v3283
    %v3285 = vrot.slane %v3280, %v3284
    %v3286 = vlaneseq
    %v3287 = vshrl.u32 %v3286, 7
    %v3288 = vsub.s32 1, %v3287
    %v3289 = vrot.slane %v3280, %v3288
    %v3292 = vmul.f32 %v3248, %v3285
    %v3293 = vmul.f32 %v3249, %v3289
    %v3294 = vmul.f32 %v3250, %v3285
    %v3295 = vmul.f32 %v3251, %v3289
    %v3296 = vmul.f32 %v3252, %v3285
    %v3297 = vmul.f32 %v3253, %v3289
    %v3298 = vmul.f32 %v3254, %v3285
    %v3299 = vmul.f32 %v3255, %v3289
    %v3300 = vmul.f32 %v3256, %v3285
    %v3301 = vmul.f32 %v3257, %v3289
    %v3302 = vmul.f32 %v3258, %v3285
    %v3303 = vmul.f32 %v3259, %v3289
    %v3304 = vmul.f32 %v3260, %v3285
    %v3305 = vmul.f32 %v3261, %v3289
    %v3306 = vmul.f32 %v3262, %v3285
    %v3307 = vmul.f32 %v3263, %v3289
    %v3308 = vmul.f32 %v3264, %v3285
    %v3309 = vmul.f32 %v3265, %v3289
    %v3310 = vmul.f32 %v3266, %v3285
    %v3311 = vmul.f32 %v3267, %v3289
    %v3312 = vmul.f32 %v3268, %v3285
    %v3313 = vmul.f32 %v3269, %v3289
    %v3314 = vmul.f32 %v3270, %v3285
    %v3315 = vmul.f32 %v3271, %v3289
    %v3316 = vmul.f32 %v3272, %v3285
    %v3317 = vmul.f32 %v3273, %v3289
    %v3318 = vmul.f32 %v3274, %v3285
    %v3319 = vmul.f32 %v3275, %v3289
    %v3320 = vmul.f32 %v3276, %v3285
    %v3321 = vmul.f32 %v3277, %v3289
    %v3322 = vmul.f32 %v3278, %v3285
    %v3323 = vmul.f32 %v3279, %v3289
    %v3324 = vadd.f32 %v3292, %v3293
    %v3325 = vadd.f32 %v3294, %v3295
    %v3326 = vadd.f32 %v3296, %v3297
    %v3327 = vadd.f32 %v3298, %v3299
    %v3328 = vadd.f32 %v3300, %v3301
    %v3329 = vadd.f32 %v3302, %v3303
    %v3330 = vadd.f32 %v3304, %v3305
    %v3331 = vadd.f32 %v3306, %v3307
    %v3332 = vadd.f32 %v3308, %v3309
    %v3333 = vadd.f32 %v3310, %v3311
    %v3334 = vadd.f32 %v3312, %v3313
    %v3335 = vadd.f32 %v3314, %v3315
    %v3336 = vadd.f32 %v3316, %v3317
    %v3337 = vadd.f32 %v3318, %v3319
    %v3338 = vadd.f32 %v3320, %v3321
    %v3339 = vadd.f32 %v3322, %v3323
    %3340 = vadd.xlane.f32.xlu0 %v3324
    %v3341 = vpop.xlane.xlu0 %3340
    %3342 = vadd.xlane.f32.xlu0 %v3325
    %v3343 = vpop.xlane.xlu0 %3342
    %3344 = vadd.xlane.f32.xlu0 %v3326
    %v3345 = vpop.xlane.xlu0 %3344
    %3346 = vadd.xlane.f32.xlu0 %v3327
    %v3347 = vpop.xlane.xlu0 %3346
    %3348 = vadd.xlane.f32.xlu0 %v3328
    %v3349 = vpop.xlane.xlu0 %3348
    %3350 = vadd.xlane.f32.xlu0 %v3329
    %v3351 = vpop.xlane.xlu0 %3350
    %3352 = vadd.xlane.f32.xlu0 %v3330
    %v3353 = vpop.xlane.xlu0 %3352
    %3354 = vadd.xlane.f32.xlu0 %v3331
    %v3355 = vpop.xlane.xlu0 %3354
    %3356 = vadd.xlane.f32.xlu0 %v3332
    %v3357 = vpop.xlane.xlu0 %3356
    %3358 = vadd.xlane.f32.xlu0 %v3333
    %v3359 = vpop.xlane.xlu0 %3358
    %3360 = vadd.xlane.f32.xlu0 %v3334
    %v3361 = vpop.xlane.xlu0 %3360
    %3362 = vadd.xlane.f32.xlu0 %v3335
    %v3363 = vpop.xlane.xlu0 %3362
    %3364 = vadd.xlane.f32.xlu0 %v3336
    %v3365 = vpop.xlane.xlu0 %3364
    %3366 = vadd.xlane.f32.xlu0 %v3337
    %v3367 = vpop.xlane.xlu0 %3366
    %3368 = vadd.xlane.f32.xlu0 %v3338
    %v3369 = vpop.xlane.xlu0 %3368
    %3370 = vadd.xlane.f32.xlu0 %v3339
    %v3371 = vpop.xlane.xlu0 %3370
    %s3372 = sld [smem:[#allocation2]]
    %v3373 = vstv %s3372
    %v3374 = vadd.f32 %v3341, %v3373
    %v3375 = vadd.f32 %v3343, %v3373
    %v3376 = vadd.f32 %v3345, %v3373
    %v3377 = vadd.f32 %v3347, %v3373
    %v3378 = vadd.f32 %v3349, %v3373
    %v3379 = vadd.f32 %v3351, %v3373
    %v3380 = vadd.f32 %v3353, %v3373
    %v3381 = vadd.f32 %v3355, %v3373
    %v3382 = vadd.f32 %v3357, %v3373
    %v3383 = vadd.f32 %v3359, %v3373
    %v3384 = vadd.f32 %v3361, %v3373
    %v3385 = vadd.f32 %v3363, %v3373
    %v3386 = vadd.f32 %v3365, %v3373
    %v3387 = vadd.f32 %v3367, %v3373
    %v3388 = vadd.f32 %v3369, %v3373
    %v3389 = vadd.f32 %v3371, %v3373
    %v3390 = vxor.u32 %v3374, 2147483648
    %v3391 = vxor.u32 %v3375, 2147483648
    %v3392 = vxor.u32 %v3376, 2147483648
    %v3393 = vxor.u32 %v3377, 2147483648
    %v3394 = vxor.u32 %v3378, 2147483648
    %v3395 = vxor.u32 %v3379, 2147483648
    %v3396 = vxor.u32 %v3380, 2147483648
    %v3397 = vxor.u32 %v3381, 2147483648
    %v3398 = vxor.u32 %v3382, 2147483648
    %v3399 = vxor.u32 %v3383, 2147483648
    %v3400 = vxor.u32 %v3384, 2147483648
    %v3401 = vxor.u32 %v3385, 2147483648
    %v3402 = vxor.u32 %v3386, 2147483648
    %v3403 = vxor.u32 %v3387, 2147483648
    %v3404 = vxor.u32 %v3388, 2147483648
    %v3405 = vxor.u32 %v3389, 2147483648
    %v3406 = vmul.f32 %v3390, 1.442695
    %v3407 = vpow.pop %v3406
    %v3408 = vmul.f32 %v3391, 1.442695
    %v3409 = vpow.pop %v3408
    %v3410 = vmul.f32 %v3392, 1.442695
    %v3411 = vpow.pop %v3410
    %v3412 = vmul.f32 %v3393, 1.442695
    %v3413 = vpow.pop %v3412
    %v3414 = vmul.f32 %v3394, 1.442695
    %v3415 = vpow.pop %v3414
    %v3416 = vmul.f32 %v3395, 1.442695
    %v3417 = vpow.pop %v3416
    %v3418 = vmul.f32 %v3396, 1.442695
    %v3419 = vpow.pop %v3418
    %v3420 = vmul.f32 %v3397, 1.442695
    %v3421 = vpow.pop %v3420
    %v3422 = vmul.f32 %v3398, 1.442695
    %v3423 = vpow.pop %v3422
    %v3424 = vmul.f32 %v3399, 1.442695
    %v3425 = vpow.pop %v3424
    %v3426 = vmul.f32 %v3400, 1.442695
    %v3427 = vpow.pop %v3426
    %v3428 = vmul.f32 %v3401, 1.442695
    %v3429 = vpow.pop %v3428
    %v3430 = vmul.f32 %v3402, 1.442695
    %v3431 = vpow.pop %v3430
    %v3432 = vmul.f32 %v3403, 1.442695
    %v3433 = vpow.pop %v3432
    %v3434 = vmul.f32 %v3404, 1.442695
    %v3435 = vpow.pop %v3434
    %v3436 = vmul.f32 %v3405, 1.442695
    %v3437 = vpow.pop %v3436
    %v3438 = vadd.f32 %v3407, 1.0
    %v3439 = vadd.f32 %v3409, 1.0
    %v3440 = vadd.f32 %v3411, 1.0
    %v3441 = vadd.f32 %v3413, 1.0
    %v3442 = vadd.f32 %v3415, 1.0
    %v3443 = vadd.f32 %v3417, 1.0
    %v3444 = vadd.f32 %v3419, 1.0
    %v3445 = vadd.f32 %v3421, 1.0
    %v3446 = vadd.f32 %v3423, 1.0
    %v3447 = vadd.f32 %v3425, 1.0
    %v3448 = vadd.f32 %v3427, 1.0
    %v3449 = vadd.f32 %v3429, 1.0
    %v3450 = vadd.f32 %v3431, 1.0
    %v3451 = vadd.f32 %v3433, 1.0
    %v3452 = vadd.f32 %v3435, 1.0
    %v3453 = vadd.f32 %v3437, 1.0
    %v3454 = vrcp.pop %v3438
    %v3455 = vmul.f32 1.0, %v3454
    %v3456 = vrcp.pop %v3439
    %v3457 = vmul.f32 1.0, %v3456
    %v3458 = vrcp.pop %v3440
    %v3459 = vmul.f32 1.0, %v3458
    %v3460 = vrcp.pop %v3441
    %v3461 = vmul.f32 1.0, %v3460
    %v3462 = vrcp.pop %v3442
    %v3463 = vmul.f32 1.0, %v3462
    %v3464 = vrcp.pop %v3443
    %v3465 = vmul.f32 1.0, %v3464
    %v3466 = vrcp.pop %v3444
    %v3467 = vmul.f32 1.0, %v3466
    %v3468 = vrcp.pop %v3445
    %v3469 = vmul.f32 1.0, %v3468
    %v3470 = vrcp.pop %v3446
    %v3471 = vmul.f32 1.0, %v3470
    %v3472 = vrcp.pop %v3447
    %v3473 = vmul.f32 1.0, %v3472
    %v3474 = vrcp.pop %v3448
    %v3475 = vmul.f32 1.0, %v3474
    %v3476 = vrcp.pop %v3449
    %v3477 = vmul.f32 1.0, %v3476
    %v3478 = vrcp.pop %v3450
    %v3479 = vmul.f32 1.0, %v3478
    %v3480 = vrcp.pop %v3451
    %v3481 = vmul.f32 1.0, %v3480
    %v3482 = vrcp.pop %v3452
    %v3483 = vmul.f32 1.0, %v3482
    %v3484 = vrcp.pop %v3453
    %v3485 = vmul.f32 1.0, %v3484
    %v3502 = vlaneseq
    %v3503 = vand.u32 %v3502, 127
    %v3504 = vlaneseq
    %v3505 = vshrl.u32 %v3504, 7
    %v3506 = vsub.s32 %v3503, %v3505
    %v3507 = vrot.slane %v3455, %v3506
    %v3508 = vadd.s32 %v3503, 4294967288
    %v3509 = vlaneseq
    %v3510 = vshrl.u32 %v3509, 7
    %v3511 = vsub.s32 %v3508, %v3510
    %v3512 = vrot.slane %v3457, %v3511
    %vm3513 = vcmask 130112
    %v3514 = vsel %vm3513, %v3512, %v3507
    %v3515 = vadd.s32 %v3503, 4294967280
    %v3516 = vlaneseq
    %v3517 = vshrl.u32 %v3516, 7
    %v3518 = vsub.s32 %v3515, %v3517
    %v3519 = vrot.slane %v3459, %v3518
    %vm3520 = vcmask 195712
    %v3521 = vsel %vm3520, %v3519, %v3514
    %v3522 = vadd.s32 %v3503, 4294967272
    %v3523 = vlaneseq
    %v3524 = vshrl.u32 %v3523, 7
    %v3525 = vsub.s32 %v3522, %v3524
    %v3526 = vrot.slane %v3461, %v3525
    %vm3527 = vcmask 261312
    %v3528 = vsel %vm3527, %v3526, %v3521
    %v3529 = vadd.s32 %v3503, 4294967264
    %v3530 = vlaneseq
    %v3531 = vshrl.u32 %v3530, 7
    %v3532 = vsub.s32 %v3529, %v3531
    %v3533 = vrot.slane %v3463, %v3532
    %vm3534 = vcmask 326912
    %v3535 = vsel %vm3534, %v3533, %v3528
    %v3536 = vadd.s32 %v3503, 4294967256
    %v3537 = vlaneseq
    %v3538 = vshrl.u32 %v3537, 7
    %v3539 = vsub.s32 %v3536, %v3538
    %v3540 = vrot.slane %v3465, %v3539
    %vm3541 = vcmask 392512
    %v3542 = vsel %vm3541, %v3540, %v3535
    %v3543 = vadd.s32 %v3503, 4294967248
    %v3544 = vlaneseq
    %v3545 = vshrl.u32 %v3544, 7
    %v3546 = vsub.s32 %v3543, %v3545
    %v3547 = vrot.slane %v3467, %v3546
    %vm3548 = vcmask 458112
    %v3549 = vsel %vm3548, %v3547, %v3542
    %v3550 = vadd.s32 %v3503, 4294967240
    %v3551 = vlaneseq
    %v3552 = vshrl.u32 %v3551, 7
    %v3553 = vsub.s32 %v3550, %v3552
    %v3554 = vrot.slane %v3469, %v3553
    %vm3555 = vcmask 523712
    %v3556 = vsel %vm3555, %v3554, %v3549
    %v3557 = vadd.s32 %v3503, 4294967232
    %v3558 = vlaneseq
    %v3559 = vshrl.u32 %v3558, 7
    %v3560 = vsub.s32 %v3557, %v3559
    %v3561 = vrot.slane %v3471, %v3560
    %vm3562 = vcmask 589312
    %v3563 = vsel %vm3562, %v3561, %v3556
    %v3564 = vadd.s32 %v3503, 4294967224
    %v3565 = vlaneseq
    %v3566 = vshrl.u32 %v3565, 7
    %v3567 = vsub.s32 %v3564, %v3566
    %v3568 = vrot.slane %v3473, %v3567
    %vm3569 = vcmask 654912
    %v3570 = vsel %vm3569, %v3568, %v3563
    %v3571 = vadd.s32 %v3503, 4294967216
    %v3572 = vlaneseq
    %v3573 = vshrl.u32 %v3572, 7
    %v3574 = vsub.s32 %v3571, %v3573
    %v3575 = vrot.slane %v3475, %v3574
    %vm3576 = vcmask 720512
    %v3577 = vsel %vm3576, %v3575, %v3570
    %v3578 = vadd.s32 %v3503, 4294967208
    %v3579 = vlaneseq
    %v3580 = vshrl.u32 %v3579, 7
    %v3581 = vsub.s32 %v3578, %v3580
    %v3582 = vrot.slane %v3477, %v3581
    %vm3583 = vcmask 786112
    %v3584 = vsel %vm3583, %v3582, %v3577
    %v3585 = vadd.s32 %v3503, 4294967200
    %v3586 = vlaneseq
    %v3587 = vshrl.u32 %v3586, 7
    %v3588 = vsub.s32 %v3585, %v3587
    %v3589 = vrot.slane %v3479, %v3588
    %vm3590 = vcmask 851712
    %v3591 = vsel %vm3590, %v3589, %v3584
    %v3592 = vadd.s32 %v3503, 4294967192
    %v3593 = vlaneseq
    %v3594 = vshrl.u32 %v3593, 7
    %v3595 = vsub.s32 %v3592, %v3594
    %v3596 = vrot.slane %v3481, %v3595
    %vm3597 = vcmask 917312
    %v3598 = vsel %vm3597, %v3596, %v3591
    %v3599 = vadd.s32 %v3503, 4294967184
    %v3600 = vlaneseq
    %v3601 = vshrl.u32 %v3600, 7
    %v3602 = vsub.s32 %v3599, %v3601
    %v3603 = vrot.slane %v3483, %v3602
    %vm3604 = vcmask 982912
    %v3605 = vsel %vm3604, %v3603, %v3598
    %v3606 = vadd.s32 %v3503, 4294967176
    %v3607 = vlaneseq
    %v3608 = vshrl.u32 %v3607, 7
    %v3609 = vsub.s32 %v3606, %v3608
    %v3610 = vrot.slane %v3485, %v3609
    %vm3611 = vcmask 1048512
    %v3612 = vsel %vm3611, %v3610, %v3605
    %3614 = vst [vmem:[#allocation6] sm:$0x1] %v3612
    // Predicated region
    $region34: #{tpu_custom_call.1} parent=1 // pred_check
      _
    $region35: #{tpu_custom_call.1} parent=1 // pred_check_branch
      %3616 = sbr.rel (0) target = $region37
    $region36: #{tpu_custom_call.1} parent=1 // pred_region
      %s3618 = ssub.s32 16, 16
      %3619 = vsyncadd [#allocation5], %s3618
      %s3621 = sshll.u32 [#allocation6], 4
      %s3622 = int_to_ptr.vmem [resolvable:$true] %s3621
      %3624 = dma.vmem_to_hbm [thread:$0]  %s3622, 16, %s7, [#allocation5]
    $region37: #{tpu_custom_call.1} parent=1 // pred_fallthru
      _
    // Predicated region
    $region38: #{tpu_custom_call.1} parent=1 // pred_check
      _
    $region39: #{tpu_custom_call.1} parent=1 // pred_check_branch
      %3626 = sbr.rel (0) target = $region41
    $region40: #{tpu_custom_call.1} parent=1 // pred_region
      %3627 = dma.done [#allocation5], 16
    $region41: #{tpu_custom_call.1} parent=1 // pred_fallthru
      _
    %3628 = vsyncpa [#allocation4], 1
    %3629 = vsyncpa [#allocation5], 1

</llo_original>
